<compile_context>
chip_gen: v5e
topology: v5e:2x2
jax: 0.10.0
libtpu: 0.0.40
codegen_flags: <defaults>
</compile_context>

<pallas_src>
import functools

import jax
import jax.numpy as jnp
import numpy as np
from jax import lax
from jax.experimental import pallas as pl
from jax.experimental.pallas import tpu as pltpu

EPS = 1e-5
# MXU operand dtype.  bf16 = native/fast path on v5e/v6e/v7x and half the
# matmul-operand + inter-kernel activation bytes.  Flip to jnp.float32 to get
# bit-accurate (2e-4) agreement with the f32 reference.
MATMUL_DTYPE = jnp.bfloat16
ACT_DTYPE = MATMUL_DTYPE          # storage dtype of the inter-kernel y1 / y2
VMEM_LIMIT = 48 * 1024 * 1024     # headroom under v7x's 64 MiB physical VMEM


# ----------------------------- kernels --------------------------------------

def _x_stats_kernel(x_ref, st_ref, *, S, tS):
    # x_ref: (1, C, tS) NCHW tile.  st_ref: (1, C, 2) per-image (sum, sum_sq),
    # accumulated in VMEM across the spatial grid axis (written back once).
    x = x_ref[0]                                                    # (C, tS)
    if S % tS:  # mask the padded tail columns of the last spatial tile
        col = lax.broadcasted_iota(jnp.int32, x.shape, 1)
        x = jnp.where(pl.program_id(1) * tS + col < S, x, 0.0)
    s_sum = jnp.sum(x, axis=1, keepdims=True)                       # (C, 1)
    s_sq = jnp.sum(x * x, axis=1, keepdims=True)                    # (C, 1)

    @pl.when(pl.program_id(1) == 0)
    def _():
        st_ref[0, :, 0:1] = s_sum
        st_ref[0, :, 1:2] = s_sq

    @pl.when(pl.program_id(1) > 0)
    def _():
        st_ref[0, :, 0:1] = st_ref[0, :, 0:1] + s_sum
        st_ref[0, :, 1:2] = st_ref[0, :, 1:2] + s_sq


def _bn_relu_conv1x1_in_kernel(x_ref, scale_ref, shift_ref, w_ref, b_ref,
                               y_ref, st_ref, *, S, tS):
    # BN1 + ReLU + 1x1 conv, NCHW input tile -> (rows, channels) output tile,
    # plus per-channel (sum, sum_sq) of the output (stats for BN2), accumulated
    # across the spatial grid axis.
    # x_ref: (1, C, tS) f32; scale/shift: (C, 1) f32; w: (C, P) bf16; b: (1, P)
    # y_ref: (1, tS, P) bf16; st_ref: (1, 2, P) f32
    a = jnp.maximum(x_ref[0] * scale_ref[...] + shift_ref[...], 0.0)  # (C, tS)
    # Transposed-LHS matmul (contract the channel/sublane axis): the MXU feed
    # path handles the transpose, no materialized a.T / XLU copy.
    y = lax.dot_general(a.astype(MATMUL_DTYPE), w_ref[...],
                        dimension_numbers=(((0,), (0,)), ((), ())),
                        preferred_element_type=jnp.float32) + b_ref[...]  # (tS, P)
    y_ref[0] = y.astype(y_ref.dtype)
    if S % tS:  # keep padded tail rows out of the batch statistics
        row = lax.broadcasted_iota(jnp.int32, (tS, 1), 0)
        y = jnp.where(pl.program_id(1) * tS + row < S, y, 0.0)
    s_sum = jnp.sum(y, axis=0, keepdims=True)                          # (1, P)
    s_sq = jnp.sum(y * y, axis=0, keepdims=True)                       # (1, P)

    @pl.when(pl.program_id(1) == 0)
    def _():
        st_ref[0, 0:1, :] = s_sum
        st_ref[0, 1:2, :] = s_sq

    @pl.when(pl.program_id(1) > 0)
    def _():
        st_ref[0, 0:1, :] = st_ref[0, 0:1, :] + s_sum
        st_ref[0, 1:2, :] = st_ref[0, 1:2, :] + s_sq


def _bn_relu_conv3x3_kernel(x_ref, scale_ref, shift_ref, w_ref, b_ref,
                            y_ref, st_ref, *, W):
    # BN2 + ReLU + 3x3 conv (stride 1, pad 1) on one image whose spatial dims
    # are flattened row-major: x_ref (1, S, Cin) bf16 with S = H*W.
    # Three accumulating matmuls (K = 3*Cin each) over row windows of the
    # zero-row-padded slab -- no materialized (S, 9*Cin) im2col buffer.
    S, Cin = x_ref.shape[1], x_ref.shape[2]
    a = jnp.maximum(x_ref[0].astype(jnp.float32) * scale_ref[...]
                    + shift_ref[...], 0.0)                             # (S, Cin) f32
    # kw = -1 / +1 taps: sublane roll of the flattened slab; positions that
    # wrapped across an image-row boundary are exactly the w==0 / w==W-1
    # columns, which a 'same' conv zero-pads -> mask with in-kernel iota.
    wpos = lax.broadcasted_iota(jnp.int32, (S, 1), 0) % W
    left = jnp.where(wpos != 0, pltpu.roll(a, 1, axis=0),
                     0.0).astype(MATMUL_DTYPE)                         # a[h, w-1]
    right = jnp.where(wpos != W - 1, pltpu.roll(a, S - 1, axis=0),
                      0.0).astype(MATMUL_DTYPE)                        # a[h, w+1]
    a3 = jnp.concatenate([left, a.astype(MATMUL_DTYPE), right], axis=1)  # (S, 3*Cin)
    # kh = -1 / 0 / +1 taps: zero-pad one image row on each side, then three
    # row-offset windows (offsets 0, W, 2W -> sublane-aligned when W % 8 == 0)
    # feed three accumulating MXU matmuls (f32 accumulator).
    zrow = jnp.zeros((W, 3 * Cin), MATMUL_DTYPE)
    a3p = jnp.concatenate([zrow, a3, zrow], axis=0)                    # (S+2W, 3*Cin)
    w = w_ref[...]                                                     # (9*Cin, Cout)
    K = 3 * Cin
    y = jnp.dot(a3p[0:S], w[0:K], preferred_element_type=jnp.float32)
    y += jnp.dot(a3p[W:W + S], w[K:2 * K], preferred_element_type=jnp.float32)
    y += jnp.dot(a3p[2 * W:2 * W + S], w[2 * K:3 * K],
                 preferred_element_type=jnp.float32)
    y += b_ref[...]                                                    # (S, Cout)
    y_ref[0] = y.astype(y_ref.dtype)
    st_ref[0, 0:1, :] = jnp.sum(y, axis=0, keepdims=True)              # (1, Cout)
    st_ref[0, 1:2, :] = jnp.sum(y * y, axis=0, keepdims=True)


def _bn_relu_conv1x1_res_out_kernel(y2_ref, res_ref, scale_ref, shift_ref,
                                    w_ref, b_ref, o_ref):
    # BN3 + ReLU + 1x1 conv + residual add; produces NCHW output directly.
    # y2_ref: (1, tS, P) bf16; res_ref: (1, C, tS) f32 NCHW; w: (C, P) bf16;
    # b: (C, 1) f32; o_ref: (1, C, tS) f32
    a = jnp.maximum(y2_ref[0].astype(jnp.float32) * scale_ref[...]
                    + shift_ref[...], 0.0)                             # (tS, P)
    # (C, P) x (tS, P)^T -> (C, tS): result lands directly in the NCHW store
    # orientation, no post-MXU transpose and no activation transpose.
    y = lax.dot_general(w_ref[...], a.astype(MATMUL_DTYPE),
                        dimension_numbers=(((1,), (1,)), ((), ())),
                        preferred_element_type=jnp.float32)            # (C, tS)
    o_ref[0] = y + b_ref[...] + res_ref[0]


# ----------------------------- wrappers --------------------------------------

def _bn_scale_shift(stat_sum, stat_sq, count, gamma, beta):
    # Train-mode BN (biased variance) folded into per-channel scale/shift.
    mean = stat_sum / count
    var = stat_sq / count - mean * mean
    scale = gamma * lax.rsqrt(var + EPS)
    shift = beta - mean * scale
    return scale, shift


def channel_stats(x_ncs, tile_s=1024):
    # Single fused pass over x (NCHW, spatial flattened): per-channel sum/sumsq.
    # Spatial axis is innermost + "arbitrary" so the stats block stays resident
    # and accumulates in VMEM; only N tiny (C, 2) blocks reach HBM.
    N, C, S = x_ncs.shape
    tS = min(tile_s, S)
    nS = pl.cdiv(S, tS)
    kern = functools.partial(_x_stats_kernel, S=S, tS=tS)
    st = pl.pallas_call(
        kern,
        out_shape=jax.ShapeDtypeStruct((N, C, 2), jnp.float32),
        grid_spec=pltpu.PrefetchScalarGridSpec(
            num_scalar_prefetch=0, grid=(N, nS),
            in_specs=[pl.BlockSpec((1, C, tS), lambda n, s: (n, 0, s))],
            out_specs=pl.BlockSpec((1, C, 2), lambda n, s: (n, 0, 0))),
        compiler_params=pltpu.CompilerParams(
            dimension_semantics=("parallel", "arbitrary"),
            vmem_limit_bytes=VMEM_LIMIT),
    )(x_ncs)
    st = jnp.sum(st, axis=0)                                           # (C, 2)
    return st[:, 0], st[:, 1]


def bn_relu_conv1x1_in(x_ncs, scale, shift, w, b, tile_s=1024):
    # tile_s=1024 targets v5e/v6e (128 MiB VMEM); use ~512 on v7x.
    N, C, S = x_ncs.shape
    P = w.shape[1]
    tS = min(tile_s, S)
    nS = pl.cdiv(S, tS)
    kern = functools.partial(_bn_relu_conv1x1_in_kernel, S=S, tS=tS)
    y, st = pl.pallas_call(
        kern,
        out_shape=(jax.ShapeDtypeStruct((N, S, P), ACT_DTYPE),
                   jax.ShapeDtypeStruct((N, 2, P), jnp.float32)),
        grid_spec=pltpu.PrefetchScalarGridSpec(
            num_scalar_prefetch=0, grid=(N, nS),
            in_specs=[pl.BlockSpec((1, C, tS), lambda n, s: (n, 0, s)),
                      pl.BlockSpec((C, 1), lambda n, s: (0, 0)),
                      pl.BlockSpec((C, 1), lambda n, s: (0, 0)),
                      pl.BlockSpec((C, P), lambda n, s: (0, 0)),
                      pl.BlockSpec((1, P), lambda n, s: (0, 0))],
            out_specs=(pl.BlockSpec((1, tS, P), lambda n, s: (n, s, 0)),
                       pl.BlockSpec((1, 2, P), lambda n, s: (n, 0, 0)))),
        compiler_params=pltpu.CompilerParams(
            dimension_semantics=("parallel", "arbitrary"),
            vmem_limit_bytes=VMEM_LIMIT),
    )(x_ncs, scale.reshape(C, 1), shift.reshape(C, 1), w, b.reshape(1, P))
    st = jnp.sum(st, axis=0)                                           # (2, P)
    return y, st[0], st[1]


def bn_relu_conv3x3(x_nsc, scale, shift, w_col, b, W):
    # TODO(synk): row-tile with a +/-1-row (+/-W) halo for large feature maps
    # (grid (N, H//tH)); whole-image blocks are fine at the demo shape but blow
    # v7x's 64 MiB VMEM at 56x56 / Cin>=128 and give only N pipeline steps.
    N, S, Cin = x_nsc.shape
    Cout = w_col.shape[1]
    kern = functools.partial(_bn_relu_conv3x3_kernel, W=W)
    y, st = pl.pallas_call(
        kern,
        out_shape=(jax.ShapeDtypeStruct((N, S, Cout), ACT_DTYPE),
                   jax.ShapeDtypeStruct((N, 2, Cout), jnp.float32)),
        grid_spec=pltpu.PrefetchScalarGridSpec(
            num_scalar_prefetch=0, grid=(N,),
            in_specs=[pl.BlockSpec((1, S, Cin), lambda n: (n, 0, 0)),
                      pl.BlockSpec((1, Cin), lambda n: (0, 0)),
                      pl.BlockSpec((1, Cin), lambda n: (0, 0)),
                      pl.BlockSpec((9 * Cin, Cout), lambda n: (0, 0)),
                      pl.BlockSpec((1, Cout), lambda n: (0, 0))],
            out_specs=(pl.BlockSpec((1, S, Cout), lambda n: (n, 0, 0)),
                       pl.BlockSpec((1, 2, Cout), lambda n: (n, 0, 0)))),
        compiler_params=pltpu.CompilerParams(
            dimension_semantics=("parallel",),
            vmem_limit_bytes=VMEM_LIMIT),
    )(x_nsc, scale.reshape(1, Cin), shift.reshape(1, Cin), w_col,
      b.reshape(1, Cout))
    st = jnp.sum(st, axis=0)                                           # (2, Cout)
    return y, st[0], st[1]


def bn_relu_conv1x1_res_out(y2_nsp, x_ncs, scale, shift, w, b, tile_s=1024):
    N, S, P = y2_nsp.shape
    C = w.shape[0]                           # w is (C, P)
    tS = min(tile_s, S)
    nS = pl.cdiv(S, tS)
    out = pl.pallas_call(
        _bn_relu_conv1x1_res_out_kernel,
        out_shape=jax.ShapeDtypeStruct((N, C, S), jnp.float32),
        grid_spec=pltpu.PrefetchScalarGridSpec(
            num_scalar_prefetch=0, grid=(N, nS),
            in_specs=[pl.BlockSpec((1, tS, P), lambda n, s: (n, s, 0)),
                      pl.BlockSpec((1, C, tS), lambda n, s: (n, 0, s)),
                      pl.BlockSpec((1, P), lambda n, s: (0, 0)),
                      pl.BlockSpec((1, P), lambda n, s: (0, 0)),
                      pl.BlockSpec((C, P), lambda n, s: (0, 0)),
                      pl.BlockSpec((C, 1), lambda n, s: (0, 0))],
            out_specs=pl.BlockSpec((1, C, tS), lambda n, s: (n, 0, s))),
        compiler_params=pltpu.CompilerParams(
            dimension_semantics=("parallel", "parallel"),
            vmem_limit_bytes=VMEM_LIMIT),
    )(y2_nsp, x_ncs, scale.reshape(1, P), shift.reshape(1, P), w,
      b.reshape(C, 1))
    return out


def resnet_bottleneck_forward(x_nchw, p, stride=1):
    assert stride == 1  # TODO(synk): stride>1 / downsample path not implemented
    N, C, H, W = x_nchw.shape
    S = H * W
    x = x_nchw.reshape(N, C, S)          # free reshape; stays NCHW in HBM
    cnt = float(N * S)

    # BN1 statistics of x: single fused Pallas reduction pass.
    s1, q1 = channel_stats(x)
    sc1, sh1 = _bn_scale_shift(s1, q1, cnt, p['g1'], p['b1'])

    # conv1 (1x1): consumes NCHW directly, emits y1 (N,S,P) bf16 + BN2 stats.
    y1, s2, q2 = bn_relu_conv1x1_in(x, sc1, sh1, p['w1'], p['cb1'])
    sc2, sh2 = _bn_scale_shift(s2, q2, cnt, p['g2'], p['b2'])

    # conv2 (3x3): three accumulating row-window matmuls, emits y2 + BN3 stats.
    y2, s3, q3 = bn_relu_conv3x3(y1, sc2, sh2, p['w2col'], p['cb2'], W)
    sc3, sh3 = _bn_scale_shift(s3, q3, cnt, p['g3'], p['b3'])

    # conv3 (1x1) + residual: produces NCHW output directly.
    out = bn_relu_conv1x1_res_out(y2, x, sc3, sh3, p['w3'], p['cb3'])
    return out.reshape(N, C, H, W)


# -------------------------- params & reference -------------------------------

def init_params(key, inplanes):
    expansion = 2
    planes = inplanes // expansion
    ks = jax.random.split(key, 12)

    def u(k, shape, s=0.3):
        return jax.random.uniform(k, shape, jnp.float32, -s, s)

    w1 = u(ks[0], (planes, inplanes, 1, 1))          # OIHW
    w2 = u(ks[1], (planes, planes, 3, 3))            # OIHW
    w3 = u(ks[2], (planes * expansion, planes, 1, 1))
    # (9*Cin, Cout), K ordering = kh-major, then kw, then Cin (matches kernel).
    w2col = jnp.transpose(w2, (2, 3, 1, 0)).reshape(9 * planes, planes)
    return dict(
        g1=1.0 + u(ks[3], (inplanes,)), b1=u(ks[4], (inplanes,)),
        g2=1.0 + u(ks[5], (planes,)),   b2=u(ks[6], (planes,)),
        g3=1.0 + u(ks[7], (planes,)),   b3=u(ks[8], (planes,)),
        cb1=u(ks[9], (planes,)),
        cb2=u(ks[10], (planes,)),
        cb3=u(ks[11], (planes * expansion,)),
        # kernel-layout weights, pre-cast ONCE to the MXU operand dtype
        w1=jnp.transpose(w1[:, :, 0, 0], (1, 0)).astype(MATMUL_DTYPE),  # (Cin, P)
        w2col=w2col.astype(MATMUL_DTYPE),                               # (9*Cin, Cout)
        w3=w3[:, :, 0, 0].astype(MATMUL_DTYPE),                         # (C, P)
        # torch-layout f32 weights for the pure-JAX reference
        w1_t=w1, w2_t=w2, w3_t=w3,
    )


def reference_forward(x, p):
    def bn(v, g, b):
        mean = jnp.mean(v, axis=(0, 2, 3), keepdims=True)
        var = jnp.var(v, axis=(0, 2, 3), keepdims=True)
        return ((v - mean) / jnp.sqrt(var + EPS) * g[None, :, None, None]
                + b[None, :, None, None])

    def conv(v, w, b, pad=0):
        y = jax.lax.conv_general_dilated(
            v, w, (1, 1), [(pad, pad), (pad, pad)],
            dimension_numbers=('NCHW', 'OIHW', 'NCHW'))
        return y + b[None, :, None, None]

    out = conv(jnp.maximum(bn(x, p['g1'], p['b1']), 0.0), p['w1_t'], p['cb1'])
    out = conv(jnp.maximum(bn(out, p['g2'], p['b2']), 0.0), p['w2_t'], p['cb2'],
               pad=1)
    out = conv(jnp.maximum(bn(out, p['g3'], p['b3']), 0.0), p['w3_t'], p['cb3'])
    return out + x


# ------------------------------- main ----------------------------------------

if __name__ == "__main__":
    key = jax.random.PRNGKey(0)
    kx, kp = jax.random.split(key)
    N, C, H, W = 2, 8, 16, 16
    x = jax.random.normal(kx, (N, C, H, W), jnp.float32)
    params = init_params(kp, C)

    fwd = jax.jit(resnet_bottleneck_forward)
    out = jax.block_until_ready(fwd(x, params))

    ref = reference_forward(x, params)
    assert out.shape == (N, C, H, W)
    # bf16 MXU operands + bf16 inter-kernel activations give ~1e-2 relative
    # error through three stacked conv/BN layers; f32 path holds 2e-4.
    if MATMUL_DTYPE == jnp.float32:
        rtol, atol = 2e-4, 2e-4
    else:
        rtol, atol = 5e-2, 1e-1
    np.testing.assert_allclose(np.asarray(out), np.asarray(ref),
                               rtol=rtol, atol=atol)
    print("KERNEL_OK")
</pallas_src>

<mosaic_0001>
module attributes {stable_mosaic.version = 11 : i64} {
  func.func @_x_stats_kernel(%arg0: i32, %arg1: i32, %arg2: memref<1x8x256xf32, #tpu.memory_space<vmem>>, %arg3: memref<1x8x2xf32, #tpu.memory_space<vmem>>) attributes {dimension_semantics = [#tpu.dimension_semantics<parallel>, #tpu.dimension_semantics<arbitrary>], iteration_bounds = array<i64: 2, 1>, scalar_prefetch = 0 : i64, scratch_operands = 0 : i64, tpu.core_type = #tpu.core_type<tc>, window_params = [{transform_indices = @transform_0, window_bounds = array<i64: 1, 8, 256>}, {transform_indices = @transform_1, window_bounds = array<i64: 1, 8, 2>}]} {
    %c0 = arith.constant 0 : index
    %c0_0 = arith.constant 0 : index
    %c0_1 = arith.constant 0 : index
    %0 = vector.load %arg2[%c0, %c0_0, %c0_1] : memref<1x8x256xf32, #tpu.memory_space<vmem>>, vector<1x8x256xf32>
    %1 = vector.shape_cast %0 : vector<1x8x256xf32> to vector<8x256xf32>
    %cst = arith.constant dense<0.000000e+00> : vector<8xf32>
    %2 = vector.multi_reduction <add>, %1, %cst [1] : vector<8x256xf32> to vector<8xf32>
    %3 = vector.shape_cast %2 : vector<8xf32> to vector<8x1xf32>
    %4 = arith.mulf %1, %1 : vector<8x256xf32>
    %cst_2 = arith.constant dense<0.000000e+00> : vector<8xf32>
    %5 = vector.multi_reduction <add>, %4, %cst_2 [1] : vector<8x256xf32> to vector<8xf32>
    %6 = vector.shape_cast %5 : vector<8xf32> to vector<8x1xf32>
    %c0_i32 = arith.constant 0 : i32
    %7 = arith.cmpi eq, %arg1, %c0_i32 : i32
    %8 = arith.extui %7 : i1 to i32
    %c0_i32_3 = arith.constant 0 : i32
    %9 = arith.cmpi ne, %8, %c0_i32_3 : i32
    scf.if %9 {
      %c0_6 = arith.constant 0 : index
      %c0_7 = arith.constant 0 : index
      %c0_8 = arith.constant 0 : index
      %13 = vector.load %arg3[%c0_6, %c0_7, %c0_8] : memref<1x8x2xf32, #tpu.memory_space<vmem>>, vector<1x8x1xf32>
      %14 = vector.shape_cast %13 : vector<1x8x1xf32> to vector<8x1xf32>
      %15 = vector.shape_cast %3 : vector<8x1xf32> to vector<1x8x1xf32>
      tpu.vector_store %arg3[%c0_6, %c0_7, %c0_8], %15 {strides = array<i32>} : memref<1x8x2xf32, #tpu.memory_space<vmem>>, vector<1x8x1xf32>,
      %c0_9 = arith.constant 0 : index
      %c0_10 = arith.constant 0 : index
      %c1 = arith.constant 1 : index
      %16 = vector.load %arg3[%c0_9, %c0_10, %c1] : memref<1x8x2xf32, #tpu.memory_space<vmem>>, vector<1x8x1xf32>
      %17 = vector.shape_cast %16 : vector<1x8x1xf32> to vector<8x1xf32>
      %18 = vector.shape_cast %6 : vector<8x1xf32> to vector<1x8x1xf32>
      tpu.vector_store %arg3[%c0_9, %c0_10, %c1], %18 {strides = array<i32>} : memref<1x8x2xf32, #tpu.memory_space<vmem>>, vector<1x8x1xf32>,
    } else {
    }
    %c0_i32_4 = arith.constant 0 : i32
    %10 = arith.cmpi sgt, %arg1, %c0_i32_4 : i32
    %11 = arith.extui %10 : i1 to i32
    %c0_i32_5 = arith.constant 0 : i32
    %12 = arith.cmpi ne, %11, %c0_i32_5 : i32
    scf.if %12 {
      %c0_6 = arith.constant 0 : index
      %c0_7 = arith.constant 0 : index
      %c0_8 = arith.constant 0 : index
      %13 = vector.load %arg3[%c0_6, %c0_7, %c0_8] : memref<1x8x2xf32, #tpu.memory_space<vmem>>, vector<1x8x1xf32>
      %14 = vector.shape_cast %13 : vector<1x8x1xf32> to vector<8x1xf32>
      %15 = arith.addf %14, %3 : vector<8x1xf32>
      %c0_9 = arith.constant 0 : index
      %c0_10 = arith.constant 0 : index
      %c0_11 = arith.constant 0 : index
      %16 = vector.load %arg3[%c0_9, %c0_10, %c0_11] : memref<1x8x2xf32, #tpu.memory_space<vmem>>, vector<1x8x1xf32>
      %17 = vector.shape_cast %16 : vector<1x8x1xf32> to vector<8x1xf32>
      %18 = vector.shape_cast %15 : vector<8x1xf32> to vector<1x8x1xf32>
      tpu.vector_store %arg3[%c0_9, %c0_10, %c0_11], %18 {strides = array<i32>} : memref<1x8x2xf32, #tpu.memory_space<vmem>>, vector<1x8x1xf32>,
      %c0_12 = arith.constant 0 : index
      %c0_13 = arith.constant 0 : index
      %c1 = arith.constant 1 : index
      %19 = vector.load %arg3[%c0_12, %c0_13, %c1] : memref<1x8x2xf32, #tpu.memory_space<vmem>>, vector<1x8x1xf32>
      %20 = vector.shape_cast %19 : vector<1x8x1xf32> to vector<8x1xf32>
      %21 = arith.addf %20, %6 : vector<8x1xf32>
      %c0_14 = arith.constant 0 : index
      %c0_15 = arith.constant 0 : index
      %c1_16 = arith.constant 1 : index
      %22 = vector.load %arg3[%c0_14, %c0_15, %c1_16] : memref<1x8x2xf32, #tpu.memory_space<vmem>>, vector<1x8x1xf32>
      %23 = vector.shape_cast %22 : vector<1x8x1xf32> to vector<8x1xf32>
      %24 = vector.shape_cast %21 : vector<8x1xf32> to vector<1x8x1xf32>
      tpu.vector_store %arg3[%c0_14, %c0_15, %c1_16], %24 {strides = array<i32>} : memref<1x8x2xf32, #tpu.memory_space<vmem>>, vector<1x8x1xf32>,
    } else {
    }
    return
  }
  func.func @transform_0(%arg0: i32, %arg1: i32) -> (i32, i32, i32) {
    %c0_i32 = arith.constant 0 : i32
    %c0_i32_0 = arith.constant 0 : i32
    return %arg0, %c0_i32, %arg1 : i32, i32, i32
  }
  func.func @transform_1(%arg0: i32, %arg1: i32) -> (i32, i32, i32) {
    %c0_i32 = arith.constant 0 : i32
    %c0_i32_0 = arith.constant 0 : i32
    %c0_i32_1 = arith.constant 0 : i32
    return %arg0, %c0_i32, %c0_i32_0 : i32, i32, i32
  }
}

module attributes {stable_mosaic.version = 11 : i64} {
  func.func @_bn_relu_conv1x1_in_kernel(%arg0: i32, %arg1: i32, %arg2: memref<1x8x256xf32, #tpu.memory_space<vmem>>, %arg3: memref<8x1xf32, #tpu.memory_space<vmem>>, %arg4: memref<8x1xf32, #tpu.memory_space<vmem>>, %arg5: memref<8x4xbf16, #tpu.memory_space<vmem>>, %arg6: memref<1x4xf32, #tpu.memory_space<vmem>>, %arg7: memref<1x256x4xbf16, #tpu.memory_space<vmem>>, %arg8: memref<1x2x4xf32, #tpu.memory_space<vmem>>) attributes {dimension_semantics = [#tpu.dimension_semantics<parallel>, #tpu.dimension_semantics<arbitrary>], iteration_bounds = array<i64: 2, 1>, scalar_prefetch = 0 : i64, scratch_operands = 0 : i64, tpu.core_type = #tpu.core_type<tc>, window_params = [{transform_indices = @transform_0, window_bounds = array<i64: 1, 8, 256>}, {pipeline_mode = #tpu.pipeline_mode<synchronous>, transform_indices = @transform_1, window_bounds = array<i64: 8, 1>}, {pipeline_mode = #tpu.pipeline_mode<synchronous>, transform_indices = @transform_2, window_bounds = array<i64: 8, 1>}, {pipeline_mode = #tpu.pipeline_mode<synchronous>, transform_indices = @transform_3, window_bounds = array<i64: 8, 4>}, {pipeline_mode = #tpu.pipeline_mode<synchronous>, transform_indices = @transform_4, window_bounds = array<i64: 1, 4>}, {transform_indices = @transform_5, window_bounds = array<i64: 1, 256, 4>}, {transform_indices = @transform_6, window_bounds = array<i64: 1, 2, 4>}]} {
    %c0 = arith.constant 0 : index
    %c0_0 = arith.constant 0 : index
    %c0_1 = arith.constant 0 : index
    %0 = vector.load %arg2[%c0, %c0_0, %c0_1] : memref<1x8x256xf32, #tpu.memory_space<vmem>>, vector<1x8x256xf32>
    %1 = vector.shape_cast %0 : vector<1x8x256xf32> to vector<8x256xf32>
    %c0_2 = arith.constant 0 : index
    %c0_3 = arith.constant 0 : index
    %2 = vector.load %arg3[%c0_2, %c0_3] : memref<8x1xf32, #tpu.memory_space<vmem>>, vector<8x1xf32>
    %3 = vector.broadcast %2 : vector<8x1xf32> to vector<8x256xf32>
    %4 = arith.mulf %1, %3 : vector<8x256xf32>
    %c0_4 = arith.constant 0 : index
    %c0_5 = arith.constant 0 : index
    %5 = vector.load %arg4[%c0_4, %c0_5] : memref<8x1xf32, #tpu.memory_space<vmem>>, vector<8x1xf32>
    %6 = vector.broadcast %5 : vector<8x1xf32> to vector<8x256xf32>
    %7 = arith.addf %4, %6 : vector<8x256xf32>
    %cst = arith.constant 0.000000e+00 : f32
    %8 = vector.broadcast %cst : f32 to vector<8x256xf32>
    %9 = arith.maximumf %7, %8 : vector<8x256xf32>
    %10 = arith.truncf %9 : vector<8x256xf32> to vector<8x256xbf16>
    %c0_6 = arith.constant 0 : index
    %c0_7 = arith.constant 0 : index
    %11 = vector.load %arg5[%c0_6, %c0_7] : memref<8x4xbf16, #tpu.memory_space<vmem>>, vector<8x4xbf16>
    %cst_8 = arith.constant dense<0.000000e+00> : vector<256x4xf32>
    %12 = tpu.matmul %10, %11, %cst_8 {dimension_numbers = #tpu.dot_dimension_numbers<[0], [0], [1], [1], [0, 1, 1, 1], [], []>} : vector<8x256xbf16>, vector<8x4xbf16>, vector<256x4xf32> -> vector<256x4xf32>
    %c0_9 = arith.constant 0 : index
    %c0_10 = arith.constant 0 : index
    %13 = vector.load %arg6[%c0_9, %c0_10] : memref<1x4xf32, #tpu.memory_space<vmem>>, vector<1x4xf32>
    %14 = vector.broadcast %13 : vector<1x4xf32> to vector<256x4xf32>
    %15 = arith.addf %12, %14 : vector<256x4xf32>
    %16 = arith.truncf %15 : vector<256x4xf32> to vector<256x4xbf16>
    %c0_11 = arith.constant 0 : index
    %c0_12 = arith.constant 0 : index
    %c0_13 = arith.constant 0 : index
    %17 = vector.load %arg7[%c0_11, %c0_12, %c0_13] : memref<1x256x4xbf16, #tpu.memory_space<vmem>>, vector<1x256x4xbf16>
    %18 = vector.shape_cast %17 : vector<1x256x4xbf16> to vector<256x4xbf16>
    %19 = vector.shape_cast %16 : vector<256x4xbf16> to vector<1x256x4xbf16>
    tpu.vector_store %arg7[%c0_11, %c0_12, %c0_13], %19 {strides = array<i32>} : memref<1x256x4xbf16, #tpu.memory_space<vmem>>, vector<1x256x4xbf16>,
    %cst_14 = arith.constant dense<0.000000e+00> : vector<4xf32>
    %20 = vector.multi_reduction <add>, %15, %cst_14 [0] : vector<256x4xf32> to vector<4xf32>
    %21 = vector.shape_cast %20 : vector<4xf32> to vector<1x4xf32>
    %22 = arith.mulf %15, %15 : vector<256x4xf32>
    %cst_15 = arith.constant dense<0.000000e+00> : vector<4xf32>
    %23 = vector.multi_reduction <add>, %22, %cst_15 [0] : vector<256x4xf32> to vector<4xf32>
    %24 = vector.shape_cast %23 : vector<4xf32> to vector<1x4xf32>
    %c0_i32 = arith.constant 0 : i32
    %25 = arith.cmpi eq, %arg1, %c0_i32 : i32
    %26 = arith.extui %25 : i1 to i32
    %c0_i32_16 = arith.constant 0 : i32
    %27 = arith.cmpi ne, %26, %c0_i32_16 : i32
    scf.if %27 {
      %c0_19 = arith.constant 0 : index
      %c0_20 = arith.constant 0 : index
      %c0_21 = arith.constant 0 : index
      %31 = vector.load %arg8[%c0_19, %c0_20, %c0_21] : memref<1x2x4xf32, #tpu.memory_space<vmem>>, vector<1x1x4xf32>
      %32 = vector.shape_cast %31 : vector<1x1x4xf32> to vector<1x4xf32>
      %33 = vector.shape_cast %21 : vector<1x4xf32> to vector<1x1x4xf32>
      tpu.vector_store %arg8[%c0_19, %c0_20, %c0_21], %33 {strides = array<i32>} : memref<1x2x4xf32, #tpu.memory_space<vmem>>, vector<1x1x4xf32>,
      %c0_22 = arith.constant 0 : index
      %c1 = arith.constant 1 : index
      %c0_23 = arith.constant 0 : index
      %34 = vector.load %arg8[%c0_22, %c1, %c0_23] : memref<1x2x4xf32, #tpu.memory_space<vmem>>, vector<1x1x4xf32>
      %35 = vector.shape_cast %34 : vector<1x1x4xf32> to vector<1x4xf32>
      %36 = vector.shape_cast %24 : vector<1x4xf32> to vector<1x1x4xf32>
      tpu.vector_store %arg8[%c0_22, %c1, %c0_23], %36 {strides = array<i32>} : memref<1x2x4xf32, #tpu.memory_space<vmem>>, vector<1x1x4xf32>,
    } else {
    }
    %c0_i32_17 = arith.constant 0 : i32
    %28 = arith.cmpi sgt, %arg1, %c0_i32_17 : i32
    %29 = arith.extui %28 : i1 to i32
    %c0_i32_18 = arith.constant 0 : i32
    %30 = arith.cmpi ne, %29, %c0_i32_18 : i32
    scf.if %30 {
      %c0_19 = arith.constant 0 : index
      %c0_20 = arith.constant 0 : index
      %c0_21 = arith.constant 0 : index
      %31 = vector.load %arg8[%c0_19, %c0_20, %c0_21] : memref<1x2x4xf32, #tpu.memory_space<vmem>>, vector<1x1x4xf32>
      %32 = vector.shape_cast %31 : vector<1x1x4xf32> to vector<1x4xf32>
      %33 = arith.addf %32, %21 : vector<1x4xf32>
      %c0_22 = arith.constant 0 : index
      %c0_23 = arith.constant 0 : index
      %c0_24 = arith.constant 0 : index
      %34 = vector.load %arg8[%c0_22, %c0_23, %c0_24] : memref<1x2x4xf32, #tpu.memory_space<vmem>>, vector<1x1x4xf32>
      %35 = vector.shape_cast %34 : vector<1x1x4xf32> to vector<1x4xf32>
      %36 = vector.shape_cast %33 : vector<1x4xf32> to vector<1x1x4xf32>
      tpu.vector_store %arg8[%c0_22, %c0_23, %c0_24], %36 {strides = array<i32>} : memref<1x2x4xf32, #tpu.memory_space<vmem>>, vector<1x1x4xf32>,
      %c0_25 = arith.constant 0 : index
      %c1 = arith.constant 1 : index
      %c0_26 = arith.constant 0 : index
      %37 = vector.load %arg8[%c0_25, %c1, %c0_26] : memref<1x2x4xf32, #tpu.memory_space<vmem>>, vector<1x1x4xf32>
      %38 = vector.shape_cast %37 : vector<1x1x4xf32> to vector<1x4xf32>
      %39 = arith.addf %38, %24 : vector<1x4xf32>
      %c0_27 = arith.constant 0 : index
      %c1_28 = arith.constant 1 : index
      %c0_29 = arith.constant 0 : index
      %40 = vector.load %arg8[%c0_27, %c1_28, %c0_29] : memref<1x2x4xf32, #tpu.memory_space<vmem>>, vector<1x1x4xf32>
      %41 = vector.shape_cast %40 : vector<1x1x4xf32> to vector<1x4xf32>
      %42 = vector.shape_cast %39 : vector<1x4xf32> to vector<1x1x4xf32>
      tpu.vector_store %arg8[%c0_27, %c1_28, %c0_29], %42 {strides = array<i32>} : memref<1x2x4xf32, #tpu.memory_space<vmem>>, vector<1x1x4xf32>,
    } else {
    }
    return
  }
  func.func @transform_0(%arg0: i32, %arg1: i32) -> (i32, i32, i32) {
    %c0_i32 = arith.constant 0 : i32
    %c0_i32_0 = arith.constant 0 : i32
    return %arg0, %c0_i32, %arg1 : i32, i32, i32
  }
  func.func @transform_1(%arg0: i32, %arg1: i32) -> (i32, i32) {
    %c0_i32 = arith.constant 0 : i32
    %c0_i32_0 = arith.constant 0 : i32
    %c0_i32_1 = arith.constant 0 : i32
    return %c0_i32, %c0_i32_0 : i32, i32
  }
  func.func @transform_2(%arg0: i32, %arg1: i32) -> (i32, i32) {
    %c0_i32 = arith.constant 0 : i32
    %c0_i32_0 = arith.constant 0 : i32
    %c0_i32_1 = arith.constant 0 : i32
    return %c0_i32, %c0_i32_0 : i32, i32
  }
  func.func @transform_3(%arg0: i32, %arg1: i32) -> (i32, i32) {
    %c0_i32 = arith.constant 0 : i32
    %c0_i32_0 = arith.constant 0 : i32
    %c0_i32_1 = arith.constant 0 : i32
    return %c0_i32, %c0_i32_0 : i32, i32
  }
  func.func @transform_4(%arg0: i32, %arg1: i32) -> (i32, i32) {
    %c0_i32 = arith.constant 0 : i32
    %c0_i32_0 = arith.constant 0 : i32
    %c0_i32_1 = arith.constant 0 : i32
    return %c0_i32, %c0_i32_0 : i32, i32
  }
  func.func @transform_5(%arg0: i32, %arg1: i32) -> (i32, i32, i32) {
    %c0_i32 = arith.constant 0 : i32
    %c0_i32_0 = arith.constant 0 : i32
    return %arg0, %arg1, %c0_i32 : i32, i32, i32
  }
  func.func @transform_6(%arg0: i32, %arg1: i32) -> (i32, i32, i32) {
    %c0_i32 = arith.constant 0 : i32
    %c0_i32_0 = arith.constant 0 : i32
    %c0_i32_1 = arith.constant 0 : i32
    return %arg0, %c0_i32, %c0_i32_0 : i32, i32, i32
  }
}

module attributes {stable_mosaic.version = 11 : i64} {
  func.func @_bn_relu_conv3x3_kernel(%arg0: i32, %arg1: memref<1x256x4xbf16, #tpu.memory_space<vmem>>, %arg2: memref<1x4xf32, #tpu.memory_space<vmem>>, %arg3: memref<1x4xf32, #tpu.memory_space<vmem>>, %arg4: memref<36x4xbf16, #tpu.memory_space<vmem>>, %arg5: memref<1x4xf32, #tpu.memory_space<vmem>>, %arg6: memref<1x256x4xbf16, #tpu.memory_space<vmem>>, %arg7: memref<1x2x4xf32, #tpu.memory_space<vmem>>) attributes {dimension_semantics = [#tpu.dimension_semantics<parallel>], iteration_bounds = array<i64: 2>, scalar_prefetch = 0 : i64, scratch_operands = 0 : i64, tpu.core_type = #tpu.core_type<tc>, window_params = [{transform_indices = @transform_0, window_bounds = array<i64: 1, 256, 4>}, {pipeline_mode = #tpu.pipeline_mode<synchronous>, transform_indices = @transform_1, window_bounds = array<i64: 1, 4>}, {pipeline_mode = #tpu.pipeline_mode<synchronous>, transform_indices = @transform_2, window_bounds = array<i64: 1, 4>}, {pipeline_mode = #tpu.pipeline_mode<synchronous>, transform_indices = @transform_3, window_bounds = array<i64: 36, 4>}, {pipeline_mode = #tpu.pipeline_mode<synchronous>, transform_indices = @transform_4, window_bounds = array<i64: 1, 4>}, {transform_indices = @transform_5, window_bounds = array<i64: 1, 256, 4>}, {transform_indices = @transform_6, window_bounds = array<i64: 1, 2, 4>}]} {
    %c0 = arith.constant 0 : index
    %c0_0 = arith.constant 0 : index
    %c0_1 = arith.constant 0 : index
    %0 = vector.load %arg1[%c0, %c0_0, %c0_1] : memref<1x256x4xbf16, #tpu.memory_space<vmem>>, vector<1x256x4xbf16>
    %1 = vector.shape_cast %0 : vector<1x256x4xbf16> to vector<256x4xbf16>
    %2 = arith.extf %1 : vector<256x4xbf16> to vector<256x4xf32>
    %c0_2 = arith.constant 0 : index
    %c0_3 = arith.constant 0 : index
    %3 = vector.load %arg2[%c0_2, %c0_3] : memref<1x4xf32, #tpu.memory_space<vmem>>, vector<1x4xf32>
    %4 = vector.broadcast %3 : vector<1x4xf32> to vector<256x4xf32>
    %5 = arith.mulf %2, %4 : vector<256x4xf32>
    %c0_4 = arith.constant 0 : index
    %c0_5 = arith.constant 0 : index
    %6 = vector.load %arg3[%c0_4, %c0_5] : memref<1x4xf32, #tpu.memory_space<vmem>>, vector<1x4xf32>
    %7 = vector.broadcast %6 : vector<1x4xf32> to vector<256x4xf32>
    %8 = arith.addf %5, %7 : vector<256x4xf32>
    %cst = arith.constant 0.000000e+00 : f32
    %9 = vector.broadcast %cst : f32 to vector<256x4xf32>
    %10 = arith.maximumf %8, %9 : vector<256x4xf32>
    %11 = tpu.iota {dimensions = array<i32: 0>} : vector<256x1xi32>
    %c16_i32 = arith.constant 16 : i32
    %c0_i32 = arith.constant 0 : i32
    %12 = arith.cmpi eq, %c16_i32, %c0_i32 : i32
    %c1_i32 = arith.constant 1 : i32
    %13 = arith.select %12, %c1_i32, %c16_i32 : i32
    %14 = vector.broadcast %13 : i32 to vector<256x1xi32>
    %15 = arith.remsi %11, %14 : vector<256x1xi32>
    %c0_i32_6 = arith.constant 0 : i32
    %16 = vector.broadcast %c0_i32_6 : i32 to vector<256x1xi32>
    %17 = arith.cmpi ne, %15, %16 : vector<256x1xi32>
    %c0_i32_7 = arith.constant 0 : i32
    %18 = vector.broadcast %c0_i32_7 : i32 to vector<256x1xi32>
    %19 = arith.cmpi slt, %15, %18 : vector<256x1xi32>
    %c0_i32_8 = arith.constant 0 : i32
    %20 = arith.cmpi slt, %13, %c0_i32_8 : i32
    %21 = vector.broadcast %20 : i1 to vector<256x1xi1>
    %22 = vector.broadcast %21 : vector<256x1xi1> to vector<256x1xi1>
    %23 = arith.xori %19, %22 : vector<256x1xi1>
    %24 = arith.andi %23, %17 : vector<256x1xi1>
    %25 = vector.broadcast %13 : i32 to vector<256x1xi32>
    %26 = arith.addi %15, %25 : vector<256x1xi32>
    %27 = arith.select %24, %26, %15 : vector<256x1xi1>, vector<256x1xi32>
    %c0_i32_9 = arith.constant 0 : i32
    %28 = vector.broadcast %c0_i32_9 : i32 to vector<256x1xi32>
    %29 = arith.cmpi ne, %27, %28 : vector<256x1xi32>
    %c1_i32_10 = arith.constant 1 : i32
    %30 = tpu.dynamic_rotate %10 by %c1_i32_10 dim 0 : vector<256x4xf32>, i32 -> vector<256x4xf32>
    %cst_11 = arith.constant 0.000000e+00 : f32
    %31 = vector.shape_cast %29 : vector<256x1xi1> to vector<256x1xi1>
    %32 = vector.broadcast %31 : vector<256x1xi1> to vector<256x4xi1>
    %33 = vector.broadcast %cst_11 : f32 to vector<256x4xf32>
    %34 = arith.select %32, %30, %33 : vector<256x4xi1>, vector<256x4xf32>
    %35 = arith.truncf %34 : vector<256x4xf32> to vector<256x4xbf16>
    %c15_i32 = arith.constant 15 : i32
    %36 = vector.broadcast %c15_i32 : i32 to vector<256x1xi32>
    %37 = arith.cmpi ne, %27, %36 : vector<256x1xi32>
    %c255_i32 = arith.constant 255 : i32
    %38 = tpu.dynamic_rotate %10 by %c255_i32 dim 0 : vector<256x4xf32>, i32 -> vector<256x4xf32>
    %cst_12 = arith.constant 0.000000e+00 : f32
    %39 = vector.shape_cast %37 : vector<256x1xi1> to vector<256x1xi1>
    %40 = vector.broadcast %39 : vector<256x1xi1> to vector<256x4xi1>
    %41 = vector.broadcast %cst_12 : f32 to vector<256x4xf32>
    %42 = arith.select %40, %38, %41 : vector<256x4xi1>, vector<256x4xf32>
    %43 = arith.truncf %42 : vector<256x4xf32> to vector<256x4xbf16>
    %44 = arith.truncf %10 : vector<256x4xf32> to vector<256x4xbf16>
    %45 = tpu.concatenate %35, %44, %43 in 1 : vector<256x4xbf16>, vector<256x4xbf16>, vector<256x4xbf16> -> vector<256x12xbf16>
    %cst_13 = arith.constant 0.000000e+00 : bf16
    %46 = vector.broadcast %cst_13 : bf16 to vector<16x12xbf16>
    %47 = tpu.concatenate %46, %45, %46 in 0 : vector<16x12xbf16>, vector<256x12xbf16>, vector<16x12xbf16> -> vector<288x12xbf16>
    %c0_14 = arith.constant 0 : index
    %c0_15 = arith.constant 0 : index
    %48 = vector.load %arg4[%c0_14, %c0_15] : memref<36x4xbf16, #tpu.memory_space<vmem>>, vector<36x4xbf16>
    %49 = vector.extract_strided_slice %47 {offsets = [0, 0], sizes = [256, 12], strides = [1, 1]} : vector<288x12xbf16> to vector<256x12xbf16>
    %50 = vector.extract_strided_slice %48 {offsets = [0, 0], sizes = [12, 4], strides = [1, 1]} : vector<36x4xbf16> to vector<12x4xbf16>
    %cst_16 = arith.constant dense<0.000000e+00> : vector<256x4xf32>
    %51 = tpu.matmul %49, %50, %cst_16 {dimension_numbers = #tpu.dot_dimension_numbers<[1], [0], [0], [1], [0, 0, 1, 1], [], []>} : vector<256x12xbf16>, vector<12x4xbf16>, vector<256x4xf32> -> vector<256x4xf32>
    %52 = vector.extract_strided_slice %47 {offsets = [16, 0], sizes = [256, 12], strides = [1, 1]} : vector<288x12xbf16> to vector<256x12xbf16>
    %53 = vector.extract_strided_slice %48 {offsets = [12, 0], sizes = [12, 4], strides = [1, 1]} : vector<36x4xbf16> to vector<12x4xbf16>
    %cst_17 = arith.constant dense<0.000000e+00> : vector<256x4xf32>
    %54 = tpu.matmul %52, %53, %cst_17 {dimension_numbers = #tpu.dot_dimension_numbers<[1], [0], [0], [1], [0, 0, 1, 1], [], []>} : vector<256x12xbf16>, vector<12x4xbf16>, vector<256x4xf32> -> vector<256x4xf32>
    %55 = arith.addf %51, %54 : vector<256x4xf32>
    %56 = vector.extract_strided_slice %47 {offsets = [32, 0], sizes = [256, 12], strides = [1, 1]} : vector<288x12xbf16> to vector<256x12xbf16>
    %57 = vector.extract_strided_slice %48 {offsets = [24, 0], sizes = [12, 4], strides = [1, 1]} : vector<36x4xbf16> to vector<12x4xbf16>
    %cst_18 = arith.constant dense<0.000000e+00> : vector<256x4xf32>
    %58 = tpu.matmul %56, %57, %cst_18 {dimension_numbers = #tpu.dot_dimension_numbers<[1], [0], [0], [1], [0, 0, 1, 1], [], []>} : vector<256x12xbf16>, vector<12x4xbf16>, vector<256x4xf32> -> vector<256x4xf32>
    %59 = arith.addf %55, %58 : vector<256x4xf32>
    %c0_19 = arith.constant 0 : index
    %c0_20 = arith.constant 0 : index
    %60 = vector.load %arg5[%c0_19, %c0_20] : memref<1x4xf32, #tpu.memory_space<vmem>>, vector<1x4xf32>
    %61 = vector.broadcast %60 : vector<1x4xf32> to vector<256x4xf32>
    %62 = arith.addf %59, %61 : vector<256x4xf32>
    %63 = arith.truncf %62 : vector<256x4xf32> to vector<256x4xbf16>
    %c0_21 = arith.constant 0 : index
    %c0_22 = arith.constant 0 : index
    %c0_23 = arith.constant 0 : index
    %64 = vector.load %arg6[%c0_21, %c0_22, %c0_23] : memref<1x256x4xbf16, #tpu.memory_space<vmem>>, vector<1x256x4xbf16>
    %65 = vector.shape_cast %64 : vector<1x256x4xbf16> to vector<256x4xbf16>
    %66 = vector.shape_cast %63 : vector<256x4xbf16> to vector<1x256x4xbf16>
    tpu.vector_store %arg6[%c0_21, %c0_22, %c0_23], %66 {strides = array<i32>} : memref<1x256x4xbf16, #tpu.memory_space<vmem>>, vector<1x256x4xbf16>,
    %cst_24 = arith.constant dense<0.000000e+00> : vector<4xf32>
    %67 = vector.multi_reduction <add>, %62, %cst_24 [0] : vector<256x4xf32> to vector<4xf32>
    %68 = vector.shape_cast %67 : vector<4xf32> to vector<1x4xf32>
    %c0_25 = arith.constant 0 : index
    %c0_26 = arith.constant 0 : index
    %c0_27 = arith.constant 0 : index
    %69 = vector.load %arg7[%c0_25, %c0_26, %c0_27] : memref<1x2x4xf32, #tpu.memory_space<vmem>>, vector<1x1x4xf32>
    %70 = vector.shape_cast %69 : vector<1x1x4xf32> to vector<1x4xf32>
    %71 = vector.shape_cast %68 : vector<1x4xf32> to vector<1x1x4xf32>
    tpu.vector_store %arg7[%c0_25, %c0_26, %c0_27], %71 {strides = array<i32>} : memref<1x2x4xf32, #tpu.memory_space<vmem>>, vector<1x1x4xf32>,
    %72 = arith.mulf %62, %62 : vector<256x4xf32>
    %cst_28 = arith.constant dense<0.000000e+00> : vector<4xf32>
    %73 = vector.multi_reduction <add>, %72, %cst_28 [0] : vector<256x4xf32> to vector<4xf32>
    %74 = vector.shape_cast %73 : vector<4xf32> to vector<1x4xf32>
    %c0_29 = arith.constant 0 : index
    %c1 = arith.constant 1 : index
    %c0_30 = arith.constant 0 : index
    %75 = vector.load %arg7[%c0_29, %c1, %c0_30] : memref<1x2x4xf32, #tpu.memory_space<vmem>>, vector<1x1x4xf32>
    %76 = vector.shape_cast %75 : vector<1x1x4xf32> to vector<1x4xf32>
    %77 = vector.shape_cast %74 : vector<1x4xf32> to vector<1x1x4xf32>
    tpu.vector_store %arg7[%c0_29, %c1, %c0_30], %77 {strides = array<i32>} : memref<1x2x4xf32, #tpu.memory_space<vmem>>, vector<1x1x4xf32>,
    return
  }
  func.func @transform_0(%arg0: i32) -> (i32, i32, i32) {
    %c0_i32 = arith.constant 0 : i32
    %c0_i32_0 = arith.constant 0 : i32
    %c0_i32_1 = arith.constant 0 : i32
    return %arg0, %c0_i32, %c0_i32_0 : i32, i32, i32
  }
  func.func @transform_1(%arg0: i32) -> (i32, i32) {
    %c0_i32 = arith.constant 0 : i32
    %c0_i32_0 = arith.constant 0 : i32
    %c0_i32_1 = arith.constant 0 : i32
    return %c0_i32, %c0_i32_0 : i32, i32
  }
  func.func @transform_2(%arg0: i32) -> (i32, i32) {
    %c0_i32 = arith.constant 0 : i32
    %c0_i32_0 = arith.constant 0 : i32
    %c0_i32_1 = arith.constant 0 : i32
    return %c0_i32, %c0_i32_0 : i32, i32
  }
  func.func @transform_3(%arg0: i32) -> (i32, i32) {
    %c0_i32 = arith.constant 0 : i32
    %c0_i32_0 = arith.constant 0 : i32
    %c0_i32_1 = arith.constant 0 : i32
    return %c0_i32, %c0_i32_0 : i32, i32
  }
  func.func @transform_4(%arg0: i32) -> (i32, i32) {
    %c0_i32 = arith.constant 0 : i32
    %c0_i32_0 = arith.constant 0 : i32
    %c0_i32_1 = arith.constant 0 : i32
    return %c0_i32, %c0_i32_0 : i32, i32
  }
  func.func @transform_5(%arg0: i32) -> (i32, i32, i32) {
    %c0_i32 = arith.constant 0 : i32
    %c0_i32_0 = arith.constant 0 : i32
    %c0_i32_1 = arith.constant 0 : i32
    return %arg0, %c0_i32, %c0_i32_0 : i32, i32, i32
  }
  func.func @transform_6(%arg0: i32) -> (i32, i32, i32) {
    %c0_i32 = arith.constant 0 : i32
    %c0_i32_0 = arith.constant 0 : i32
    %c0_i32_1 = arith.constant 0 : i32
    return %arg0, %c0_i32, %c0_i32_0 : i32, i32, i32
  }
}

module attributes {stable_mosaic.version = 11 : i64} {
  func.func @_bn_relu_conv1x1_res_out_kernel(%arg0: i32, %arg1: i32, %arg2: memref<1x256x4xbf16, #tpu.memory_space<vmem>>, %arg3: memref<1x8x256xf32, #tpu.memory_space<vmem>>, %arg4: memref<1x4xf32, #tpu.memory_space<vmem>>, %arg5: memref<1x4xf32, #tpu.memory_space<vmem>>, %arg6: memref<8x4xbf16, #tpu.memory_space<vmem>>, %arg7: memref<8x1xf32, #tpu.memory_space<vmem>>, %arg8: memref<1x8x256xf32, #tpu.memory_space<vmem>>) attributes {dimension_semantics = [#tpu.dimension_semantics<parallel>, #tpu.dimension_semantics<parallel>], iteration_bounds = array<i64: 2, 1>, scalar_prefetch = 0 : i64, scratch_operands = 0 : i64, tpu.core_type = #tpu.core_type<tc>, window_params = [{transform_indices = @transform_0, window_bounds = array<i64: 1, 256, 4>}, {transform_indices = @transform_1, window_bounds = array<i64: 1, 8, 256>}, {pipeline_mode = #tpu.pipeline_mode<synchronous>, transform_indices = @transform_2, window_bounds = array<i64: 1, 4>}, {pipeline_mode = #tpu.pipeline_mode<synchronous>, transform_indices = @transform_3, window_bounds = array<i64: 1, 4>}, {pipeline_mode = #tpu.pipeline_mode<synchronous>, transform_indices = @transform_4, window_bounds = array<i64: 8, 4>}, {pipeline_mode = #tpu.pipeline_mode<synchronous>, transform_indices = @transform_5, window_bounds = array<i64: 8, 1>}, {transform_indices = @transform_6, window_bounds = array<i64: 1, 8, 256>}]} {
    %c0 = arith.constant 0 : index
    %c0_0 = arith.constant 0 : index
    %c0_1 = arith.constant 0 : index
    %0 = vector.load %arg2[%c0, %c0_0, %c0_1] : memref<1x256x4xbf16, #tpu.memory_space<vmem>>, vector<1x256x4xbf16>
    %1 = vector.shape_cast %0 : vector<1x256x4xbf16> to vector<256x4xbf16>
    %2 = arith.extf %1 : vector<256x4xbf16> to vector<256x4xf32>
    %c0_2 = arith.constant 0 : index
    %c0_3 = arith.constant 0 : index
    %3 = vector.load %arg4[%c0_2, %c0_3] : memref<1x4xf32, #tpu.memory_space<vmem>>, vector<1x4xf32>
    %4 = vector.broadcast %3 : vector<1x4xf32> to vector<256x4xf32>
    %5 = arith.mulf %2, %4 : vector<256x4xf32>
    %c0_4 = arith.constant 0 : index
    %c0_5 = arith.constant 0 : index
    %6 = vector.load %arg5[%c0_4, %c0_5] : memref<1x4xf32, #tpu.memory_space<vmem>>, vector<1x4xf32>
    %7 = vector.broadcast %6 : vector<1x4xf32> to vector<256x4xf32>
    %8 = arith.addf %5, %7 : vector<256x4xf32>
    %cst = arith.constant 0.000000e+00 : f32
    %9 = vector.broadcast %cst : f32 to vector<256x4xf32>
    %10 = arith.maximumf %8, %9 : vector<256x4xf32>
    %c0_6 = arith.constant 0 : index
    %c0_7 = arith.constant 0 : index
    %11 = vector.load %arg6[%c0_6, %c0_7] : memref<8x4xbf16, #tpu.memory_space<vmem>>, vector<8x4xbf16>
    %12 = arith.truncf %10 : vector<256x4xf32> to vector<256x4xbf16>
    %cst_8 = arith.constant dense<0.000000e+00> : vector<8x256xf32>
    %13 = tpu.matmul %11, %12, %cst_8 {dimension_numbers = #tpu.dot_dimension_numbers<[1], [1], [0], [0], [0, 0, 1, 0], [], []>} : vector<8x4xbf16>, vector<256x4xbf16>, vector<8x256xf32> -> vector<8x256xf32>
    %c0_9 = arith.constant 0 : index
    %c0_10 = arith.constant 0 : index
    %14 = vector.load %arg7[%c0_9, %c0_10] : memref<8x1xf32, #tpu.memory_space<vmem>>, vector<8x1xf32>
    %15 = vector.broadcast %14 : vector<8x1xf32> to vector<8x256xf32>
    %16 = arith.addf %13, %15 : vector<8x256xf32>
    %c0_11 = arith.constant 0 : index
    %c0_12 = arith.constant 0 : index
    %c0_13 = arith.constant 0 : index
    %17 = vector.load %arg3[%c0_11, %c0_12, %c0_13] : memref<1x8x256xf32, #tpu.memory_space<vmem>>, vector<1x8x256xf32>
    %18 = vector.shape_cast %17 : vector<1x8x256xf32> to vector<8x256xf32>
    %19 = arith.addf %16, %18 : vector<8x256xf32>
    %c0_14 = arith.constant 0 : index
    %c0_15 = arith.constant 0 : index
    %c0_16 = arith.constant 0 : index
    %20 = vector.load %arg8[%c0_14, %c0_15, %c0_16] : memref<1x8x256xf32, #tpu.memory_space<vmem>>, vector<1x8x256xf32>
    %21 = vector.shape_cast %20 : vector<1x8x256xf32> to vector<8x256xf32>
    %22 = vector.shape_cast %19 : vector<8x256xf32> to vector<1x8x256xf32>
    tpu.vector_store %arg8[%c0_14, %c0_15, %c0_16], %22 {strides = array<i32>} : memref<1x8x256xf32, #tpu.memory_space<vmem>>, vector<1x8x256xf32>,
    return
  }
  func.func @transform_0(%arg0: i32, %arg1: i32) -> (i32, i32, i32) {
    %c0_i32 = arith.constant 0 : i32
    %c0_i32_0 = arith.constant 0 : i32
    return %arg0, %arg1, %c0_i32 : i32, i32, i32
  }
  func.func @transform_1(%arg0: i32, %arg1: i32) -> (i32, i32, i32) {
    %c0_i32 = arith.constant 0 : i32
    %c0_i32_0 = arith.constant 0 : i32
    return %arg0, %c0_i32, %arg1 : i32, i32, i32
  }
  func.func @transform_2(%arg0: i32, %arg1: i32) -> (i32, i32) {
    %c0_i32 = arith.constant 0 : i32
    %c0_i32_0 = arith.constant 0 : i32
    %c0_i32_1 = arith.constant 0 : i32
    return %c0_i32, %c0_i32_0 : i32, i32
  }
  func.func @transform_3(%arg0: i32, %arg1: i32) -> (i32, i32) {
    %c0_i32 = arith.constant 0 : i32
    %c0_i32_0 = arith.constant 0 : i32
    %c0_i32_1 = arith.constant 0 : i32
    return %c0_i32, %c0_i32_0 : i32, i32
  }
  func.func @transform_4(%arg0: i32, %arg1: i32) -> (i32, i32) {
    %c0_i32 = arith.constant 0 : i32
    %c0_i32_0 = arith.constant 0 : i32
    %c0_i32_1 = arith.constant 0 : i32
    return %c0_i32, %c0_i32_0 : i32, i32
  }
  func.func @transform_5(%arg0: i32, %arg1: i32) -> (i32, i32) {
    %c0_i32 = arith.constant 0 : i32
    %c0_i32_0 = arith.constant 0 : i32
    %c0_i32_1 = arith.constant 0 : i32
    return %c0_i32, %c0_i32_0 : i32, i32
  }
  func.func @transform_6(%arg0: i32, %arg1: i32) -> (i32, i32, i32) {
    %c0_i32 = arith.constant 0 : i32
    %c0_i32_0 = arith.constant 0 : i32
    return %arg0, %c0_i32, %arg1 : i32, i32, i32
  }
}

</mosaic_0001>

<llo_original>
// kernel: resnet_bottleneck_forward.4
$region0: #{resnet_bottleneck_forward.4}
  #allocation0 [shape = 'u32[]', space=smem, size = 0x4, offset = 0x4, fixed_abs, tag = 'smem constant byte address 0x4 - core index']
  #allocation1 [shape = 'u32[72,128]{1,0:T(1,128)}', space=vmem, size = 0x9000, scoped, tag = 'internal scratch']
  %s0 = inlined_call_operand.vmem [shape: f32[2,8,256], index: 0, kind: input, shape index: {}]
  %s1 = inlined_call_operand.vmem [shape: f32[2,8,2], index: 1, kind: output, shape index: {}]
  %s2 = sld [smem:[#allocation0]]
  $region45: #{resnet_bottleneck_forward.4} parent=0
    _
  %s4 = ssub.s32 1, %s2
  %s5 = scalar_select 0, %s4, %s2
  loop: start=0, step=1, limit=4
  $region2: #{resnet_bottleneck_forward.4} parent=0 // loop_pre_header
    _
  $region3: #{resnet_bottleneck_forward.4} parent=0 // loop_header
    %s7 = sphi 0, %s11
    %p8 = scmp.ge.s32.totalorder %s7, 4
    %s14 = sphi 0, %s26
    %s15 = sphi 0, %s22
    %s16 = sphi 0, %s14
    %s17 = sphi 0, %s15
    %s18 = sphi 0, %s16
    %s19 = sphi 0, %s17
    %s31 = sphi 0, %s33
    %s34 = sphi 0, %s31
    %s35 = sphi 0, %s34
    %s51 = sphi 0, %s35
    %s57 = sphi 0, %s59
    %s60 = sphi 0, %s57
    %s61 = sphi 0, %s60
    %s77 = sphi 0, %s61
  $region4: #{resnet_bottleneck_forward.4} parent=0 // loop_header_branch
    %10 = sbr.rel (%p8) target = $region8
  $region5: #{resnet_bottleneck_forward.4} parent=0 // loop_body
    %s12 = ssub.s32 %s7, 1
    %s13 = ssub.s32 %s7, 2
    %s20 = sadd.s32 1, %s15
    %p21 = scmp.ge.s32.totalorder %s20, 1
    %s22 = scalar_select %p21, 0, %s20
    %s23 = sadd.s32 1, %s14
    %s24 = scalar_select %p21, %s23, %s14
    %p25 = scmp.ge.s32.totalorder %s24, 2
    %s26 = scalar_select %p25, 0, %s24
    %s27 = ssub.s32 %s14, %s26
    %s28 = ssub.s32 %s15, %s22
    %s29 = sor.u32 %s27, %s28
    %p30 = scmp.eq.s32.totalorder %s29, 0
    %s32 = sadd.s32 %s31, 1
    %s33 = scalar_select %p30, %s31, %s32
    %p36 = pneg %p30
    %p37 = scmp.eq.s32.totalorder %s7, 1
    %p38 = por %p36, %p37
    %p39 = scmp.ne.s32.totalorder %s31, %s34
    %p40 = scmp.eq.s32.totalorder %s7, 0
    %p41 = por %p39, %p40
    %p42 = scmp.ne.s32.totalorder %s31, %s34
    %p43 = scmp.eq.s32.totalorder %s12, 1
    %p44 = por %p42, %p43
    %p45 = scmp.ne.s32.totalorder %s34, %s35
    %p46 = scmp.eq.s32.totalorder %s12, 0
    %p47 = por %p45, %p46
    %p48 = scmp.ne.s32.totalorder %s34, %s35
    %p49 = scmp.eq.s32.totalorder %s13, 1
    %p50 = por %p48, %p49
    %p52 = scmp.ne.s32.totalorder %s35, %s51
    %p53 = scmp.eq.s32.totalorder %s13, 0
    %p54 = por %p52, %p53
    %s55 = ssub.s32 %s14, %s26
    %p56 = scmp.eq.s32.totalorder %s55, 0
    %s58 = sadd.s32 %s57, 1
    %s59 = scalar_select %p56, %s57, %s58
    %p62 = pneg %p56
    %p63 = scmp.eq.s32.totalorder %s7, 1
    %p64 = por %p62, %p63
    %p65 = scmp.ne.s32.totalorder %s57, %s60
    %p66 = scmp.eq.s32.totalorder %s7, 0
    %p67 = por %p65, %p66
    %p68 = scmp.ne.s32.totalorder %s57, %s60
    %p69 = scmp.eq.s32.totalorder %s12, 1
    %p70 = por %p68, %p69
    %p71 = scmp.ne.s32.totalorder %s60, %s61
    %p72 = scmp.eq.s32.totalorder %s12, 0
    %p73 = por %p71, %p72
    %p74 = scmp.ne.s32.totalorder %s60, %s61
    %p75 = scmp.eq.s32.totalorder %s13, 1
    %p76 = por %p74, %p75
    %p78 = scmp.ne.s32.totalorder %s61, %s77
    %p79 = scmp.eq.s32.totalorder %s13, 0
    %p80 = por %p78, %p79
    %p81 = scmp.le.s32.totalorder 1, %s7
    %p82 = scmp.lt.s32.totalorder %s7, 3
    %p83 = pnand %p81, %p82
    %p84 = pneg %p83
    // Predicated region
    $region9: #{resnet_bottleneck_forward.4} parent=5 // pred_check
      _
    $region10: #{resnet_bottleneck_forward.4} parent=5 // pred_check_branch
      %86 = sbr.rel (%p83) target = $region12
    $region11: #{resnet_bottleneck_forward.4} parent=5 // pred_region
      %s87 = ssub.s32 %s7, 1
    $region12: #{resnet_bottleneck_forward.4} parent=5 // pred_fallthru
      _
    %p88 = scmp.lt.s32.totalorder %s7, 2
    // Predicated region
    $region13: #{resnet_bottleneck_forward.4} parent=5 // pred_check
      %p89 = pneg %p88
    $region14: #{resnet_bottleneck_forward.4} parent=5 // pred_check_branch
      %91 = sbr.rel (%p89) target = $region16
    $region15: #{resnet_bottleneck_forward.4} parent=5 // pred_region
      // Predicated region
      $region17: #{resnet_bottleneck_forward.4} parent=15 // pred_check
        %p92 = pneg %p41
      $region18: #{resnet_bottleneck_forward.4} parent=15 // pred_check_branch
        %94 = sbr.rel (%p92) target = $region20
      $region19: #{resnet_bottleneck_forward.4} parent=15 // pred_region
        %s95 = smul.u32 2, %s15
        %p96 = scmp.lt.s32.totalorder %s14, 1
        %s97 = scalar_select %p96, %s14, 1
        %p98 = scmp.lt.s32.totalorder %s95, 1
        %s99 = scalar_select %p98, %s95, 1
        %s100 = smul.addr %s97, 2
        %s101 = sadd.s32 %s99, %s100
        %s102 = smul.addr %s101, 8
        %s103 = scalar_lea.vmem %s0, %s102
        %s104 = smul.u32 2, %s15
      $region20: #{resnet_bottleneck_forward.4} parent=15 // pred_fallthru
        _
    $region16: #{resnet_bottleneck_forward.4} parent=5 // pred_fallthru
      _
    %p105 = scmp.le.s32.totalorder 1, %s7
    %p106 = scmp.lt.s32.totalorder %s7, 3
    %p107 = pnand %p105, %p106
    %p108 = pneg %p107
    // Predicated region
    $region21: #{resnet_bottleneck_forward.4} parent=5 // pred_check
      _
    $region22: #{resnet_bottleneck_forward.4} parent=5 // pred_check_branch
      %110 = sbr.rel (%p107) target = $region24
    $region23: #{resnet_bottleneck_forward.4} parent=5 // pred_region
      %s111 = ssub.s32 %s7, 1
      %s112 = smul.u32 2, %s17
      %p113 = scmp.lt.s32.totalorder %s16, 1
      %s114 = scalar_select %p113, %s16, 1
      %p115 = scmp.lt.s32.totalorder %s112, 1
      %s116 = scalar_select %p115, %s112, 1
      %s117 = smul.addr %s114, 2
      %s118 = sadd.s32 %s116, %s117
      %s119 = smul.addr %s118, 8
      %s120 = scalar_lea.vmem %s0, %s119
      %p121 = pneg %p47
      %p122 = pneg %p44
      %p123 = pneg %p73
      %p124 = pneg %p70
      %p125 = scmp.lt.s32.totalorder %s16, 1
      %s126 = scalar_select %p125, %s16, 1
      %s127 = smul.addr %s126, 8
      %s128 = scalar_lea.vmem %s1, %s127
      %s129 = smul.u32 2, %s17
      %p130 = scmp.lt.s32.totalorder %s16, 1
      %s131 = scalar_select %p130, %s16, 1
      %p132 = scmp.lt.s32.totalorder %s129, 1
      %s133 = scalar_select %p132, %s129, 1
      %s134 = smul.addr %s131, 2
      %s135 = sadd.s32 %s133, %s134
      %s136 = smul.addr %s135, 8
      %s137 = scalar_lea.vmem %s0, %s136
      %s138 = smul.u32 2, %s17
      %p139 = scmp.lt.s32.totalorder %s16, 1
      %s140 = scalar_select %p139, %s16, 1
      %s141 = smul.addr %s140, 8
      %s142 = scalar_lea.vmem %s1, %s141
      %v143 = vld [vmem:[%s137] sm:$0xff]
      %v144 = vld [vmem:[%s137 + $0x8] sm:$0xff]
      %v145 = vadd.f32 %v143, %v144
      %146 = vadd.xlane.f32.xlu0 %v145
      %v147 = vpop.xlane.xlu0 %146
      %v148 = vmul.f32 %v143, %v143
      %v149 = vmul.f32 %v144, %v144
      %v150 = vadd.f32 %v148, %v149
      %151 = vadd.xlane.f32.xlu0 %v150
      %v152 = vpop.xlane.xlu0 %151
      %p153 = scmp.eq.s32.totalorder %s17, 0
      // Predicated region
      $region25: #{resnet_bottleneck_forward.4} parent=23 // pred_check
        %p154 = pneg %p153
      $region26: #{resnet_bottleneck_forward.4} parent=23 // pred_check_branch
        %156 = sbr.rel (%p154) target = $region28
      $region27: #{resnet_bottleneck_forward.4} parent=23 // pred_region
        %vm157 = vcmask 7168
        %158 = vst.msk [vmem:[%s142] sm:$0xff] %vm157, %v147
        %vm159 = vcmask 15368
        %160 = vst.msk [vmem:[%s142] sm:$0xff] %vm159, %v152
      $region28: #{resnet_bottleneck_forward.4} parent=23 // pred_fallthru
        _
      %p161 = scmp.gt.s32.totalorder %s17, 0
      // Predicated region
      $region29: #{resnet_bottleneck_forward.4} parent=23 // pred_check
        %p162 = pneg %p161
      $region30: #{resnet_bottleneck_forward.4} parent=23 // pred_check_branch
        %164 = sbr.rel (%p162) target = $region32
      $region31: #{resnet_bottleneck_forward.4} parent=23 // pred_region
        %v165 = vld [vmem:[%s142] sm:$0xff]
        %v166 = vadd.f32 %v165, %v147
        %vm167 = vcmask 7168
        %168 = vst.msk [vmem:[%s142] sm:$0xff] %vm167, %v166
        %v169 = vld [vmem:[%s142] sm:$0xff]
        %v170 = vadd.f32 %v169, %v152
        %vm171 = vcmask 15368
        %172 = vst.msk [vmem:[%s142] sm:$0xff] %vm171, %v170
      $region32: #{resnet_bottleneck_forward.4} parent=23 // pred_fallthru
        _
      %p173 = scmp.lt.s32.totalorder %s16, 1
      %s174 = scalar_select %p173, %s16, 1
      %s175 = smul.addr %s174, 8
      %s176 = scalar_lea.vmem %s1, %s175
      // Predicated region
      $region33: #{resnet_bottleneck_forward.4} parent=23 // pred_check
        %p177 = pneg %p70
      $region34: #{resnet_bottleneck_forward.4} parent=23 // pred_check_branch
        %179 = sbr.rel (%p177) target = $region36
      $region35: #{resnet_bottleneck_forward.4} parent=23 // pred_region
        _
      $region36: #{resnet_bottleneck_forward.4} parent=23 // pred_fallthru
        _
    $region24: #{resnet_bottleneck_forward.4} parent=5 // pred_fallthru
      _
    %p180 = scmp.le.s32.totalorder 2, %s7
    // Predicated region
    $region37: #{resnet_bottleneck_forward.4} parent=5 // pred_check
      %p181 = pneg %p180
    $region38: #{resnet_bottleneck_forward.4} parent=5 // pred_check_branch
      %183 = sbr.rel (%p181) target = $region40
    $region39: #{resnet_bottleneck_forward.4} parent=5 // pred_region
      %s184 = ssub.s32 %s7, 2
      // Predicated region
      $region41: #{resnet_bottleneck_forward.4} parent=39 // pred_check
        %p185 = pneg %p76
      $region42: #{resnet_bottleneck_forward.4} parent=39 // pred_check_branch
        %187 = sbr.rel (%p185) target = $region44
      $region43: #{resnet_bottleneck_forward.4} parent=39 // pred_region
        %p188 = scmp.lt.s32.totalorder %s18, 1
        %s189 = scalar_select %p188, %s18, 1
        %s190 = smul.addr %s189, 8
        %s191 = scalar_lea.vmem %s1, %s190
      $region44: #{resnet_bottleneck_forward.4} parent=39 // pred_fallthru
        _
    $region40: #{resnet_bottleneck_forward.4} parent=5 // pred_fallthru
      _
  $region6: #{resnet_bottleneck_forward.4} parent=0 // loop_footer
    %s11 = sadd.s32 1, %s7
  $region7: #{resnet_bottleneck_forward.4} parent=0 // loop_footer_branch
    %6 = sbr.rel target = $region3
  $region8: #{resnet_bottleneck_forward.4} parent=0 // loop_exit
    _

// kernel: resnet_bottleneck_forward.5
$region0: #{resnet_bottleneck_forward.5}
  #allocation0 [shape = 'u32[]', space=smem, size = 0x4, offset = 0x4, fixed_abs, tag = 'smem constant byte address 0x4 - core index']
  #allocation1 [shape = 'u32[72,128]{1,0:T(1,128)}', space=vmem, size = 0x9000, scoped, tag = 'internal scratch']
  %s0 = inlined_call_operand.vmem [shape: f32[2,8,256], index: 0, kind: input, shape index: {}]
  %s1 = inlined_call_operand.vmem [shape: f32[8,1], index: 1, kind: input, shape index: {}]
  %s2 = inlined_call_operand.vmem [shape: f32[8,1], index: 2, kind: input, shape index: {}]
  %s3 = inlined_call_operand.vmem [shape: bf16[8,4], index: 3, kind: input, shape index: {}]
  %s4 = inlined_call_operand.vmem [shape: f32[1,4], index: 4, kind: input, shape index: {}]
  %s5 = inlined_call_operand.vmem [shape: bf16[2,256,4], index: 5, kind: output, shape index: {0}]
  %s6 = inlined_call_operand.vmem [shape: f32[2,2,4], index: 6, kind: output, shape index: {1}]
  %7 = xla_tuple %s5, %s6
  %s8 = sld [smem:[#allocation0]]
  $region69: #{resnet_bottleneck_forward.5} parent=0
    _
  %s10 = ssub.s32 1, %s8
  %s11 = scalar_select 0, %s10, %s8
  loop: start=0, step=1, limit=4
  $region2: #{resnet_bottleneck_forward.5} parent=0 // loop_pre_header
    _
  $region3: #{resnet_bottleneck_forward.5} parent=0 // loop_header
    %s13 = sphi 0, %s17
    %p14 = scmp.ge.s32.totalorder %s13, 4
    %s20 = sphi 0, %s32
    %s21 = sphi 0, %s28
    %s22 = sphi 0, %s20
    %s23 = sphi 0, %s21
    %s24 = sphi 0, %s22
    %s25 = sphi 0, %s23
    %s37 = sphi 0, %s39
    %s40 = sphi 0, %s37
    %s41 = sphi 0, %s40
    %s57 = sphi 0, %s41
    %s61 = sphi 0, %s61
    %s63 = sphi 0, %s61
    %s64 = sphi 0, %s63
    %s78 = sphi 0, %s64
    %s82 = sphi 0, %s82
    %s84 = sphi 0, %s82
    %s85 = sphi 0, %s84
    %s99 = sphi 0, %s85
    %s103 = sphi 0, %s103
    %s105 = sphi 0, %s103
    %s106 = sphi 0, %s105
    %s120 = sphi 0, %s106
    %s124 = sphi 0, %s124
    %s126 = sphi 0, %s124
    %s127 = sphi 0, %s126
    %s141 = sphi 0, %s127
    %s149 = sphi 0, %s151
    %s152 = sphi 0, %s149
    %s153 = sphi 0, %s152
    %s169 = sphi 0, %s153
    %s175 = sphi 0, %s177
    %s178 = sphi 0, %s175
    %s179 = sphi 0, %s178
    %s195 = sphi 0, %s179
  $region4: #{resnet_bottleneck_forward.5} parent=0 // loop_header_branch
    %16 = sbr.rel (%p14) target = $region8
  $region5: #{resnet_bottleneck_forward.5} parent=0 // loop_body
    %s18 = ssub.s32 %s13, 1
    %s19 = ssub.s32 %s13, 2
    %s26 = sadd.s32 1, %s21
    %p27 = scmp.ge.s32.totalorder %s26, 1
    %s28 = scalar_select %p27, 0, %s26
    %s29 = sadd.s32 1, %s20
    %s30 = scalar_select %p27, %s29, %s20
    %p31 = scmp.ge.s32.totalorder %s30, 2
    %s32 = scalar_select %p31, 0, %s30
    %s33 = ssub.s32 %s20, %s32
    %s34 = ssub.s32 %s21, %s28
    %s35 = sor.u32 %s33, %s34
    %p36 = scmp.eq.s32.totalorder %s35, 0
    %s38 = sadd.s32 %s37, 1
    %s39 = scalar_select %p36, %s37, %s38
    %p42 = pneg %p36
    %p43 = scmp.eq.s32.totalorder %s13, 1
    %p44 = por %p42, %p43
    %p45 = scmp.ne.s32.totalorder %s37, %s40
    %p46 = scmp.eq.s32.totalorder %s13, 0
    %p47 = por %p45, %p46
    %p48 = scmp.ne.s32.totalorder %s37, %s40
    %p49 = scmp.eq.s32.totalorder %s18, 1
    %p50 = por %p48, %p49
    %p51 = scmp.ne.s32.totalorder %s40, %s41
    %p52 = scmp.eq.s32.totalorder %s18, 0
    %p53 = por %p51, %p52
    %p54 = scmp.ne.s32.totalorder %s40, %s41
    %p55 = scmp.eq.s32.totalorder %s19, 1
    %p56 = por %p54, %p55
    %p58 = scmp.ne.s32.totalorder %s41, %s57
    %p59 = scmp.eq.s32.totalorder %s19, 0
    %p60 = por %p58, %p59
    %s62 = sadd.s32 %s61, 1
    %p65 = scmp.eq.s32.totalorder %s13, 1
    %p66 = scmp.ne.s32.totalorder %s61, %s63
    %p67 = scmp.eq.s32.totalorder %s13, 0
    %p68 = por %p66, %p67
    %p69 = scmp.ne.s32.totalorder %s61, %s63
    %p70 = scmp.eq.s32.totalorder %s18, 1
    %p71 = por %p69, %p70
    %p72 = scmp.ne.s32.totalorder %s63, %s64
    %p73 = scmp.eq.s32.totalorder %s18, 0
    %p74 = por %p72, %p73
    %p75 = scmp.ne.s32.totalorder %s63, %s64
    %p76 = scmp.eq.s32.totalorder %s19, 1
    %p77 = por %p75, %p76
    %p79 = scmp.ne.s32.totalorder %s64, %s78
    %p80 = scmp.eq.s32.totalorder %s19, 0
    %p81 = por %p79, %p80
    %s83 = sadd.s32 %s82, 1
    %p86 = scmp.eq.s32.totalorder %s13, 1
    %p87 = scmp.ne.s32.totalorder %s82, %s84
    %p88 = scmp.eq.s32.totalorder %s13, 0
    %p89 = por %p87, %p88
    %p90 = scmp.ne.s32.totalorder %s82, %s84
    %p91 = scmp.eq.s32.totalorder %s18, 1
    %p92 = por %p90, %p91
    %p93 = scmp.ne.s32.totalorder %s84, %s85
    %p94 = scmp.eq.s32.totalorder %s18, 0
    %p95 = por %p93, %p94
    %p96 = scmp.ne.s32.totalorder %s84, %s85
    %p97 = scmp.eq.s32.totalorder %s19, 1
    %p98 = por %p96, %p97
    %p100 = scmp.ne.s32.totalorder %s85, %s99
    %p101 = scmp.eq.s32.totalorder %s19, 0
    %p102 = por %p100, %p101
    %s104 = sadd.s32 %s103, 1
    %p107 = scmp.eq.s32.totalorder %s13, 1
    %p108 = scmp.ne.s32.totalorder %s103, %s105
    %p109 = scmp.eq.s32.totalorder %s13, 0
    %p110 = por %p108, %p109
    %p111 = scmp.ne.s32.totalorder %s103, %s105
    %p112 = scmp.eq.s32.totalorder %s18, 1
    %p113 = por %p111, %p112
    %p114 = scmp.ne.s32.totalorder %s105, %s106
    %p115 = scmp.eq.s32.totalorder %s18, 0
    %p116 = por %p114, %p115
    %p117 = scmp.ne.s32.totalorder %s105, %s106
    %p118 = scmp.eq.s32.totalorder %s19, 1
    %p119 = por %p117, %p118
    %p121 = scmp.ne.s32.totalorder %s106, %s120
    %p122 = scmp.eq.s32.totalorder %s19, 0
    %p123 = por %p121, %p122
    %s125 = sadd.s32 %s124, 1
    %p128 = scmp.eq.s32.totalorder %s13, 1
    %p129 = scmp.ne.s32.totalorder %s124, %s126
    %p130 = scmp.eq.s32.totalorder %s13, 0
    %p131 = por %p129, %p130
    %p132 = scmp.ne.s32.totalorder %s124, %s126
    %p133 = scmp.eq.s32.totalorder %s18, 1
    %p134 = por %p132, %p133
    %p135 = scmp.ne.s32.totalorder %s126, %s127
    %p136 = scmp.eq.s32.totalorder %s18, 0
    %p137 = por %p135, %p136
    %p138 = scmp.ne.s32.totalorder %s126, %s127
    %p139 = scmp.eq.s32.totalorder %s19, 1
    %p140 = por %p138, %p139
    %p142 = scmp.ne.s32.totalorder %s127, %s141
    %p143 = scmp.eq.s32.totalorder %s19, 0
    %p144 = por %p142, %p143
    %s145 = ssub.s32 %s20, %s32
    %s146 = ssub.s32 %s21, %s28
    %s147 = sor.u32 %s145, %s146
    %p148 = scmp.eq.s32.totalorder %s147, 0
    %s150 = sadd.s32 %s149, 1
    %s151 = scalar_select %p148, %s149, %s150
    %p154 = pneg %p148
    %p155 = scmp.eq.s32.totalorder %s13, 1
    %p156 = por %p154, %p155
    %p157 = scmp.ne.s32.totalorder %s149, %s152
    %p158 = scmp.eq.s32.totalorder %s13, 0
    %p159 = por %p157, %p158
    %p160 = scmp.ne.s32.totalorder %s149, %s152
    %p161 = scmp.eq.s32.totalorder %s18, 1
    %p162 = por %p160, %p161
    %p163 = scmp.ne.s32.totalorder %s152, %s153
    %p164 = scmp.eq.s32.totalorder %s18, 0
    %p165 = por %p163, %p164
    %p166 = scmp.ne.s32.totalorder %s152, %s153
    %p167 = scmp.eq.s32.totalorder %s19, 1
    %p168 = por %p166, %p167
    %p170 = scmp.ne.s32.totalorder %s153, %s169
    %p171 = scmp.eq.s32.totalorder %s19, 0
    %p172 = por %p170, %p171
    %s173 = ssub.s32 %s20, %s32
    %p174 = scmp.eq.s32.totalorder %s173, 0
    %s176 = sadd.s32 %s175, 1
    %s177 = scalar_select %p174, %s175, %s176
    %p180 = pneg %p174
    %p181 = scmp.eq.s32.totalorder %s13, 1
    %p182 = por %p180, %p181
    %p183 = scmp.ne.s32.totalorder %s175, %s178
    %p184 = scmp.eq.s32.totalorder %s13, 0
    %p185 = por %p183, %p184
    %p186 = scmp.ne.s32.totalorder %s175, %s178
    %p187 = scmp.eq.s32.totalorder %s18, 1
    %p188 = por %p186, %p187
    %p189 = scmp.ne.s32.totalorder %s178, %s179
    %p190 = scmp.eq.s32.totalorder %s18, 0
    %p191 = por %p189, %p190
    %p192 = scmp.ne.s32.totalorder %s178, %s179
    %p193 = scmp.eq.s32.totalorder %s19, 1
    %p194 = por %p192, %p193
    %p196 = scmp.ne.s32.totalorder %s179, %s195
    %p197 = scmp.eq.s32.totalorder %s19, 0
    %p198 = por %p196, %p197
    %p199 = scmp.le.s32.totalorder 1, %s13
    %p200 = scmp.lt.s32.totalorder %s13, 3
    %p201 = pnand %p199, %p200
    %p202 = pneg %p201
    // Predicated region
    $region9: #{resnet_bottleneck_forward.5} parent=5 // pred_check
      _
    $region10: #{resnet_bottleneck_forward.5} parent=5 // pred_check_branch
      %204 = sbr.rel (%p201) target = $region12
    $region11: #{resnet_bottleneck_forward.5} parent=5 // pred_region
      %s205 = ssub.s32 %s13, 1
      // Predicated region
      $region13: #{resnet_bottleneck_forward.5} parent=11 // pred_check
        %p206 = pneg %p74
      $region14: #{resnet_bottleneck_forward.5} parent=11 // pred_check_branch
        %208 = sbr.rel (%p206) target = $region16
      $region15: #{resnet_bottleneck_forward.5} parent=11 // pred_region
        _
      $region16: #{resnet_bottleneck_forward.5} parent=11 // pred_fallthru
        _
      // Predicated region
      $region17: #{resnet_bottleneck_forward.5} parent=11 // pred_check
        %p209 = pneg %p95
      $region18: #{resnet_bottleneck_forward.5} parent=11 // pred_check_branch
        %211 = sbr.rel (%p209) target = $region20
      $region19: #{resnet_bottleneck_forward.5} parent=11 // pred_region
        _
      $region20: #{resnet_bottleneck_forward.5} parent=11 // pred_fallthru
        _
      // Predicated region
      $region21: #{resnet_bottleneck_forward.5} parent=11 // pred_check
        %p212 = pneg %p116
      $region22: #{resnet_bottleneck_forward.5} parent=11 // pred_check_branch
        %214 = sbr.rel (%p212) target = $region24
      $region23: #{resnet_bottleneck_forward.5} parent=11 // pred_region
        _
      $region24: #{resnet_bottleneck_forward.5} parent=11 // pred_fallthru
        _
      // Predicated region
      $region25: #{resnet_bottleneck_forward.5} parent=11 // pred_check
        %p215 = pneg %p137
      $region26: #{resnet_bottleneck_forward.5} parent=11 // pred_check_branch
        %217 = sbr.rel (%p215) target = $region28
      $region27: #{resnet_bottleneck_forward.5} parent=11 // pred_region
        _
      $region28: #{resnet_bottleneck_forward.5} parent=11 // pred_fallthru
        _
    $region12: #{resnet_bottleneck_forward.5} parent=5 // pred_fallthru
      _
    %p218 = scmp.lt.s32.totalorder %s13, 2
    // Predicated region
    $region29: #{resnet_bottleneck_forward.5} parent=5 // pred_check
      %p219 = pneg %p218
    $region30: #{resnet_bottleneck_forward.5} parent=5 // pred_check_branch
      %221 = sbr.rel (%p219) target = $region32
    $region31: #{resnet_bottleneck_forward.5} parent=5 // pred_region
      // Predicated region
      $region33: #{resnet_bottleneck_forward.5} parent=31 // pred_check
        %p222 = pneg %p47
      $region34: #{resnet_bottleneck_forward.5} parent=31 // pred_check_branch
        %224 = sbr.rel (%p222) target = $region36
      $region35: #{resnet_bottleneck_forward.5} parent=31 // pred_region
        %s225 = smul.u32 2, %s21
        %p226 = scmp.lt.s32.totalorder %s20, 1
        %s227 = scalar_select %p226, %s20, 1
        %p228 = scmp.lt.s32.totalorder %s225, 1
        %s229 = scalar_select %p228, %s225, 1
        %s230 = smul.addr %s227, 2
        %s231 = sadd.s32 %s229, %s230
        %s232 = smul.addr %s231, 8
        %s233 = scalar_lea.vmem %s0, %s232
        %s234 = smul.u32 2, %s21
      $region36: #{resnet_bottleneck_forward.5} parent=31 // pred_fallthru
        _
    $region32: #{resnet_bottleneck_forward.5} parent=5 // pred_fallthru
      _
    %p235 = scmp.le.s32.totalorder 1, %s13
    %p236 = scmp.lt.s32.totalorder %s13, 3
    %p237 = pnand %p235, %p236
    %p238 = pneg %p237
    // Predicated region
    $region37: #{resnet_bottleneck_forward.5} parent=5 // pred_check
      _
    $region38: #{resnet_bottleneck_forward.5} parent=5 // pred_check_branch
      %240 = sbr.rel (%p237) target = $region40
    $region39: #{resnet_bottleneck_forward.5} parent=5 // pred_region
      %s241 = ssub.s32 %s13, 1
      %s242 = smul.u32 2, %s23
      %p243 = scmp.lt.s32.totalorder %s22, 1
      %s244 = scalar_select %p243, %s22, 1
      %p245 = scmp.lt.s32.totalorder %s242, 1
      %s246 = scalar_select %p245, %s242, 1
      %s247 = smul.addr %s244, 2
      %s248 = sadd.s32 %s246, %s247
      %s249 = smul.addr %s248, 8
      %s250 = scalar_lea.vmem %s0, %s249
      %p251 = pneg %p53
      %p252 = pneg %p50
      %p253 = pneg %p74
      %p254 = pneg %p71
      %p255 = pneg %p95
      %p256 = pneg %p92
      %p257 = pneg %p116
      %p258 = pneg %p113
      %p259 = pneg %p137
      %p260 = pneg %p134
      %p261 = pneg %p165
      %p262 = pneg %p162
      %s263 = smul.u32 32, %s23
      %p264 = scmp.lt.s32.totalorder %s22, 1
      %s265 = scalar_select %p264, %s22, 1
      %p266 = scmp.lt.s32.totalorder %s263, 31
      %s267 = scalar_select %p266, %s263, 31
      %s268 = smul.addr %s265, 32
      %s269 = sadd.s32 %s267, %s268
      %s270 = smul.addr %s269, 4
      %s271 = scalar_lea.vmem %s5, %s270
      %p272 = pneg %p191
      %p273 = pneg %p188
      %p274 = scmp.lt.s32.totalorder %s22, 1
      %s275 = scalar_select %p274, %s22, 1
      %s276 = smul.addr %s275, 2
      %s277 = scalar_lea.vmem %s6, %s276
      %s278 = smul.u32 2, %s23
      %p279 = scmp.lt.s32.totalorder %s22, 1
      %s280 = scalar_select %p279, %s22, 1
      %p281 = scmp.lt.s32.totalorder %s278, 1
      %s282 = scalar_select %p281, %s278, 1
      %s283 = smul.addr %s280, 2
      %s284 = sadd.s32 %s282, %s283
      %s285 = smul.addr %s284, 8
      %s286 = scalar_lea.vmem %s0, %s285
      %s287 = smul.u32 2, %s23
      %s288 = smul.u32 32, %s23
      %p289 = scmp.lt.s32.totalorder %s22, 1
      %s290 = scalar_select %p289, %s22, 1
      %p291 = scmp.lt.s32.totalorder %s288, 31
      %s292 = scalar_select %p291, %s288, 31
      %s293 = smul.addr %s290, 32
      %s294 = sadd.s32 %s292, %s293
      %s295 = smul.addr %s294, 4
      %s296 = scalar_lea.vmem %s5, %s295
      %s297 = smul.u32 32, %s23
      %p298 = scmp.lt.s32.totalorder %s22, 1
      %s299 = scalar_select %p298, %s22, 1
      %s300 = smul.addr %s299, 2
      %s301 = scalar_lea.vmem %s6, %s300
      %v303 = vld [vmem:[%s286] sm:$0xff]
      %v304 = vld [vmem:[%s286 + $0x8] sm:$0xff]
      %v305 = vld [vmem:[%s1] sm:$0xff]
      %307 = vset.pattern.permute.xlu0 0
      %308 = vperm.xlu0 %307, %v305
      %v309 = vpop.permute.xlu0 %308
      %v311 = vmul.f32 %v303, %v309
      %v312 = vmul.f32 %v304, %v309
      %v313 = vld [vmem:[%s2] sm:$0xff]
      %315 = vset.pattern.permute.xlu0 0
      %316 = vperm.xlu0 %315, %v313
      %v317 = vpop.permute.xlu0 %316
      %v319 = vadd.f32 %v311, %v317
      %v320 = vadd.f32 %v312, %v317
      %v321 = vmax.f32 %v319, 0.0
      %v322 = vmax.f32 %v320, 0.0
      %v323 = vpack.c.bf16 %v321, %v321
      %v324 = vpack.c.bf16 %v322, %v322
      %v325 = vld [vmem:[%s3] sm:$0xf]
      %v326 = vld [vmem:[%s4] sm:$0x1]
      %v328 = vperm.slane %v326, 0
      %330 = vxpose.binary.xlu0.c.b16.start [1/16] %v324, %v323, 128
      %331 = vxpose.binary.xlu0.c.b16.cont [2/16] 0, 0, 128
      %332 = vxpose.binary.xlu0.c.b16.cont [3/16] 0, 0, 128
      %333 = vxpose.binary.xlu0.c.b16.cont [4/16] 0, 0, 128
      %334 = vxpose.binary.xlu0.c.b16.cont [5/16] 0, 0, 128
      %335 = vxpose.binary.xlu0.c.b16.cont [6/16] 0, 0, 128
      %336 = vxpose.binary.xlu0.c.b16.cont [7/16] 0, 0, 128
      %337 = vxpose.binary.xlu0.c.b16.end [8/16] 0, 0, 128
      %v338 = vpop.trf.xlu0
      %v339 = vpop.trf.xlu0
      %v340 = vpop.trf.xlu0
      %v341 = vpop.trf.xlu0
      %v342 = vpop.trf.xlu0
      %v343 = vpop.trf.xlu0
      %v344 = vpop.trf.xlu0
      %v345 = vpop.trf.xlu0
      %v346 = vpop.trf.xlu0
      %v347 = vpop.trf.xlu0
      %v348 = vpop.trf.xlu0
      %v349 = vpop.trf.xlu0
      %v350 = vpop.trf.xlu0
      %v351 = vpop.trf.xlu0
      %v352 = vpop.trf.xlu0
      %v353 = vpop.trf.xlu0
      %vm354 = vcmask 64512
      %v356 = vsel %vm354, %v338, 0
      %v359 = vsel %vm354, %v340, 0
      %v362 = vsel %vm354, %v342, 0
      %v365 = vsel %vm354, %v344, 0
      %v368 = vsel %vm354, %v346, 0
      %v371 = vsel %vm354, %v348, 0
      %v374 = vsel %vm354, %v350, 0
      %v377 = vsel %vm354, %v352, 0
      %v380 = vsel %vm354, %v339, 0
      %v383 = vsel %vm354, %v341, 0
      %v386 = vsel %vm354, %v343, 0
      %v389 = vsel %vm354, %v345, 0
      %v392 = vsel %vm354, %v347, 0
      %v395 = vsel %vm354, %v349, 0
      %v398 = vsel %vm354, %v351, 0
      %v401 = vsel %vm354, %v353, 0
      %vm403 = vcmask 1043456
      %v405 = vsel %vm403, %v325, 0
      %407 = vmatpush.bf16.msra.mxu0 0
      %408 = vmatpush.bf16.msra.mxu0 0
      %409 = vmatpush.bf16.msra.mxu0 0
      %410 = vmatpush.bf16.msra.mxu0 0
      %411 = vmatpush.bf16.msra.mxu0 0
      %412 = vmatpush.bf16.msra.mxu0 0
      %413 = vmatpush.bf16.msra.mxu0 0
      %414 = vmatpush.bf16.msra.mxu0 %v405
      %415 = vmatmul.bf16.gmra.mxu0 %v356
      %v416 = vpop.f32.mrf.mxu0
      %v417 = vadd.f32 %v328, %v416
      %v418 = vpop.f32.mrf.mxu0
      %v419 = vadd.f32 %v328, %v418
      %420 = vmatmul.bf16.gmra.mxu0 %v359
      %v421 = vpop.f32.mrf.mxu0
      %v422 = vadd.f32 %v328, %v421
      %v423 = vpop.f32.mrf.mxu0
      %v424 = vadd.f32 %v328, %v423
      %425 = vmatmul.bf16.gmra.mxu0 %v362
      %v426 = vpop.f32.mrf.mxu0
      %v427 = vadd.f32 %v328, %v426
      %v428 = vpop.f32.mrf.mxu0
      %v429 = vadd.f32 %v328, %v428
      %430 = vmatmul.bf16.gmra.mxu0 %v365
      %v431 = vpop.f32.mrf.mxu0
      %v432 = vadd.f32 %v328, %v431
      %v433 = vpop.f32.mrf.mxu0
      %v434 = vadd.f32 %v328, %v433
      %435 = vmatmul.bf16.gmra.mxu0 %v368
      %v436 = vpop.f32.mrf.mxu0
      %v437 = vadd.f32 %v328, %v436
      %v438 = vpop.f32.mrf.mxu0
      %v439 = vadd.f32 %v328, %v438
      %440 = vmatmul.bf16.gmra.mxu0 %v371
      %v441 = vpop.f32.mrf.mxu0
      %v442 = vadd.f32 %v328, %v441
      %v443 = vpop.f32.mrf.mxu0
      %v444 = vadd.f32 %v328, %v443
      %445 = vmatmul.bf16.gmra.mxu0 %v374
      %v446 = vpop.f32.mrf.mxu0
      %v447 = vadd.f32 %v328, %v446
      %v448 = vpop.f32.mrf.mxu0
      %v449 = vadd.f32 %v328, %v448
      %450 = vmatmul.bf16.gmra.mxu0 %v377
      %v451 = vpop.f32.mrf.mxu0
      %v452 = vadd.f32 %v328, %v451
      %v453 = vpop.f32.mrf.mxu0
      %v454 = vadd.f32 %v328, %v453
      %455 = vmatmul.bf16.gmra.mxu0 %v380
      %v456 = vpop.f32.mrf.mxu0
      %v457 = vadd.f32 %v328, %v456
      %v458 = vpop.f32.mrf.mxu0
      %v459 = vadd.f32 %v328, %v458
      %460 = vmatmul.bf16.gmra.mxu0 %v383
      %v461 = vpop.f32.mrf.mxu0
      %v462 = vadd.f32 %v328, %v461
      %v463 = vpop.f32.mrf.mxu0
      %v464 = vadd.f32 %v328, %v463
      %465 = vmatmul.bf16.gmra.mxu0 %v386
      %v466 = vpop.f32.mrf.mxu0
      %v467 = vadd.f32 %v328, %v466
      %v468 = vpop.f32.mrf.mxu0
      %v469 = vadd.f32 %v328, %v468
      %470 = vmatmul.bf16.gmra.mxu0 %v389
      %v471 = vpop.f32.mrf.mxu0
      %v472 = vadd.f32 %v328, %v471
      %v473 = vpop.f32.mrf.mxu0
      %v474 = vadd.f32 %v328, %v473
      %475 = vmatmul.bf16.gmra.mxu0 %v392
      %v476 = vpop.f32.mrf.mxu0
      %v477 = vadd.f32 %v328, %v476
      %v478 = vpop.f32.mrf.mxu0
      %v479 = vadd.f32 %v328, %v478
      %480 = vmatmul.bf16.gmra.mxu0 %v395
      %v481 = vpop.f32.mrf.mxu0
      %v482 = vadd.f32 %v328, %v481
      %v483 = vpop.f32.mrf.mxu0
      %v484 = vadd.f32 %v328, %v483
      %485 = vmatmul.bf16.gmra.mxu0 %v398
      %v486 = vpop.f32.mrf.mxu0
      %v487 = vadd.f32 %v328, %v486
      %v488 = vpop.f32.mrf.mxu0
      %v489 = vadd.f32 %v328, %v488
      %490 = vmatmul.bf16.gmra.mxu0 %v401
      %v491 = vpop.f32.mrf.mxu0
      %v492 = vadd.f32 %v328, %v491
      %v493 = vpop.f32.mrf.mxu0
      %v494 = vadd.f32 %v328, %v493
      %495 = vdwg.mxu0
      %v496 = vpack.c.bf16 %v417, %v417
      %v497 = vpack.c.bf16 %v419, %v419
      %v498 = vpack.c.bf16 %v422, %v422
      %v499 = vpack.c.bf16 %v424, %v424
      %v500 = vpack.c.bf16 %v427, %v427
      %v501 = vpack.c.bf16 %v429, %v429
      %v502 = vpack.c.bf16 %v432, %v432
      %v503 = vpack.c.bf16 %v434, %v434
      %v504 = vpack.c.bf16 %v437, %v437
      %v505 = vpack.c.bf16 %v439, %v439
      %v506 = vpack.c.bf16 %v442, %v442
      %v507 = vpack.c.bf16 %v444, %v444
      %v508 = vpack.c.bf16 %v447, %v447
      %v509 = vpack.c.bf16 %v449, %v449
      %v510 = vpack.c.bf16 %v452, %v452
      %v511 = vpack.c.bf16 %v454, %v454
      %v512 = vpack.c.bf16 %v457, %v457
      %v513 = vpack.c.bf16 %v459, %v459
      %v514 = vpack.c.bf16 %v462, %v462
      %v515 = vpack.c.bf16 %v464, %v464
      %v516 = vpack.c.bf16 %v467, %v467
      %v517 = vpack.c.bf16 %v469, %v469
      %v518 = vpack.c.bf16 %v472, %v472
      %v519 = vpack.c.bf16 %v474, %v474
      %v520 = vpack.c.bf16 %v477, %v477
      %v521 = vpack.c.bf16 %v479, %v479
      %v522 = vpack.c.bf16 %v482, %v482
      %v523 = vpack.c.bf16 %v484, %v484
      %v524 = vpack.c.bf16 %v487, %v487
      %v525 = vpack.c.bf16 %v489, %v489
      %v526 = vpack.c.bf16 %v492, %v492
      %v527 = vpack.c.bf16 %v494, %v494
      %vm528 = vcmask 27648
      %529 = vst.msk [vmem:[%s296] sm:$0xf] %vm528, %v496
      %530 = vst.msk [vmem:[%s296 + $0x4] sm:$0xf] %vm528, %v497
      %531 = vst.msk [vmem:[%s296 + $0x8] sm:$0xf] %vm528, %v498
      %532 = vst.msk [vmem:[%s296 + $0xc] sm:$0xf] %vm528, %v499
      %533 = vst.msk [vmem:[%s296 + $0x10] sm:$0xf] %vm528, %v500
      %534 = vst.msk [vmem:[%s296 + $0x14] sm:$0xf] %vm528, %v501
      %535 = vst.msk [vmem:[%s296 + $0x18] sm:$0xf] %vm528, %v502
      %536 = vst.msk [vmem:[%s296 + $0x1c] sm:$0xf] %vm528, %v503
      %537 = vst.msk [vmem:[%s296 + $0x20] sm:$0xf] %vm528, %v504
      %538 = vst.msk [vmem:[%s296 + $0x24] sm:$0xf] %vm528, %v505
      %539 = vst.msk [vmem:[%s296 + $0x28] sm:$0xf] %vm528, %v506
      %540 = vst.msk [vmem:[%s296 + $0x2c] sm:$0xf] %vm528, %v507
      %541 = vst.msk [vmem:[%s296 + $0x30] sm:$0xf] %vm528, %v508
      %542 = vst.msk [vmem:[%s296 + $0x34] sm:$0xf] %vm528, %v509
      %543 = vst.msk [vmem:[%s296 + $0x38] sm:$0xf] %vm528, %v510
      %544 = vst.msk [vmem:[%s296 + $0x3c] sm:$0xf] %vm528, %v511
      %545 = vst.msk [vmem:[%s296 + $0x40] sm:$0xf] %vm528, %v512
      %546 = vst.msk [vmem:[%s296 + $0x44] sm:$0xf] %vm528, %v513
      %547 = vst.msk [vmem:[%s296 + $0x48] sm:$0xf] %vm528, %v514
      %548 = vst.msk [vmem:[%s296 + $0x4c] sm:$0xf] %vm528, %v515
      %549 = vst.msk [vmem:[%s296 + $0x50] sm:$0xf] %vm528, %v516
      %550 = vst.msk [vmem:[%s296 + $0x54] sm:$0xf] %vm528, %v517
      %551 = vst.msk [vmem:[%s296 + $0x58] sm:$0xf] %vm528, %v518
      %552 = vst.msk [vmem:[%s296 + $0x5c] sm:$0xf] %vm528, %v519
      %553 = vst.msk [vmem:[%s296 + $0x60] sm:$0xf] %vm528, %v520
      %554 = vst.msk [vmem:[%s296 + $0x64] sm:$0xf] %vm528, %v521
      %555 = vst.msk [vmem:[%s296 + $0x68] sm:$0xf] %vm528, %v522
      %556 = vst.msk [vmem:[%s296 + $0x6c] sm:$0xf] %vm528, %v523
      %557 = vst.msk [vmem:[%s296 + $0x70] sm:$0xf] %vm528, %v524
      %558 = vst.msk [vmem:[%s296 + $0x74] sm:$0xf] %vm528, %v525
      %559 = vst.msk [vmem:[%s296 + $0x78] sm:$0xf] %vm528, %v526
      %560 = vst.msk [vmem:[%s296 + $0x7c] sm:$0xf] %vm528, %v527
      %vm561 = vcmask 31744
      %v562 = vsel %vm561, %v417, 0.0
      %v563 = vsel %vm561, %v419, 0.0
      %v564 = vadd.f32 %v562, %v563
      %v565 = vsel %vm561, %v422, 0.0
      %v566 = vadd.f32 %v564, %v565
      %v567 = vsel %vm561, %v424, 0.0
      %v568 = vadd.f32 %v566, %v567
      %v569 = vsel %vm561, %v427, 0.0
      %v570 = vadd.f32 %v568, %v569
      %v571 = vsel %vm561, %v429, 0.0
      %v572 = vadd.f32 %v570, %v571
      %v573 = vsel %vm561, %v432, 0.0
      %v574 = vadd.f32 %v572, %v573
      %v575 = vsel %vm561, %v434, 0.0
      %v576 = vadd.f32 %v574, %v575
      %v577 = vsel %vm561, %v437, 0.0
      %v578 = vadd.f32 %v576, %v577
      %v579 = vsel %vm561, %v439, 0.0
      %v580 = vadd.f32 %v578, %v579
      %v581 = vsel %vm561, %v442, 0.0
      %v582 = vadd.f32 %v580, %v581
      %v583 = vsel %vm561, %v444, 0.0
      %v584 = vadd.f32 %v582, %v583
      %v585 = vsel %vm561, %v447, 0.0
      %v586 = vadd.f32 %v584, %v585
      %v587 = vsel %vm561, %v449, 0.0
      %v588 = vadd.f32 %v586, %v587
      %v589 = vsel %vm561, %v452, 0.0
      %v590 = vadd.f32 %v588, %v589
      %v591 = vsel %vm561, %v454, 0.0
      %v592 = vadd.f32 %v590, %v591
      %v593 = vsel %vm561, %v457, 0.0
      %v594 = vadd.f32 %v592, %v593
      %v595 = vsel %vm561, %v459, 0.0
      %v596 = vadd.f32 %v594, %v595
      %v597 = vsel %vm561, %v462, 0.0
      %v598 = vadd.f32 %v596, %v597
      %v599 = vsel %vm561, %v464, 0.0
      %v600 = vadd.f32 %v598, %v599
      %v601 = vsel %vm561, %v467, 0.0
      %v602 = vadd.f32 %v600, %v601
      %v603 = vsel %vm561, %v469, 0.0
      %v604 = vadd.f32 %v602, %v603
      %v605 = vsel %vm561, %v472, 0.0
      %v606 = vadd.f32 %v604, %v605
      %v607 = vsel %vm561, %v474, 0.0
      %v608 = vadd.f32 %v606, %v607
      %v609 = vsel %vm561, %v477, 0.0
      %v610 = vadd.f32 %v608, %v609
      %v611 = vsel %vm561, %v479, 0.0
      %v612 = vadd.f32 %v610, %v611
      %v613 = vsel %vm561, %v482, 0.0
      %v614 = vadd.f32 %v612, %v613
      %v615 = vsel %vm561, %v484, 0.0
      %v616 = vadd.f32 %v614, %v615
      %v617 = vsel %vm561, %v487, 0.0
      %v618 = vadd.f32 %v616, %v617
      %v619 = vsel %vm561, %v489, 0.0
      %v620 = vadd.f32 %v618, %v619
      %v621 = vsel %vm561, %v492, 0.0
      %v622 = vadd.f32 %v620, %v621
      %v623 = vsel %vm561, %v494, 0.0
      %v624 = vadd.f32 %v622, %v623
      %v625 = vrot.slane %v624, 4
      %v626 = vadd.f32 %v624, %v625
      %v627 = vrot.slane %v626, 2
      %v628 = vadd.f32 %v626, %v627
      %v629 = vrot.slane %v628, 1
      %v630 = vadd.f32 %v628, %v629
      %v631 = vmul.f32 %v417, %v417
      %v632 = vmul.f32 %v419, %v419
      %v633 = vmul.f32 %v422, %v422
      %v634 = vmul.f32 %v424, %v424
      %v635 = vmul.f32 %v427, %v427
      %v636 = vmul.f32 %v429, %v429
      %v637 = vmul.f32 %v432, %v432
      %v638 = vmul.f32 %v434, %v434
      %v639 = vmul.f32 %v437, %v437
      %v640 = vmul.f32 %v439, %v439
      %v641 = vmul.f32 %v442, %v442
      %v642 = vmul.f32 %v444, %v444
      %v643 = vmul.f32 %v447, %v447
      %v644 = vmul.f32 %v449, %v449
      %v645 = vmul.f32 %v452, %v452
      %v646 = vmul.f32 %v454, %v454
      %v647 = vmul.f32 %v457, %v457
      %v648 = vmul.f32 %v459, %v459
      %v649 = vmul.f32 %v462, %v462
      %v650 = vmul.f32 %v464, %v464
      %v651 = vmul.f32 %v467, %v467
      %v652 = vmul.f32 %v469, %v469
      %v653 = vmul.f32 %v472, %v472
      %v654 = vmul.f32 %v474, %v474
      %v655 = vmul.f32 %v477, %v477
      %v656 = vmul.f32 %v479, %v479
      %v657 = vmul.f32 %v482, %v482
      %v658 = vmul.f32 %v484, %v484
      %v659 = vmul.f32 %v487, %v487
      %v660 = vmul.f32 %v489, %v489
      %v661 = vmul.f32 %v492, %v492
      %v662 = vmul.f32 %v494, %v494
      %v663 = vsel %vm561, %v631, 0.0
      %v664 = vsel %vm561, %v632, 0.0
      %v665 = vadd.f32 %v663, %v664
      %v666 = vsel %vm561, %v633, 0.0
      %v667 = vadd.f32 %v665, %v666
      %v668 = vsel %vm561, %v634, 0.0
      %v669 = vadd.f32 %v667, %v668
      %v670 = vsel %vm561, %v635, 0.0
      %v671 = vadd.f32 %v669, %v670
      %v672 = vsel %vm561, %v636, 0.0
      %v673 = vadd.f32 %v671, %v672
      %v674 = vsel %vm561, %v637, 0.0
      %v675 = vadd.f32 %v673, %v674
      %v676 = vsel %vm561, %v638, 0.0
      %v677 = vadd.f32 %v675, %v676
      %v678 = vsel %vm561, %v639, 0.0
      %v679 = vadd.f32 %v677, %v678
      %v680 = vsel %vm561, %v640, 0.0
      %v681 = vadd.f32 %v679, %v680
      %v682 = vsel %vm561, %v641, 0.0
      %v683 = vadd.f32 %v681, %v682
      %v684 = vsel %vm561, %v642, 0.0
      %v685 = vadd.f32 %v683, %v684
      %v686 = vsel %vm561, %v643, 0.0
      %v687 = vadd.f32 %v685, %v686
      %v688 = vsel %vm561, %v644, 0.0
      %v689 = vadd.f32 %v687, %v688
      %v690 = vsel %vm561, %v645, 0.0
      %v691 = vadd.f32 %v689, %v690
      %v692 = vsel %vm561, %v646, 0.0
      %v693 = vadd.f32 %v691, %v692
      %v694 = vsel %vm561, %v647, 0.0
      %v695 = vadd.f32 %v693, %v694
      %v696 = vsel %vm561, %v648, 0.0
      %v697 = vadd.f32 %v695, %v696
      %v698 = vsel %vm561, %v649, 0.0
      %v699 = vadd.f32 %v697, %v698
      %v700 = vsel %vm561, %v650, 0.0
      %v701 = vadd.f32 %v699, %v700
      %v702 = vsel %vm561, %v651, 0.0
      %v703 = vadd.f32 %v701, %v702
      %v704 = vsel %vm561, %v652, 0.0
      %v705 = vadd.f32 %v703, %v704
      %v706 = vsel %vm561, %v653, 0.0
      %v707 = vadd.f32 %v705, %v706
      %v708 = vsel %vm561, %v654, 0.0
      %v709 = vadd.f32 %v707, %v708
      %v710 = vsel %vm561, %v655, 0.0
      %v711 = vadd.f32 %v709, %v710
      %v712 = vsel %vm561, %v656, 0.0
      %v713 = vadd.f32 %v711, %v712
      %v714 = vsel %vm561, %v657, 0.0
      %v715 = vadd.f32 %v713, %v714
      %v716 = vsel %vm561, %v658, 0.0
      %v717 = vadd.f32 %v715, %v716
      %v718 = vsel %vm561, %v659, 0.0
      %v719 = vadd.f32 %v717, %v718
      %v720 = vsel %vm561, %v660, 0.0
      %v721 = vadd.f32 %v719, %v720
      %v722 = vsel %vm561, %v661, 0.0
      %v723 = vadd.f32 %v721, %v722
      %v724 = vsel %vm561, %v662, 0.0
      %v725 = vadd.f32 %v723, %v724
      %v726 = vrot.slane %v725, 4
      %v727 = vadd.f32 %v725, %v726
      %v728 = vrot.slane %v727, 2
      %v729 = vadd.f32 %v727, %v728
      %v730 = vrot.slane %v729, 1
      %v731 = vadd.f32 %v729, %v730
      %p732 = scmp.eq.s32.totalorder %s23, 0
      // Predicated region
      $region41: #{resnet_bottleneck_forward.5} parent=39 // pred_check
        %p733 = pneg %p732
      $region42: #{resnet_bottleneck_forward.5} parent=39 // pred_check_branch
        %735 = sbr.rel (%p733) target = $region44
      $region43: #{resnet_bottleneck_forward.5} parent=39 // pred_region
        %vm736 = vcmask 24576
        %737 = vst.msk [vmem:[%s301] sm:$0x1] %vm736, %v630
        %738 = vst.msk [vmem:[%s301 + $0x1] sm:$0x1] %vm736, %v731
      $region44: #{resnet_bottleneck_forward.5} parent=39 // pred_fallthru
        _
      %p739 = scmp.gt.s32.totalorder %s23, 0
      // Predicated region
      $region45: #{resnet_bottleneck_forward.5} parent=39 // pred_check
        %p740 = pneg %p739
      $region46: #{resnet_bottleneck_forward.5} parent=39 // pred_check_branch
        %742 = sbr.rel (%p740) target = $region48
      $region47: #{resnet_bottleneck_forward.5} parent=39 // pred_region
        %v743 = vld [vmem:[%s301] sm:$0x1]
        %v744 = vadd.f32 %v743, %v630
        %vm745 = vcmask 24576
        %746 = vst.msk [vmem:[%s301] sm:$0x1] %vm745, %v744
        %v747 = vld [vmem:[%s301 + $0x1] sm:$0x1]
        %v748 = vadd.f32 %v747, %v731
        %749 = vst.msk [vmem:[%s301 + $0x1] sm:$0x1] %vm745, %v748
      $region48: #{resnet_bottleneck_forward.5} parent=39 // pred_fallthru
        _
      %s750 = smul.u32 32, %s23
      %p751 = scmp.lt.s32.totalorder %s22, 1
      %s752 = scalar_select %p751, %s22, 1
      %p753 = scmp.lt.s32.totalorder %s750, 31
      %s754 = scalar_select %p753, %s750, 31
      %s755 = smul.addr %s752, 32
      %s756 = sadd.s32 %s754, %s755
      %s757 = smul.addr %s756, 4
      %s758 = scalar_lea.vmem %s5, %s757
      %p759 = scmp.lt.s32.totalorder %s22, 1
      %s760 = scalar_select %p759, %s22, 1
      %s761 = smul.addr %s760, 2
      %s762 = scalar_lea.vmem %s6, %s761
      // Predicated region
      $region49: #{resnet_bottleneck_forward.5} parent=39 // pred_check
        %p763 = pneg %p162
      $region50: #{resnet_bottleneck_forward.5} parent=39 // pred_check_branch
        %765 = sbr.rel (%p763) target = $region52
      $region51: #{resnet_bottleneck_forward.5} parent=39 // pred_region
        %s766 = smul.u32 32, %s23
      $region52: #{resnet_bottleneck_forward.5} parent=39 // pred_fallthru
        _
      // Predicated region
      $region53: #{resnet_bottleneck_forward.5} parent=39 // pred_check
        %p767 = pneg %p188
      $region54: #{resnet_bottleneck_forward.5} parent=39 // pred_check_branch
        %769 = sbr.rel (%p767) target = $region56
      $region55: #{resnet_bottleneck_forward.5} parent=39 // pred_region
        _
      $region56: #{resnet_bottleneck_forward.5} parent=39 // pred_fallthru
        _
    $region40: #{resnet_bottleneck_forward.5} parent=5 // pred_fallthru
      _
    %p770 = scmp.le.s32.totalorder 2, %s13
    // Predicated region
    $region57: #{resnet_bottleneck_forward.5} parent=5 // pred_check
      %p771 = pneg %p770
    $region58: #{resnet_bottleneck_forward.5} parent=5 // pred_check_branch
      %773 = sbr.rel (%p771) target = $region60
    $region59: #{resnet_bottleneck_forward.5} parent=5 // pred_region
      %s774 = ssub.s32 %s13, 2
      // Predicated region
      $region61: #{resnet_bottleneck_forward.5} parent=59 // pred_check
        %p775 = pneg %p168
      $region62: #{resnet_bottleneck_forward.5} parent=59 // pred_check_branch
        %777 = sbr.rel (%p775) target = $region64
      $region63: #{resnet_bottleneck_forward.5} parent=59 // pred_region
        %s778 = smul.u32 32, %s25
        %p779 = scmp.lt.s32.totalorder %s24, 1
        %s780 = scalar_select %p779, %s24, 1
        %p781 = scmp.lt.s32.totalorder %s778, 31
        %s782 = scalar_select %p781, %s778, 31
        %s783 = smul.addr %s780, 32
        %s784 = sadd.s32 %s782, %s783
        %s785 = smul.addr %s784, 4
        %s786 = scalar_lea.vmem %s5, %s785
      $region64: #{resnet_bottleneck_forward.5} parent=59 // pred_fallthru
        _
      // Predicated region
      $region65: #{resnet_bottleneck_forward.5} parent=59 // pred_check
        %p787 = pneg %p194
      $region66: #{resnet_bottleneck_forward.5} parent=59 // pred_check_branch
        %789 = sbr.rel (%p787) target = $region68
      $region67: #{resnet_bottleneck_forward.5} parent=59 // pred_region
        %p790 = scmp.lt.s32.totalorder %s24, 1
        %s791 = scalar_select %p790, %s24, 1
        %s792 = smul.addr %s791, 2
        %s793 = scalar_lea.vmem %s6, %s792
      $region68: #{resnet_bottleneck_forward.5} parent=59 // pred_fallthru
        _
    $region60: #{resnet_bottleneck_forward.5} parent=5 // pred_fallthru
      _
  $region6: #{resnet_bottleneck_forward.5} parent=0 // loop_footer
    %s17 = sadd.s32 1, %s13
  $region7: #{resnet_bottleneck_forward.5} parent=0 // loop_footer_branch
    %12 = sbr.rel target = $region3
  $region8: #{resnet_bottleneck_forward.5} parent=0 // loop_exit
    _

// kernel: resnet_bottleneck_forward.7
$region0: #{resnet_bottleneck_forward.7}
  #allocation0 [shape = 'u32[]', space=smem, size = 0x4, offset = 0x4, fixed_abs, tag = 'smem constant byte address 0x4 - core index']
  #allocation1 [shape = 'u32[72,128]{1,0:T(1,128)}', space=vmem, size = 0x9000, scoped, tag = 'internal scratch']
  %s0 = inlined_call_operand.vmem [shape: bf16[2,256,4], index: 0, kind: input, shape index: {}]
  %s1 = inlined_call_operand.vmem [shape: f32[2,8,256], index: 1, kind: input, shape index: {}]
  %s2 = inlined_call_operand.vmem [shape: f32[1,4], index: 2, kind: input, shape index: {}]
  %s3 = inlined_call_operand.vmem [shape: f32[1,4], index: 3, kind: input, shape index: {}]
  %s4 = inlined_call_operand.vmem [shape: bf16[8,4], index: 4, kind: input, shape index: {}]
  %s5 = inlined_call_operand.vmem [shape: f32[8,1], index: 5, kind: input, shape index: {}]
  %s6 = inlined_call_operand.vmem [shape: f32[2,8,256], index: 6, kind: output, shape index: {}]
  %s7 = sld [smem:[#allocation0]]
  $region57: #{resnet_bottleneck_forward.7} parent=0
    _
  %s9 = ssub.s32 1, %s7
  %s10 = scalar_select 0, %s9, %s7
  loop: start=0, step=1, limit=4
  $region2: #{resnet_bottleneck_forward.7} parent=0 // loop_pre_header
    _
  $region3: #{resnet_bottleneck_forward.7} parent=0 // loop_header
    %s12 = sphi 0, %s16
    %p13 = scmp.ge.s32.totalorder %s12, 4
    %s19 = sphi 0, %s31
    %s20 = sphi 0, %s27
    %s21 = sphi 0, %s19
    %s22 = sphi 0, %s20
    %s23 = sphi 0, %s21
    %s24 = sphi 0, %s22
    %s36 = sphi 0, %s38
    %s39 = sphi 0, %s36
    %s40 = sphi 0, %s39
    %s56 = sphi 0, %s40
    %s64 = sphi 0, %s66
    %s67 = sphi 0, %s64
    %s68 = sphi 0, %s67
    %s84 = sphi 0, %s68
    %s88 = sphi 0, %s88
    %s90 = sphi 0, %s88
    %s91 = sphi 0, %s90
    %s105 = sphi 0, %s91
    %s109 = sphi 0, %s109
    %s111 = sphi 0, %s109
    %s112 = sphi 0, %s111
    %s126 = sphi 0, %s112
    %s130 = sphi 0, %s130
    %s132 = sphi 0, %s130
    %s133 = sphi 0, %s132
    %s147 = sphi 0, %s133
    %s151 = sphi 0, %s151
    %s153 = sphi 0, %s151
    %s154 = sphi 0, %s153
    %s168 = sphi 0, %s154
    %s176 = sphi 0, %s178
    %s179 = sphi 0, %s176
    %s180 = sphi 0, %s179
    %s196 = sphi 0, %s180
  $region4: #{resnet_bottleneck_forward.7} parent=0 // loop_header_branch
    %15 = sbr.rel (%p13) target = $region8
  $region5: #{resnet_bottleneck_forward.7} parent=0 // loop_body
    %s17 = ssub.s32 %s12, 1
    %s18 = ssub.s32 %s12, 2
    %s25 = sadd.s32 1, %s20
    %p26 = scmp.ge.s32.totalorder %s25, 1
    %s27 = scalar_select %p26, 0, %s25
    %s28 = sadd.s32 1, %s19
    %s29 = scalar_select %p26, %s28, %s19
    %p30 = scmp.ge.s32.totalorder %s29, 2
    %s31 = scalar_select %p30, 0, %s29
    %s32 = ssub.s32 %s19, %s31
    %s33 = ssub.s32 %s20, %s27
    %s34 = sor.u32 %s32, %s33
    %p35 = scmp.eq.s32.totalorder %s34, 0
    %s37 = sadd.s32 %s36, 1
    %s38 = scalar_select %p35, %s36, %s37
    %p41 = pneg %p35
    %p42 = scmp.eq.s32.totalorder %s12, 1
    %p43 = por %p41, %p42
    %p44 = scmp.ne.s32.totalorder %s36, %s39
    %p45 = scmp.eq.s32.totalorder %s12, 0
    %p46 = por %p44, %p45
    %p47 = scmp.ne.s32.totalorder %s36, %s39
    %p48 = scmp.eq.s32.totalorder %s17, 1
    %p49 = por %p47, %p48
    %p50 = scmp.ne.s32.totalorder %s39, %s40
    %p51 = scmp.eq.s32.totalorder %s17, 0
    %p52 = por %p50, %p51
    %p53 = scmp.ne.s32.totalorder %s39, %s40
    %p54 = scmp.eq.s32.totalorder %s18, 1
    %p55 = por %p53, %p54
    %p57 = scmp.ne.s32.totalorder %s40, %s56
    %p58 = scmp.eq.s32.totalorder %s18, 0
    %p59 = por %p57, %p58
    %s60 = ssub.s32 %s19, %s31
    %s61 = ssub.s32 %s20, %s27
    %s62 = sor.u32 %s60, %s61
    %p63 = scmp.eq.s32.totalorder %s62, 0
    %s65 = sadd.s32 %s64, 1
    %s66 = scalar_select %p63, %s64, %s65
    %p69 = pneg %p63
    %p70 = scmp.eq.s32.totalorder %s12, 1
    %p71 = por %p69, %p70
    %p72 = scmp.ne.s32.totalorder %s64, %s67
    %p73 = scmp.eq.s32.totalorder %s12, 0
    %p74 = por %p72, %p73
    %p75 = scmp.ne.s32.totalorder %s64, %s67
    %p76 = scmp.eq.s32.totalorder %s17, 1
    %p77 = por %p75, %p76
    %p78 = scmp.ne.s32.totalorder %s67, %s68
    %p79 = scmp.eq.s32.totalorder %s17, 0
    %p80 = por %p78, %p79
    %p81 = scmp.ne.s32.totalorder %s67, %s68
    %p82 = scmp.eq.s32.totalorder %s18, 1
    %p83 = por %p81, %p82
    %p85 = scmp.ne.s32.totalorder %s68, %s84
    %p86 = scmp.eq.s32.totalorder %s18, 0
    %p87 = por %p85, %p86
    %s89 = sadd.s32 %s88, 1
    %p92 = scmp.eq.s32.totalorder %s12, 1
    %p93 = scmp.ne.s32.totalorder %s88, %s90
    %p94 = scmp.eq.s32.totalorder %s12, 0
    %p95 = por %p93, %p94
    %p96 = scmp.ne.s32.totalorder %s88, %s90
    %p97 = scmp.eq.s32.totalorder %s17, 1
    %p98 = por %p96, %p97
    %p99 = scmp.ne.s32.totalorder %s90, %s91
    %p100 = scmp.eq.s32.totalorder %s17, 0
    %p101 = por %p99, %p100
    %p102 = scmp.ne.s32.totalorder %s90, %s91
    %p103 = scmp.eq.s32.totalorder %s18, 1
    %p104 = por %p102, %p103
    %p106 = scmp.ne.s32.totalorder %s91, %s105
    %p107 = scmp.eq.s32.totalorder %s18, 0
    %p108 = por %p106, %p107
    %s110 = sadd.s32 %s109, 1
    %p113 = scmp.eq.s32.totalorder %s12, 1
    %p114 = scmp.ne.s32.totalorder %s109, %s111
    %p115 = scmp.eq.s32.totalorder %s12, 0
    %p116 = por %p114, %p115
    %p117 = scmp.ne.s32.totalorder %s109, %s111
    %p118 = scmp.eq.s32.totalorder %s17, 1
    %p119 = por %p117, %p118
    %p120 = scmp.ne.s32.totalorder %s111, %s112
    %p121 = scmp.eq.s32.totalorder %s17, 0
    %p122 = por %p120, %p121
    %p123 = scmp.ne.s32.totalorder %s111, %s112
    %p124 = scmp.eq.s32.totalorder %s18, 1
    %p125 = por %p123, %p124
    %p127 = scmp.ne.s32.totalorder %s112, %s126
    %p128 = scmp.eq.s32.totalorder %s18, 0
    %p129 = por %p127, %p128
    %s131 = sadd.s32 %s130, 1
    %p134 = scmp.eq.s32.totalorder %s12, 1
    %p135 = scmp.ne.s32.totalorder %s130, %s132
    %p136 = scmp.eq.s32.totalorder %s12, 0
    %p137 = por %p135, %p136
    %p138 = scmp.ne.s32.totalorder %s130, %s132
    %p139 = scmp.eq.s32.totalorder %s17, 1
    %p140 = por %p138, %p139
    %p141 = scmp.ne.s32.totalorder %s132, %s133
    %p142 = scmp.eq.s32.totalorder %s17, 0
    %p143 = por %p141, %p142
    %p144 = scmp.ne.s32.totalorder %s132, %s133
    %p145 = scmp.eq.s32.totalorder %s18, 1
    %p146 = por %p144, %p145
    %p148 = scmp.ne.s32.totalorder %s133, %s147
    %p149 = scmp.eq.s32.totalorder %s18, 0
    %p150 = por %p148, %p149
    %s152 = sadd.s32 %s151, 1
    %p155 = scmp.eq.s32.totalorder %s12, 1
    %p156 = scmp.ne.s32.totalorder %s151, %s153
    %p157 = scmp.eq.s32.totalorder %s12, 0
    %p158 = por %p156, %p157
    %p159 = scmp.ne.s32.totalorder %s151, %s153
    %p160 = scmp.eq.s32.totalorder %s17, 1
    %p161 = por %p159, %p160
    %p162 = scmp.ne.s32.totalorder %s153, %s154
    %p163 = scmp.eq.s32.totalorder %s17, 0
    %p164 = por %p162, %p163
    %p165 = scmp.ne.s32.totalorder %s153, %s154
    %p166 = scmp.eq.s32.totalorder %s18, 1
    %p167 = por %p165, %p166
    %p169 = scmp.ne.s32.totalorder %s154, %s168
    %p170 = scmp.eq.s32.totalorder %s18, 0
    %p171 = por %p169, %p170
    %s172 = ssub.s32 %s19, %s31
    %s173 = ssub.s32 %s20, %s27
    %s174 = sor.u32 %s172, %s173
    %p175 = scmp.eq.s32.totalorder %s174, 0
    %s177 = sadd.s32 %s176, 1
    %s178 = scalar_select %p175, %s176, %s177
    %p181 = pneg %p175
    %p182 = scmp.eq.s32.totalorder %s12, 1
    %p183 = por %p181, %p182
    %p184 = scmp.ne.s32.totalorder %s176, %s179
    %p185 = scmp.eq.s32.totalorder %s12, 0
    %p186 = por %p184, %p185
    %p187 = scmp.ne.s32.totalorder %s176, %s179
    %p188 = scmp.eq.s32.totalorder %s17, 1
    %p189 = por %p187, %p188
    %p190 = scmp.ne.s32.totalorder %s179, %s180
    %p191 = scmp.eq.s32.totalorder %s17, 0
    %p192 = por %p190, %p191
    %p193 = scmp.ne.s32.totalorder %s179, %s180
    %p194 = scmp.eq.s32.totalorder %s18, 1
    %p195 = por %p193, %p194
    %p197 = scmp.ne.s32.totalorder %s180, %s196
    %p198 = scmp.eq.s32.totalorder %s18, 0
    %p199 = por %p197, %p198
    %p200 = scmp.le.s32.totalorder 1, %s12
    %p201 = scmp.lt.s32.totalorder %s12, 3
    %p202 = pnand %p200, %p201
    %p203 = pneg %p202
    // Predicated region
    $region9: #{resnet_bottleneck_forward.7} parent=5 // pred_check
      _
    $region10: #{resnet_bottleneck_forward.7} parent=5 // pred_check_branch
      %205 = sbr.rel (%p202) target = $region12
    $region11: #{resnet_bottleneck_forward.7} parent=5 // pred_region
      %s206 = ssub.s32 %s12, 1
      // Predicated region
      $region13: #{resnet_bottleneck_forward.7} parent=11 // pred_check
        %p207 = pneg %p101
      $region14: #{resnet_bottleneck_forward.7} parent=11 // pred_check_branch
        %209 = sbr.rel (%p207) target = $region16
      $region15: #{resnet_bottleneck_forward.7} parent=11 // pred_region
        _
      $region16: #{resnet_bottleneck_forward.7} parent=11 // pred_fallthru
        _
      // Predicated region
      $region17: #{resnet_bottleneck_forward.7} parent=11 // pred_check
        %p210 = pneg %p122
      $region18: #{resnet_bottleneck_forward.7} parent=11 // pred_check_branch
        %212 = sbr.rel (%p210) target = $region20
      $region19: #{resnet_bottleneck_forward.7} parent=11 // pred_region
        _
      $region20: #{resnet_bottleneck_forward.7} parent=11 // pred_fallthru
        _
      // Predicated region
      $region21: #{resnet_bottleneck_forward.7} parent=11 // pred_check
        %p213 = pneg %p143
      $region22: #{resnet_bottleneck_forward.7} parent=11 // pred_check_branch
        %215 = sbr.rel (%p213) target = $region24
      $region23: #{resnet_bottleneck_forward.7} parent=11 // pred_region
        _
      $region24: #{resnet_bottleneck_forward.7} parent=11 // pred_fallthru
        _
      // Predicated region
      $region25: #{resnet_bottleneck_forward.7} parent=11 // pred_check
        %p216 = pneg %p164
      $region26: #{resnet_bottleneck_forward.7} parent=11 // pred_check_branch
        %218 = sbr.rel (%p216) target = $region28
      $region27: #{resnet_bottleneck_forward.7} parent=11 // pred_region
        _
      $region28: #{resnet_bottleneck_forward.7} parent=11 // pred_fallthru
        _
    $region12: #{resnet_bottleneck_forward.7} parent=5 // pred_fallthru
      _
    %p219 = scmp.lt.s32.totalorder %s12, 2
    // Predicated region
    $region29: #{resnet_bottleneck_forward.7} parent=5 // pred_check
      %p220 = pneg %p219
    $region30: #{resnet_bottleneck_forward.7} parent=5 // pred_check_branch
      %222 = sbr.rel (%p220) target = $region32
    $region31: #{resnet_bottleneck_forward.7} parent=5 // pred_region
      // Predicated region
      $region33: #{resnet_bottleneck_forward.7} parent=31 // pred_check
        %p223 = pneg %p46
      $region34: #{resnet_bottleneck_forward.7} parent=31 // pred_check_branch
        %225 = sbr.rel (%p223) target = $region36
      $region35: #{resnet_bottleneck_forward.7} parent=31 // pred_region
        %s226 = smul.u32 32, %s20
        %p227 = scmp.lt.s32.totalorder %s19, 1
        %s228 = scalar_select %p227, %s19, 1
        %p229 = scmp.lt.s32.totalorder %s226, 31
        %s230 = scalar_select %p229, %s226, 31
        %s231 = smul.addr %s228, 32
        %s232 = sadd.s32 %s230, %s231
        %s233 = smul.addr %s232, 4
        %s234 = scalar_lea.vmem %s0, %s233
        %s235 = smul.u32 32, %s20
      $region36: #{resnet_bottleneck_forward.7} parent=31 // pred_fallthru
        _
      // Predicated region
      $region37: #{resnet_bottleneck_forward.7} parent=31 // pred_check
        %p236 = pneg %p74
      $region38: #{resnet_bottleneck_forward.7} parent=31 // pred_check_branch
        %238 = sbr.rel (%p236) target = $region40
      $region39: #{resnet_bottleneck_forward.7} parent=31 // pred_region
        %s239 = smul.u32 2, %s20
        %p240 = scmp.lt.s32.totalorder %s19, 1
        %s241 = scalar_select %p240, %s19, 1
        %p242 = scmp.lt.s32.totalorder %s239, 1
        %s243 = scalar_select %p242, %s239, 1
        %s244 = smul.addr %s241, 2
        %s245 = sadd.s32 %s243, %s244
        %s246 = smul.addr %s245, 8
        %s247 = scalar_lea.vmem %s1, %s246
        %s248 = smul.u32 2, %s20
      $region40: #{resnet_bottleneck_forward.7} parent=31 // pred_fallthru
        _
    $region32: #{resnet_bottleneck_forward.7} parent=5 // pred_fallthru
      _
    %p249 = scmp.le.s32.totalorder 1, %s12
    %p250 = scmp.lt.s32.totalorder %s12, 3
    %p251 = pnand %p249, %p250
    %p252 = pneg %p251
    // Predicated region
    $region41: #{resnet_bottleneck_forward.7} parent=5 // pred_check
      _
    $region42: #{resnet_bottleneck_forward.7} parent=5 // pred_check_branch
      %254 = sbr.rel (%p251) target = $region44
    $region43: #{resnet_bottleneck_forward.7} parent=5 // pred_region
      %s255 = ssub.s32 %s12, 1
      %s256 = smul.u32 32, %s22
      %p257 = scmp.lt.s32.totalorder %s21, 1
      %s258 = scalar_select %p257, %s21, 1
      %p259 = scmp.lt.s32.totalorder %s256, 31
      %s260 = scalar_select %p259, %s256, 31
      %s261 = smul.addr %s258, 32
      %s262 = sadd.s32 %s260, %s261
      %s263 = smul.addr %s262, 4
      %s264 = scalar_lea.vmem %s0, %s263
      %p265 = pneg %p52
      %p266 = pneg %p49
      %s267 = smul.u32 2, %s22
      %p268 = scmp.lt.s32.totalorder %s21, 1
      %s269 = scalar_select %p268, %s21, 1
      %p270 = scmp.lt.s32.totalorder %s267, 1
      %s271 = scalar_select %p270, %s267, 1
      %s272 = smul.addr %s269, 2
      %s273 = sadd.s32 %s271, %s272
      %s274 = smul.addr %s273, 8
      %s275 = scalar_lea.vmem %s1, %s274
      %p276 = pneg %p80
      %p277 = pneg %p77
      %p278 = pneg %p101
      %p279 = pneg %p98
      %p280 = pneg %p122
      %p281 = pneg %p119
      %p282 = pneg %p143
      %p283 = pneg %p140
      %p284 = pneg %p164
      %p285 = pneg %p161
      %p286 = pneg %p192
      %p287 = pneg %p189
      %s288 = smul.u32 2, %s22
      %p289 = scmp.lt.s32.totalorder %s21, 1
      %s290 = scalar_select %p289, %s21, 1
      %p291 = scmp.lt.s32.totalorder %s288, 1
      %s292 = scalar_select %p291, %s288, 1
      %s293 = smul.addr %s290, 2
      %s294 = sadd.s32 %s292, %s293
      %s295 = smul.addr %s294, 8
      %s296 = scalar_lea.vmem %s6, %s295
      %s297 = smul.u32 32, %s22
      %p298 = scmp.lt.s32.totalorder %s21, 1
      %s299 = scalar_select %p298, %s21, 1
      %p300 = scmp.lt.s32.totalorder %s297, 31
      %s301 = scalar_select %p300, %s297, 31
      %s302 = smul.addr %s299, 32
      %s303 = sadd.s32 %s301, %s302
      %s304 = smul.addr %s303, 4
      %s305 = scalar_lea.vmem %s0, %s304
      %s306 = smul.u32 32, %s22
      %s307 = smul.u32 2, %s22
      %p308 = scmp.lt.s32.totalorder %s21, 1
      %s309 = scalar_select %p308, %s21, 1
      %p310 = scmp.lt.s32.totalorder %s307, 1
      %s311 = scalar_select %p310, %s307, 1
      %s312 = smul.addr %s309, 2
      %s313 = sadd.s32 %s311, %s312
      %s314 = smul.addr %s313, 8
      %s315 = scalar_lea.vmem %s1, %s314
      %s316 = smul.u32 2, %s22
      %s317 = smul.u32 2, %s22
      %p318 = scmp.lt.s32.totalorder %s21, 1
      %s319 = scalar_select %p318, %s21, 1
      %p320 = scmp.lt.s32.totalorder %s317, 1
      %s321 = scalar_select %p320, %s317, 1
      %s322 = smul.addr %s319, 2
      %s323 = sadd.s32 %s321, %s322
      %s324 = smul.addr %s323, 8
      %s325 = scalar_lea.vmem %s6, %s324
      %s326 = smul.u32 2, %s22
      %v327 = vld [vmem:[%s305] sm:$0xf]
      %v328 = vld [vmem:[%s305 + $0x4] sm:$0xf]
      %v329 = vld [vmem:[%s305 + $0x8] sm:$0xf]
      %v330 = vld [vmem:[%s305 + $0xc] sm:$0xf]
      %v331 = vld [vmem:[%s305 + $0x10] sm:$0xf]
      %v332 = vld [vmem:[%s305 + $0x14] sm:$0xf]
      %v333 = vld [vmem:[%s305 + $0x18] sm:$0xf]
      %v334 = vld [vmem:[%s305 + $0x1c] sm:$0xf]
      %v335 = vld [vmem:[%s305 + $0x20] sm:$0xf]
      %v336 = vld [vmem:[%s305 + $0x24] sm:$0xf]
      %v337 = vld [vmem:[%s305 + $0x28] sm:$0xf]
      %v338 = vld [vmem:[%s305 + $0x2c] sm:$0xf]
      %v339 = vld [vmem:[%s305 + $0x30] sm:$0xf]
      %v340 = vld [vmem:[%s305 + $0x34] sm:$0xf]
      %v341 = vld [vmem:[%s305 + $0x38] sm:$0xf]
      %v342 = vld [vmem:[%s305 + $0x3c] sm:$0xf]
      %v343 = vld [vmem:[%s305 + $0x40] sm:$0xf]
      %v344 = vld [vmem:[%s305 + $0x44] sm:$0xf]
      %v345 = vld [vmem:[%s305 + $0x48] sm:$0xf]
      %v346 = vld [vmem:[%s305 + $0x4c] sm:$0xf]
      %v347 = vld [vmem:[%s305 + $0x50] sm:$0xf]
      %v348 = vld [vmem:[%s305 + $0x54] sm:$0xf]
      %v349 = vld [vmem:[%s305 + $0x58] sm:$0xf]
      %v350 = vld [vmem:[%s305 + $0x5c] sm:$0xf]
      %v351 = vld [vmem:[%s305 + $0x60] sm:$0xf]
      %v352 = vld [vmem:[%s305 + $0x64] sm:$0xf]
      %v353 = vld [vmem:[%s305 + $0x68] sm:$0xf]
      %v354 = vld [vmem:[%s305 + $0x6c] sm:$0xf]
      %v355 = vld [vmem:[%s305 + $0x70] sm:$0xf]
      %v356 = vld [vmem:[%s305 + $0x74] sm:$0xf]
      %v357 = vld [vmem:[%s305 + $0x78] sm:$0xf]
      %v358 = vld [vmem:[%s305 + $0x7c] sm:$0xf]
      %v359 = vunpack.c.l.bf16 %v327
      %v360 = vunpack.c.l.bf16 %v328
      %v361 = vunpack.c.l.bf16 %v329
      %v362 = vunpack.c.l.bf16 %v330
      %v363 = vunpack.c.l.bf16 %v331
      %v364 = vunpack.c.l.bf16 %v332
      %v365 = vunpack.c.l.bf16 %v333
      %v366 = vunpack.c.l.bf16 %v334
      %v367 = vunpack.c.l.bf16 %v335
      %v368 = vunpack.c.l.bf16 %v336
      %v369 = vunpack.c.l.bf16 %v337
      %v370 = vunpack.c.l.bf16 %v338
      %v371 = vunpack.c.l.bf16 %v339
      %v372 = vunpack.c.l.bf16 %v340
      %v373 = vunpack.c.l.bf16 %v341
      %v374 = vunpack.c.l.bf16 %v342
      %v375 = vunpack.c.l.bf16 %v343
      %v376 = vunpack.c.l.bf16 %v344
      %v377 = vunpack.c.l.bf16 %v345
      %v378 = vunpack.c.l.bf16 %v346
      %v379 = vunpack.c.l.bf16 %v347
      %v380 = vunpack.c.l.bf16 %v348
      %v381 = vunpack.c.l.bf16 %v349
      %v382 = vunpack.c.l.bf16 %v350
      %v383 = vunpack.c.l.bf16 %v351
      %v384 = vunpack.c.l.bf16 %v352
      %v385 = vunpack.c.l.bf16 %v353
      %v386 = vunpack.c.l.bf16 %v354
      %v387 = vunpack.c.l.bf16 %v355
      %v388 = vunpack.c.l.bf16 %v356
      %v389 = vunpack.c.l.bf16 %v357
      %v390 = vunpack.c.l.bf16 %v358
      %v391 = vld [vmem:[%s2] sm:$0x1]
      %v393 = vperm.slane %v391, 0
      %v395 = vmul.f32 %v359, %v393
      %v396 = vmul.f32 %v360, %v393
      %v397 = vmul.f32 %v361, %v393
      %v398 = vmul.f32 %v362, %v393
      %v399 = vmul.f32 %v363, %v393
      %v400 = vmul.f32 %v364, %v393
      %v401 = vmul.f32 %v365, %v393
      %v402 = vmul.f32 %v366, %v393
      %v403 = vmul.f32 %v367, %v393
      %v404 = vmul.f32 %v368, %v393
      %v405 = vmul.f32 %v369, %v393
      %v406 = vmul.f32 %v370, %v393
      %v407 = vmul.f32 %v371, %v393
      %v408 = vmul.f32 %v372, %v393
      %v409 = vmul.f32 %v373, %v393
      %v410 = vmul.f32 %v374, %v393
      %v411 = vmul.f32 %v375, %v393
      %v412 = vmul.f32 %v376, %v393
      %v413 = vmul.f32 %v377, %v393
      %v414 = vmul.f32 %v378, %v393
      %v415 = vmul.f32 %v379, %v393
      %v416 = vmul.f32 %v380, %v393
      %v417 = vmul.f32 %v381, %v393
      %v418 = vmul.f32 %v382, %v393
      %v419 = vmul.f32 %v383, %v393
      %v420 = vmul.f32 %v384, %v393
      %v421 = vmul.f32 %v385, %v393
      %v422 = vmul.f32 %v386, %v393
      %v423 = vmul.f32 %v387, %v393
      %v424 = vmul.f32 %v388, %v393
      %v425 = vmul.f32 %v389, %v393
      %v426 = vmul.f32 %v390, %v393
      %v427 = vld [vmem:[%s3] sm:$0x1]
      %v429 = vperm.slane %v427, 0
      %v431 = vadd.f32 %v395, %v429
      %v432 = vadd.f32 %v396, %v429
      %v433 = vadd.f32 %v397, %v429
      %v434 = vadd.f32 %v398, %v429
      %v435 = vadd.f32 %v399, %v429
      %v436 = vadd.f32 %v400, %v429
      %v437 = vadd.f32 %v401, %v429
      %v438 = vadd.f32 %v402, %v429
      %v439 = vadd.f32 %v403, %v429
      %v440 = vadd.f32 %v404, %v429
      %v441 = vadd.f32 %v405, %v429
      %v442 = vadd.f32 %v406, %v429
      %v443 = vadd.f32 %v407, %v429
      %v444 = vadd.f32 %v408, %v429
      %v445 = vadd.f32 %v409, %v429
      %v446 = vadd.f32 %v410, %v429
      %v447 = vadd.f32 %v411, %v429
      %v448 = vadd.f32 %v412, %v429
      %v449 = vadd.f32 %v413, %v429
      %v450 = vadd.f32 %v414, %v429
      %v451 = vadd.f32 %v415, %v429
      %v452 = vadd.f32 %v416, %v429
      %v453 = vadd.f32 %v417, %v429
      %v454 = vadd.f32 %v418, %v429
      %v455 = vadd.f32 %v419, %v429
      %v456 = vadd.f32 %v420, %v429
      %v457 = vadd.f32 %v421, %v429
      %v458 = vadd.f32 %v422, %v429
      %v459 = vadd.f32 %v423, %v429
      %v460 = vadd.f32 %v424, %v429
      %v461 = vadd.f32 %v425, %v429
      %v462 = vadd.f32 %v426, %v429
      %v463 = vmax.f32 %v431, 0.0
      %v464 = vmax.f32 %v432, 0.0
      %v465 = vmax.f32 %v433, 0.0
      %v466 = vmax.f32 %v434, 0.0
      %v467 = vmax.f32 %v435, 0.0
      %v468 = vmax.f32 %v436, 0.0
      %v469 = vmax.f32 %v437, 0.0
      %v470 = vmax.f32 %v438, 0.0
      %v471 = vmax.f32 %v439, 0.0
      %v472 = vmax.f32 %v440, 0.0
      %v473 = vmax.f32 %v441, 0.0
      %v474 = vmax.f32 %v442, 0.0
      %v475 = vmax.f32 %v443, 0.0
      %v476 = vmax.f32 %v444, 0.0
      %v477 = vmax.f32 %v445, 0.0
      %v478 = vmax.f32 %v446, 0.0
      %v479 = vmax.f32 %v447, 0.0
      %v480 = vmax.f32 %v448, 0.0
      %v481 = vmax.f32 %v449, 0.0
      %v482 = vmax.f32 %v450, 0.0
      %v483 = vmax.f32 %v451, 0.0
      %v484 = vmax.f32 %v452, 0.0
      %v485 = vmax.f32 %v453, 0.0
      %v486 = vmax.f32 %v454, 0.0
      %v487 = vmax.f32 %v455, 0.0
      %v488 = vmax.f32 %v456, 0.0
      %v489 = vmax.f32 %v457, 0.0
      %v490 = vmax.f32 %v458, 0.0
      %v491 = vmax.f32 %v459, 0.0
      %v492 = vmax.f32 %v460, 0.0
      %v493 = vmax.f32 %v461, 0.0
      %v494 = vmax.f32 %v462, 0.0
      %v495 = vld [vmem:[%s4] sm:$0xf]
      %v496 = vpack.c.bf16 %v464, %v463
      %v497 = vpack.c.bf16 %v466, %v465
      %v498 = vpack.c.bf16 %v468, %v467
      %v499 = vpack.c.bf16 %v470, %v469
      %v500 = vpack.c.bf16 %v472, %v471
      %v501 = vpack.c.bf16 %v474, %v473
      %v502 = vpack.c.bf16 %v476, %v475
      %v503 = vpack.c.bf16 %v478, %v477
      %v504 = vpack.c.bf16 %v480, %v479
      %v505 = vpack.c.bf16 %v482, %v481
      %v506 = vpack.c.bf16 %v484, %v483
      %v507 = vpack.c.bf16 %v486, %v485
      %v508 = vpack.c.bf16 %v488, %v487
      %v509 = vpack.c.bf16 %v490, %v489
      %v510 = vpack.c.bf16 %v492, %v491
      %v511 = vpack.c.bf16 %v494, %v493
      %v512 = vld [vmem:[%s5] sm:$0xff]
      %514 = vset.pattern.permute.xlu0 0
      %515 = vperm.xlu0 %514, %v512
      %v516 = vpop.permute.xlu0 %515
      %vm518 = vcmask 31744
      %v520 = vsel %vm518, %v495, 0
      %v523 = vsel %vm518, %v496, 0
      %v526 = vsel %vm518, %v497, 0
      %v529 = vsel %vm518, %v498, 0
      %v532 = vsel %vm518, %v499, 0
      %v535 = vsel %vm518, %v500, 0
      %v538 = vsel %vm518, %v501, 0
      %v541 = vsel %vm518, %v502, 0
      %v544 = vsel %vm518, %v503, 0
      %v547 = vsel %vm518, %v504, 0
      %v550 = vsel %vm518, %v505, 0
      %v553 = vsel %vm518, %v506, 0
      %v556 = vsel %vm518, %v507, 0
      %v559 = vsel %vm518, %v508, 0
      %v562 = vsel %vm518, %v509, 0
      %v565 = vsel %vm518, %v510, 0
      %v568 = vsel %vm518, %v511, 0
      %570 = vmatpush.bf16.xpose.msra.mxu0 %v544
      %571 = vmatpush.bf16.xpose.msra.mxu0 %v541
      %572 = vmatpush.bf16.xpose.msra.mxu0 %v538
      %573 = vmatpush.bf16.xpose.msra.mxu0 %v535
      %574 = vmatpush.bf16.xpose.msra.mxu0 %v532
      %575 = vmatpush.bf16.xpose.msra.mxu0 %v529
      %576 = vmatpush.bf16.xpose.msra.mxu0 %v526
      %577 = vmatpush.bf16.xpose.msra.mxu0 %v523
      %578 = vmatmul.bf16.gmra.mxu0 %v520
      %v579 = vpop.f32.mrf.mxu0
      %v580 = vadd.f32 %v516, %v579
      %v581 = vpop.f32.mrf.mxu0
      %582 = vdwg.mxu0
      %583 = vmatpush.bf16.xpose.msra.mxu0 %v568
      %584 = vmatpush.bf16.xpose.msra.mxu0 %v565
      %585 = vmatpush.bf16.xpose.msra.mxu0 %v562
      %586 = vmatpush.bf16.xpose.msra.mxu0 %v559
      %587 = vmatpush.bf16.xpose.msra.mxu0 %v556
      %588 = vmatpush.bf16.xpose.msra.mxu0 %v553
      %589 = vmatpush.bf16.xpose.msra.mxu0 %v550
      %590 = vmatpush.bf16.xpose.msra.mxu0 %v547
      %591 = vmatmul.bf16.gmra.mxu0 %v520
      %v592 = vpop.f32.mrf.mxu0
      %v593 = vadd.f32 %v516, %v592
      %v594 = vpop.f32.mrf.mxu0
      %595 = vdwg.mxu0
      %v596 = vld [vmem:[%s315] sm:$0xff]
      %v597 = vld [vmem:[%s315 + $0x8] sm:$0xff]
      %v598 = vadd.f32 %v580, %v596
      %v599 = vadd.f32 %v593, %v597
      %600 = vst [vmem:[%s325] sm:$0xff] %v598
      %601 = vst [vmem:[%s325 + $0x8] sm:$0xff] %v599
      %s602 = smul.u32 2, %s22
      %p603 = scmp.lt.s32.totalorder %s21, 1
      %s604 = scalar_select %p603, %s21, 1
      %p605 = scmp.lt.s32.totalorder %s602, 1
      %s606 = scalar_select %p605, %s602, 1
      %s607 = smul.addr %s604, 2
      %s608 = sadd.s32 %s606, %s607
      %s609 = smul.addr %s608, 8
      %s610 = scalar_lea.vmem %s6, %s609
      // Predicated region
      $region45: #{resnet_bottleneck_forward.7} parent=43 // pred_check
        %p611 = pneg %p189
      $region46: #{resnet_bottleneck_forward.7} parent=43 // pred_check_branch
        %613 = sbr.rel (%p611) target = $region48
      $region47: #{resnet_bottleneck_forward.7} parent=43 // pred_region
        %s614 = smul.u32 2, %s22
      $region48: #{resnet_bottleneck_forward.7} parent=43 // pred_fallthru
        _
    $region44: #{resnet_bottleneck_forward.7} parent=5 // pred_fallthru
      _
    %p615 = scmp.le.s32.totalorder 2, %s12
    // Predicated region
    $region49: #{resnet_bottleneck_forward.7} parent=5 // pred_check
      %p616 = pneg %p615
    $region50: #{resnet_bottleneck_forward.7} parent=5 // pred_check_branch
      %618 = sbr.rel (%p616) target = $region52
    $region51: #{resnet_bottleneck_forward.7} parent=5 // pred_region
      %s619 = ssub.s32 %s12, 2
      // Predicated region
      $region53: #{resnet_bottleneck_forward.7} parent=51 // pred_check
        %p620 = pneg %p195
      $region54: #{resnet_bottleneck_forward.7} parent=51 // pred_check_branch
        %622 = sbr.rel (%p620) target = $region56
      $region55: #{resnet_bottleneck_forward.7} parent=51 // pred_region
        %s623 = smul.u32 2, %s24
        %p624 = scmp.lt.s32.totalorder %s23, 1
        %s625 = scalar_select %p624, %s23, 1
        %p626 = scmp.lt.s32.totalorder %s623, 1
        %s627 = scalar_select %p626, %s623, 1
        %s628 = smul.addr %s625, 2
        %s629 = sadd.s32 %s627, %s628
        %s630 = smul.addr %s629, 8
        %s631 = scalar_lea.vmem %s6, %s630
      $region56: #{resnet_bottleneck_forward.7} parent=51 // pred_fallthru
        _
    $region52: #{resnet_bottleneck_forward.7} parent=5 // pred_fallthru
      _
  $region6: #{resnet_bottleneck_forward.7} parent=0 // loop_footer
    %s16 = sadd.s32 1, %s12
  $region7: #{resnet_bottleneck_forward.7} parent=0 // loop_footer_branch
    %11 = sbr.rel target = $region3
  $region8: #{resnet_bottleneck_forward.7} parent=0 // loop_exit
    _

// kernel: resnet_bottleneck_forward.6
$region0: #{resnet_bottleneck_forward.6}
  #allocation0 [shape = 'u32[]', space=smem, size = 0x4, offset = 0x4, fixed_abs, tag = 'smem constant byte address 0x4 - core index']
  #allocation1 [shape = 'u32[72,128]{1,0:T(1,128)}', space=vmem, size = 0x9000, scoped, tag = 'internal scratch']
  %s0 = inlined_call_operand.vmem [shape: bf16[2,256,4], index: 0, kind: input, shape index: {}]
  %s1 = inlined_call_operand.vmem [shape: f32[1,4], index: 1, kind: input, shape index: {}]
  %s2 = inlined_call_operand.vmem [shape: f32[1,4], index: 2, kind: input, shape index: {}]
  %s3 = inlined_call_operand.vmem [shape: bf16[36,4], index: 3, kind: input, shape index: {}]
  %s4 = inlined_call_operand.vmem [shape: f32[1,4], index: 4, kind: input, shape index: {}]
  %s5 = inlined_call_operand.vmem [shape: bf16[2,256,4], index: 5, kind: output, shape index: {0}]
  %s6 = inlined_call_operand.vmem [shape: f32[2,2,4], index: 6, kind: output, shape index: {1}]
  %7 = xla_tuple %s5, %s6
  %s8 = sld [smem:[#allocation0]]
  $region61: #{resnet_bottleneck_forward.6} parent=0
    _
  %s10 = ssub.s32 1, %s8
  %s11 = scalar_select 0, %s10, %s8
  loop: start=0, step=1, limit=4
  $region2: #{resnet_bottleneck_forward.6} parent=0 // loop_pre_header
    _
  $region3: #{resnet_bottleneck_forward.6} parent=0 // loop_header
    %s13 = sphi 0, %s17
    %p14 = scmp.ge.s32.totalorder %s13, 4
    %s23 = sphi 0, %s25
    %s26 = sphi 0, %s23
    %s27 = sphi 0, %s26
    %s43 = sphi 0, %s27
    %s47 = sphi 0, %s47
    %s49 = sphi 0, %s47
    %s50 = sphi 0, %s49
    %s64 = sphi 0, %s50
    %s68 = sphi 0, %s68
    %s70 = sphi 0, %s68
    %s71 = sphi 0, %s70
    %s85 = sphi 0, %s71
    %s89 = sphi 0, %s89
    %s91 = sphi 0, %s89
    %s92 = sphi 0, %s91
    %s106 = sphi 0, %s92
    %s110 = sphi 0, %s110
    %s112 = sphi 0, %s110
    %s113 = sphi 0, %s112
    %s127 = sphi 0, %s113
    %s133 = sphi 0, %s135
    %s136 = sphi 0, %s133
    %s137 = sphi 0, %s136
    %s153 = sphi 0, %s137
    %s159 = sphi 0, %s161
    %s162 = sphi 0, %s159
    %s163 = sphi 0, %s162
    %s179 = sphi 0, %s163
  $region4: #{resnet_bottleneck_forward.6} parent=0 // loop_header_branch
    %16 = sbr.rel (%p14) target = $region8
  $region5: #{resnet_bottleneck_forward.6} parent=0 // loop_body
    %s18 = ssub.s32 %s13, 1
    %s19 = ssub.s32 %s13, 2
    %s20 = sadd.s32 %s13, 1
    %s21 = ssub.s32 %s13, %s20
    %p22 = scmp.eq.s32.totalorder %s21, 0
    %s24 = sadd.s32 %s23, 1
    %s25 = scalar_select %p22, %s23, %s24
    %p28 = pneg %p22
    %p29 = scmp.eq.s32.totalorder %s13, 1
    %p30 = por %p28, %p29
    %p31 = scmp.ne.s32.totalorder %s23, %s26
    %p32 = scmp.eq.s32.totalorder %s13, 0
    %p33 = por %p31, %p32
    %p34 = scmp.ne.s32.totalorder %s23, %s26
    %p35 = scmp.eq.s32.totalorder %s18, 1
    %p36 = por %p34, %p35
    %p37 = scmp.ne.s32.totalorder %s26, %s27
    %p38 = scmp.eq.s32.totalorder %s18, 0
    %p39 = por %p37, %p38
    %p40 = scmp.ne.s32.totalorder %s26, %s27
    %p41 = scmp.eq.s32.totalorder %s19, 1
    %p42 = por %p40, %p41
    %p44 = scmp.ne.s32.totalorder %s27, %s43
    %p45 = scmp.eq.s32.totalorder %s19, 0
    %p46 = por %p44, %p45
    %s48 = sadd.s32 %s47, 1
    %p51 = scmp.eq.s32.totalorder %s13, 1
    %p52 = scmp.ne.s32.totalorder %s47, %s49
    %p53 = scmp.eq.s32.totalorder %s13, 0
    %p54 = por %p52, %p53
    %p55 = scmp.ne.s32.totalorder %s47, %s49
    %p56 = scmp.eq.s32.totalorder %s18, 1
    %p57 = por %p55, %p56
    %p58 = scmp.ne.s32.totalorder %s49, %s50
    %p59 = scmp.eq.s32.totalorder %s18, 0
    %p60 = por %p58, %p59
    %p61 = scmp.ne.s32.totalorder %s49, %s50
    %p62 = scmp.eq.s32.totalorder %s19, 1
    %p63 = por %p61, %p62
    %p65 = scmp.ne.s32.totalorder %s50, %s64
    %p66 = scmp.eq.s32.totalorder %s19, 0
    %p67 = por %p65, %p66
    %s69 = sadd.s32 %s68, 1
    %p72 = scmp.eq.s32.totalorder %s13, 1
    %p73 = scmp.ne.s32.totalorder %s68, %s70
    %p74 = scmp.eq.s32.totalorder %s13, 0
    %p75 = por %p73, %p74
    %p76 = scmp.ne.s32.totalorder %s68, %s70
    %p77 = scmp.eq.s32.totalorder %s18, 1
    %p78 = por %p76, %p77
    %p79 = scmp.ne.s32.totalorder %s70, %s71
    %p80 = scmp.eq.s32.totalorder %s18, 0
    %p81 = por %p79, %p80
    %p82 = scmp.ne.s32.totalorder %s70, %s71
    %p83 = scmp.eq.s32.totalorder %s19, 1
    %p84 = por %p82, %p83
    %p86 = scmp.ne.s32.totalorder %s71, %s85
    %p87 = scmp.eq.s32.totalorder %s19, 0
    %p88 = por %p86, %p87
    %s90 = sadd.s32 %s89, 1
    %p93 = scmp.eq.s32.totalorder %s13, 1
    %p94 = scmp.ne.s32.totalorder %s89, %s91
    %p95 = scmp.eq.s32.totalorder %s13, 0
    %p96 = por %p94, %p95
    %p97 = scmp.ne.s32.totalorder %s89, %s91
    %p98 = scmp.eq.s32.totalorder %s18, 1
    %p99 = por %p97, %p98
    %p100 = scmp.ne.s32.totalorder %s91, %s92
    %p101 = scmp.eq.s32.totalorder %s18, 0
    %p102 = por %p100, %p101
    %p103 = scmp.ne.s32.totalorder %s91, %s92
    %p104 = scmp.eq.s32.totalorder %s19, 1
    %p105 = por %p103, %p104
    %p107 = scmp.ne.s32.totalorder %s92, %s106
    %p108 = scmp.eq.s32.totalorder %s19, 0
    %p109 = por %p107, %p108
    %s111 = sadd.s32 %s110, 1
    %p114 = scmp.eq.s32.totalorder %s13, 1
    %p115 = scmp.ne.s32.totalorder %s110, %s112
    %p116 = scmp.eq.s32.totalorder %s13, 0
    %p117 = por %p115, %p116
    %p118 = scmp.ne.s32.totalorder %s110, %s112
    %p119 = scmp.eq.s32.totalorder %s18, 1
    %p120 = por %p118, %p119
    %p121 = scmp.ne.s32.totalorder %s112, %s113
    %p122 = scmp.eq.s32.totalorder %s18, 0
    %p123 = por %p121, %p122
    %p124 = scmp.ne.s32.totalorder %s112, %s113
    %p125 = scmp.eq.s32.totalorder %s19, 1
    %p126 = por %p124, %p125
    %p128 = scmp.ne.s32.totalorder %s113, %s127
    %p129 = scmp.eq.s32.totalorder %s19, 0
    %p130 = por %p128, %p129
    %s131 = ssub.s32 %s13, %s20
    %p132 = scmp.eq.s32.totalorder %s131, 0
    %s134 = sadd.s32 %s133, 1
    %s135 = scalar_select %p132, %s133, %s134
    %p138 = pneg %p132
    %p139 = scmp.eq.s32.totalorder %s13, 1
    %p140 = por %p138, %p139
    %p141 = scmp.ne.s32.totalorder %s133, %s136
    %p142 = scmp.eq.s32.totalorder %s13, 0
    %p143 = por %p141, %p142
    %p144 = scmp.ne.s32.totalorder %s133, %s136
    %p145 = scmp.eq.s32.totalorder %s18, 1
    %p146 = por %p144, %p145
    %p147 = scmp.ne.s32.totalorder %s136, %s137
    %p148 = scmp.eq.s32.totalorder %s18, 0
    %p149 = por %p147, %p148
    %p150 = scmp.ne.s32.totalorder %s136, %s137
    %p151 = scmp.eq.s32.totalorder %s19, 1
    %p152 = por %p150, %p151
    %p154 = scmp.ne.s32.totalorder %s137, %s153
    %p155 = scmp.eq.s32.totalorder %s19, 0
    %p156 = por %p154, %p155
    %s157 = ssub.s32 %s13, %s20
    %p158 = scmp.eq.s32.totalorder %s157, 0
    %s160 = sadd.s32 %s159, 1
    %s161 = scalar_select %p158, %s159, %s160
    %p164 = pneg %p158
    %p165 = scmp.eq.s32.totalorder %s13, 1
    %p166 = por %p164, %p165
    %p167 = scmp.ne.s32.totalorder %s159, %s162
    %p168 = scmp.eq.s32.totalorder %s13, 0
    %p169 = por %p167, %p168
    %p170 = scmp.ne.s32.totalorder %s159, %s162
    %p171 = scmp.eq.s32.totalorder %s18, 1
    %p172 = por %p170, %p171
    %p173 = scmp.ne.s32.totalorder %s162, %s163
    %p174 = scmp.eq.s32.totalorder %s18, 0
    %p175 = por %p173, %p174
    %p176 = scmp.ne.s32.totalorder %s162, %s163
    %p177 = scmp.eq.s32.totalorder %s19, 1
    %p178 = por %p176, %p177
    %p180 = scmp.ne.s32.totalorder %s163, %s179
    %p181 = scmp.eq.s32.totalorder %s19, 0
    %p182 = por %p180, %p181
    %p183 = scmp.le.s32.totalorder 1, %s13
    %p184 = scmp.lt.s32.totalorder %s13, 3
    %p185 = pnand %p183, %p184
    %p186 = pneg %p185
    // Predicated region
    $region9: #{resnet_bottleneck_forward.6} parent=5 // pred_check
      _
    $region10: #{resnet_bottleneck_forward.6} parent=5 // pred_check_branch
      %188 = sbr.rel (%p185) target = $region12
    $region11: #{resnet_bottleneck_forward.6} parent=5 // pred_region
      %s189 = ssub.s32 %s13, 1
      // Predicated region
      $region13: #{resnet_bottleneck_forward.6} parent=11 // pred_check
        %p190 = pneg %p60
      $region14: #{resnet_bottleneck_forward.6} parent=11 // pred_check_branch
        %192 = sbr.rel (%p190) target = $region16
      $region15: #{resnet_bottleneck_forward.6} parent=11 // pred_region
        _
      $region16: #{resnet_bottleneck_forward.6} parent=11 // pred_fallthru
        _
      // Predicated region
      $region17: #{resnet_bottleneck_forward.6} parent=11 // pred_check
        %p193 = pneg %p81
      $region18: #{resnet_bottleneck_forward.6} parent=11 // pred_check_branch
        %195 = sbr.rel (%p193) target = $region20
      $region19: #{resnet_bottleneck_forward.6} parent=11 // pred_region
        _
      $region20: #{resnet_bottleneck_forward.6} parent=11 // pred_fallthru
        _
      // Predicated region
      $region21: #{resnet_bottleneck_forward.6} parent=11 // pred_check
        %p196 = pneg %p102
      $region22: #{resnet_bottleneck_forward.6} parent=11 // pred_check_branch
        %198 = sbr.rel (%p196) target = $region24
      $region23: #{resnet_bottleneck_forward.6} parent=11 // pred_region
        _
      $region24: #{resnet_bottleneck_forward.6} parent=11 // pred_fallthru
        _
      // Predicated region
      $region25: #{resnet_bottleneck_forward.6} parent=11 // pred_check
        %p199 = pneg %p123
      $region26: #{resnet_bottleneck_forward.6} parent=11 // pred_check_branch
        %201 = sbr.rel (%p199) target = $region28
      $region27: #{resnet_bottleneck_forward.6} parent=11 // pred_region
        _
      $region28: #{resnet_bottleneck_forward.6} parent=11 // pred_fallthru
        _
    $region12: #{resnet_bottleneck_forward.6} parent=5 // pred_fallthru
      _
    %p202 = scmp.lt.s32.totalorder %s13, 2
    // Predicated region
    $region29: #{resnet_bottleneck_forward.6} parent=5 // pred_check
      %p203 = pneg %p202
    $region30: #{resnet_bottleneck_forward.6} parent=5 // pred_check_branch
      %205 = sbr.rel (%p203) target = $region32
    $region31: #{resnet_bottleneck_forward.6} parent=5 // pred_region
      // Predicated region
      $region33: #{resnet_bottleneck_forward.6} parent=31 // pred_check
        %p206 = pneg %p33
      $region34: #{resnet_bottleneck_forward.6} parent=31 // pred_check_branch
        %208 = sbr.rel (%p206) target = $region36
      $region35: #{resnet_bottleneck_forward.6} parent=31 // pred_region
        %p209 = scmp.lt.s32.totalorder %s13, 1
        %s210 = scalar_select %p209, %s13, 1
        %s211 = smul.addr %s210, 32
        %s212 = smul.addr %s211, 4
        %s213 = scalar_lea.vmem %s0, %s212
      $region36: #{resnet_bottleneck_forward.6} parent=31 // pred_fallthru
        _
    $region32: #{resnet_bottleneck_forward.6} parent=5 // pred_fallthru
      _
    %p214 = scmp.le.s32.totalorder 1, %s13
    %p215 = scmp.lt.s32.totalorder %s13, 3
    %p216 = pnand %p214, %p215
    %p217 = pneg %p216
    // Predicated region
    $region37: #{resnet_bottleneck_forward.6} parent=5 // pred_check
      _
    $region38: #{resnet_bottleneck_forward.6} parent=5 // pred_check_branch
      %219 = sbr.rel (%p216) target = $region40
    $region39: #{resnet_bottleneck_forward.6} parent=5 // pred_region
      %s220 = ssub.s32 %s13, 1
      %p221 = scmp.lt.s32.totalorder %s18, 1
      %s222 = scalar_select %p221, %s18, 1
      %s223 = smul.addr %s222, 32
      %s224 = smul.addr %s223, 4
      %s225 = scalar_lea.vmem %s0, %s224
      %p226 = pneg %p39
      %p227 = pneg %p36
      %p228 = pneg %p60
      %p229 = pneg %p57
      %p230 = pneg %p81
      %p231 = pneg %p78
      %p232 = pneg %p102
      %p233 = pneg %p99
      %p234 = pneg %p123
      %p235 = pneg %p120
      %p236 = pneg %p149
      %p237 = pneg %p146
      %p238 = scmp.lt.s32.totalorder %s18, 1
      %s239 = scalar_select %p238, %s18, 1
      %s240 = smul.addr %s239, 32
      %s241 = smul.addr %s240, 4
      %s242 = scalar_lea.vmem %s5, %s241
      %p243 = pneg %p175
      %p244 = pneg %p172
      %p245 = scmp.lt.s32.totalorder %s18, 1
      %s246 = scalar_select %p245, %s18, 1
      %s247 = smul.addr %s246, 2
      %s248 = scalar_lea.vmem %s6, %s247
      %p249 = scmp.lt.s32.totalorder %s18, 1
      %s250 = scalar_select %p249, %s18, 1
      %s251 = smul.addr %s250, 32
      %s252 = smul.addr %s251, 4
      %s253 = scalar_lea.vmem %s0, %s252
      %p254 = scmp.lt.s32.totalorder %s18, 1
      %s255 = scalar_select %p254, %s18, 1
      %s256 = smul.addr %s255, 32
      %s257 = smul.addr %s256, 4
      %s258 = scalar_lea.vmem %s5, %s257
      %p259 = scmp.lt.s32.totalorder %s18, 1
      %s260 = scalar_select %p259, %s18, 1
      %s261 = smul.addr %s260, 2
      %s262 = scalar_lea.vmem %s6, %s261
      %v264 = vld [vmem:[%s253] sm:$0xf]
      %v265 = vld [vmem:[%s253 + $0x4] sm:$0xf]
      %v266 = vld [vmem:[%s253 + $0x8] sm:$0xf]
      %v267 = vld [vmem:[%s253 + $0xc] sm:$0xf]
      %v268 = vld [vmem:[%s253 + $0x10] sm:$0xf]
      %v269 = vld [vmem:[%s253 + $0x14] sm:$0xf]
      %v270 = vld [vmem:[%s253 + $0x18] sm:$0xf]
      %v271 = vld [vmem:[%s253 + $0x1c] sm:$0xf]
      %v272 = vld [vmem:[%s253 + $0x20] sm:$0xf]
      %v273 = vld [vmem:[%s253 + $0x24] sm:$0xf]
      %v274 = vld [vmem:[%s253 + $0x28] sm:$0xf]
      %v275 = vld [vmem:[%s253 + $0x2c] sm:$0xf]
      %v276 = vld [vmem:[%s253 + $0x30] sm:$0xf]
      %v277 = vld [vmem:[%s253 + $0x34] sm:$0xf]
      %v278 = vld [vmem:[%s253 + $0x38] sm:$0xf]
      %v279 = vld [vmem:[%s253 + $0x3c] sm:$0xf]
      %v280 = vld [vmem:[%s253 + $0x40] sm:$0xf]
      %v281 = vld [vmem:[%s253 + $0x44] sm:$0xf]
      %v282 = vld [vmem:[%s253 + $0x48] sm:$0xf]
      %v283 = vld [vmem:[%s253 + $0x4c] sm:$0xf]
      %v284 = vld [vmem:[%s253 + $0x50] sm:$0xf]
      %v285 = vld [vmem:[%s253 + $0x54] sm:$0xf]
      %v286 = vld [vmem:[%s253 + $0x58] sm:$0xf]
      %v287 = vld [vmem:[%s253 + $0x5c] sm:$0xf]
      %v288 = vld [vmem:[%s253 + $0x60] sm:$0xf]
      %v289 = vld [vmem:[%s253 + $0x64] sm:$0xf]
      %v290 = vld [vmem:[%s253 + $0x68] sm:$0xf]
      %v291 = vld [vmem:[%s253 + $0x6c] sm:$0xf]
      %v292 = vld [vmem:[%s253 + $0x70] sm:$0xf]
      %v293 = vld [vmem:[%s253 + $0x74] sm:$0xf]
      %v294 = vld [vmem:[%s253 + $0x78] sm:$0xf]
      %v295 = vld [vmem:[%s253 + $0x7c] sm:$0xf]
      %v296 = vunpack.c.l.bf16 %v264
      %v297 = vunpack.c.l.bf16 %v265
      %v298 = vunpack.c.l.bf16 %v266
      %v299 = vunpack.c.l.bf16 %v267
      %v300 = vunpack.c.l.bf16 %v268
      %v301 = vunpack.c.l.bf16 %v269
      %v302 = vunpack.c.l.bf16 %v270
      %v303 = vunpack.c.l.bf16 %v271
      %v304 = vunpack.c.l.bf16 %v272
      %v305 = vunpack.c.l.bf16 %v273
      %v306 = vunpack.c.l.bf16 %v274
      %v307 = vunpack.c.l.bf16 %v275
      %v308 = vunpack.c.l.bf16 %v276
      %v309 = vunpack.c.l.bf16 %v277
      %v310 = vunpack.c.l.bf16 %v278
      %v311 = vunpack.c.l.bf16 %v279
      %v312 = vunpack.c.l.bf16 %v280
      %v313 = vunpack.c.l.bf16 %v281
      %v314 = vunpack.c.l.bf16 %v282
      %v315 = vunpack.c.l.bf16 %v283
      %v316 = vunpack.c.l.bf16 %v284
      %v317 = vunpack.c.l.bf16 %v285
      %v318 = vunpack.c.l.bf16 %v286
      %v319 = vunpack.c.l.bf16 %v287
      %v320 = vunpack.c.l.bf16 %v288
      %v321 = vunpack.c.l.bf16 %v289
      %v322 = vunpack.c.l.bf16 %v290
      %v323 = vunpack.c.l.bf16 %v291
      %v324 = vunpack.c.l.bf16 %v292
      %v325 = vunpack.c.l.bf16 %v293
      %v326 = vunpack.c.l.bf16 %v294
      %v327 = vunpack.c.l.bf16 %v295
      %v328 = vld [vmem:[%s1] sm:$0x1]
      %v330 = vperm.slane %v328, 0
      %v332 = vmul.f32 %v296, %v330
      %v333 = vmul.f32 %v297, %v330
      %v334 = vmul.f32 %v298, %v330
      %v335 = vmul.f32 %v299, %v330
      %v336 = vmul.f32 %v300, %v330
      %v337 = vmul.f32 %v301, %v330
      %v338 = vmul.f32 %v302, %v330
      %v339 = vmul.f32 %v303, %v330
      %v340 = vmul.f32 %v304, %v330
      %v341 = vmul.f32 %v305, %v330
      %v342 = vmul.f32 %v306, %v330
      %v343 = vmul.f32 %v307, %v330
      %v344 = vmul.f32 %v308, %v330
      %v345 = vmul.f32 %v309, %v330
      %v346 = vmul.f32 %v310, %v330
      %v347 = vmul.f32 %v311, %v330
      %v348 = vmul.f32 %v312, %v330
      %v349 = vmul.f32 %v313, %v330
      %v350 = vmul.f32 %v314, %v330
      %v351 = vmul.f32 %v315, %v330
      %v352 = vmul.f32 %v316, %v330
      %v353 = vmul.f32 %v317, %v330
      %v354 = vmul.f32 %v318, %v330
      %v355 = vmul.f32 %v319, %v330
      %v356 = vmul.f32 %v320, %v330
      %v357 = vmul.f32 %v321, %v330
      %v358 = vmul.f32 %v322, %v330
      %v359 = vmul.f32 %v323, %v330
      %v360 = vmul.f32 %v324, %v330
      %v361 = vmul.f32 %v325, %v330
      %v362 = vmul.f32 %v326, %v330
      %v363 = vmul.f32 %v327, %v330
      %v364 = vld [vmem:[%s2] sm:$0x1]
      %v366 = vperm.slane %v364, 0
      %v368 = vadd.f32 %v332, %v366
      %v369 = vadd.f32 %v333, %v366
      %v370 = vadd.f32 %v334, %v366
      %v371 = vadd.f32 %v335, %v366
      %v372 = vadd.f32 %v336, %v366
      %v373 = vadd.f32 %v337, %v366
      %v374 = vadd.f32 %v338, %v366
      %v375 = vadd.f32 %v339, %v366
      %v376 = vadd.f32 %v340, %v366
      %v377 = vadd.f32 %v341, %v366
      %v378 = vadd.f32 %v342, %v366
      %v379 = vadd.f32 %v343, %v366
      %v380 = vadd.f32 %v344, %v366
      %v381 = vadd.f32 %v345, %v366
      %v382 = vadd.f32 %v346, %v366
      %v383 = vadd.f32 %v347, %v366
      %v384 = vadd.f32 %v348, %v366
      %v385 = vadd.f32 %v349, %v366
      %v386 = vadd.f32 %v350, %v366
      %v387 = vadd.f32 %v351, %v366
      %v388 = vadd.f32 %v352, %v366
      %v389 = vadd.f32 %v353, %v366
      %v390 = vadd.f32 %v354, %v366
      %v391 = vadd.f32 %v355, %v366
      %v392 = vadd.f32 %v356, %v366
      %v393 = vadd.f32 %v357, %v366
      %v394 = vadd.f32 %v358, %v366
      %v395 = vadd.f32 %v359, %v366
      %v396 = vadd.f32 %v360, %v366
      %v397 = vadd.f32 %v361, %v366
      %v398 = vadd.f32 %v362, %v366
      %v399 = vadd.f32 %v363, %v366
      %v400 = vmax.f32 %v368, 0.0
      %v401 = vmax.f32 %v369, 0.0
      %v402 = vmax.f32 %v370, 0.0
      %v403 = vmax.f32 %v371, 0.0
      %v404 = vmax.f32 %v372, 0.0
      %v405 = vmax.f32 %v373, 0.0
      %v406 = vmax.f32 %v374, 0.0
      %v407 = vmax.f32 %v375, 0.0
      %v408 = vmax.f32 %v376, 0.0
      %v409 = vmax.f32 %v377, 0.0
      %v410 = vmax.f32 %v378, 0.0
      %v411 = vmax.f32 %v379, 0.0
      %v412 = vmax.f32 %v380, 0.0
      %v413 = vmax.f32 %v381, 0.0
      %v414 = vmax.f32 %v382, 0.0
      %v415 = vmax.f32 %v383, 0.0
      %v416 = vmax.f32 %v384, 0.0
      %v417 = vmax.f32 %v385, 0.0
      %v418 = vmax.f32 %v386, 0.0
      %v419 = vmax.f32 %v387, 0.0
      %v420 = vmax.f32 %v388, 0.0
      %v421 = vmax.f32 %v389, 0.0
      %v422 = vmax.f32 %v390, 0.0
      %v423 = vmax.f32 %v391, 0.0
      %v424 = vmax.f32 %v392, 0.0
      %v425 = vmax.f32 %v393, 0.0
      %v426 = vmax.f32 %v394, 0.0
      %v427 = vmax.f32 %v395, 0.0
      %v428 = vmax.f32 %v396, 0.0
      %v429 = vmax.f32 %v397, 0.0
      %v430 = vmax.f32 %v398, 0.0
      %v431 = vmax.f32 %v399, 0.0
      %v432 = vlaneseq
      %v433 = vshrl.u32 %v432, 7
      %v434 = vadd.s32 %v433, 8
      %v435 = vadd.s32 %v433, 16
      %v436 = vadd.s32 %v433, 24
      %v437 = vadd.s32 %v433, 32
      %v438 = vadd.s32 %v433, 40
      %v439 = vadd.s32 %v433, 48
      %v440 = vadd.s32 %v433, 56
      %v441 = vadd.s32 %v433, 64
      %v442 = vadd.s32 %v433, 72
      %v443 = vadd.s32 %v433, 80
      %v444 = vadd.s32 %v433, 88
      %v445 = vadd.s32 %v433, 96
      %v446 = vadd.s32 %v433, 104
      %v447 = vadd.s32 %v433, 112
      %v448 = vadd.s32 %v433, 120
      %v449 = vadd.s32 %v433, 128
      %v450 = vadd.s32 %v433, 136
      %v451 = vadd.s32 %v433, 144
      %v452 = vadd.s32 %v433, 152
      %v453 = vadd.s32 %v433, 160
      %v454 = vadd.s32 %v433, 168
      %v455 = vadd.s32 %v433, 176
      %v456 = vadd.s32 %v433, 184
      %v457 = vadd.s32 %v433, 192
      %v458 = vadd.s32 %v433, 200
      %v459 = vadd.s32 %v433, 208
      %v460 = vadd.s32 %v433, 216
      %v461 = vadd.s32 %v433, 224
      %v462 = vadd.s32 %v433, 232
      %v463 = vadd.s32 %v433, 240
      %v464 = vadd.s32 %v433, 248
      %vm465 = vcmp.lt.s32.totalorder %v433, 0
      %v466 = vsub.s32 0, %v433
      %v467 = vsel %vm465, %v466, %v433
      %v468 = vshrl.u32 %v467, 4
      %v469 = vand.u32 %v467, 15
      %v470 = vsub.s32 0, %v469
      %v471 = vsel %vm465, %v470, %v469
      %vm472 = vcmp.lt.s32.totalorder %v434, 0
      %v473 = vsub.s32 0, %v434
      %v474 = vsel %vm472, %v473, %v434
      %v475 = vshrl.u32 %v474, 4
      %v476 = vand.u32 %v474, 15
      %v477 = vsub.s32 0, %v476
      %v478 = vsel %vm472, %v477, %v476
      %vm479 = vcmp.lt.s32.totalorder %v435, 0
      %v480 = vsub.s32 0, %v435
      %v481 = vsel %vm479, %v480, %v435
      %v482 = vshrl.u32 %v481, 4
      %v483 = vand.u32 %v481, 15
      %v484 = vsub.s32 0, %v483
      %v485 = vsel %vm479, %v484, %v483
      %vm486 = vcmp.lt.s32.totalorder %v436, 0
      %v487 = vsub.s32 0, %v436
      %v488 = vsel %vm486, %v487, %v436
      %v489 = vshrl.u32 %v488, 4
      %v490 = vand.u32 %v488, 15
      %v491 = vsub.s32 0, %v490
      %v492 = vsel %vm486, %v491, %v490
      %vm493 = vcmp.lt.s32.totalorder %v437, 0
      %v494 = vsub.s32 0, %v437
      %v495 = vsel %vm493, %v494, %v437
      %v496 = vshrl.u32 %v495, 4
      %v497 = vand.u32 %v495, 15
      %v498 = vsub.s32 0, %v497
      %v499 = vsel %vm493, %v498, %v497
      %vm500 = vcmp.lt.s32.totalorder %v438, 0
      %v501 = vsub.s32 0, %v438
      %v502 = vsel %vm500, %v501, %v438
      %v503 = vshrl.u32 %v502, 4
      %v504 = vand.u32 %v502, 15
      %v505 = vsub.s32 0, %v504
      %v506 = vsel %vm500, %v505, %v504
      %vm507 = vcmp.lt.s32.totalorder %v439, 0
      %v508 = vsub.s32 0, %v439
      %v509 = vsel %vm507, %v508, %v439
      %v510 = vshrl.u32 %v509, 4
      %v511 = vand.u32 %v509, 15
      %v512 = vsub.s32 0, %v511
      %v513 = vsel %vm507, %v512, %v511
      %vm514 = vcmp.lt.s32.totalorder %v440, 0
      %v515 = vsub.s32 0, %v440
      %v516 = vsel %vm514, %v515, %v440
      %v517 = vshrl.u32 %v516, 4
      %v518 = vand.u32 %v516, 15
      %v519 = vsub.s32 0, %v518
      %v520 = vsel %vm514, %v519, %v518
      %vm521 = vcmp.lt.s32.totalorder %v441, 0
      %v522 = vsub.s32 0, %v441
      %v523 = vsel %vm521, %v522, %v441
      %v524 = vshrl.u32 %v523, 4
      %v525 = vand.u32 %v523, 15
      %v526 = vsub.s32 0, %v525
      %v527 = vsel %vm521, %v526, %v525
      %vm528 = vcmp.lt.s32.totalorder %v442, 0
      %v529 = vsub.s32 0, %v442
      %v530 = vsel %vm528, %v529, %v442
      %v531 = vshrl.u32 %v530, 4
      %v532 = vand.u32 %v530, 15
      %v533 = vsub.s32 0, %v532
      %v534 = vsel %vm528, %v533, %v532
      %vm535 = vcmp.lt.s32.totalorder %v443, 0
      %v536 = vsub.s32 0, %v443
      %v537 = vsel %vm535, %v536, %v443
      %v538 = vshrl.u32 %v537, 4
      %v539 = vand.u32 %v537, 15
      %v540 = vsub.s32 0, %v539
      %v541 = vsel %vm535, %v540, %v539
      %vm542 = vcmp.lt.s32.totalorder %v444, 0
      %v543 = vsub.s32 0, %v444
      %v544 = vsel %vm542, %v543, %v444
      %v545 = vshrl.u32 %v544, 4
      %v546 = vand.u32 %v544, 15
      %v547 = vsub.s32 0, %v546
      %v548 = vsel %vm542, %v547, %v546
      %vm549 = vcmp.lt.s32.totalorder %v445, 0
      %v550 = vsub.s32 0, %v445
      %v551 = vsel %vm549, %v550, %v445
      %v552 = vshrl.u32 %v551, 4
      %v553 = vand.u32 %v551, 15
      %v554 = vsub.s32 0, %v553
      %v555 = vsel %vm549, %v554, %v553
      %vm556 = vcmp.lt.s32.totalorder %v446, 0
      %v557 = vsub.s32 0, %v446
      %v558 = vsel %vm556, %v557, %v446
      %v559 = vshrl.u32 %v558, 4
      %v560 = vand.u32 %v558, 15
      %v561 = vsub.s32 0, %v560
      %v562 = vsel %vm556, %v561, %v560
      %vm563 = vcmp.lt.s32.totalorder %v447, 0
      %v564 = vsub.s32 0, %v447
      %v565 = vsel %vm563, %v564, %v447
      %v566 = vshrl.u32 %v565, 4
      %v567 = vand.u32 %v565, 15
      %v568 = vsub.s32 0, %v567
      %v569 = vsel %vm563, %v568, %v567
      %vm570 = vcmp.lt.s32.totalorder %v448, 0
      %v571 = vsub.s32 0, %v448
      %v572 = vsel %vm570, %v571, %v448
      %v573 = vshrl.u32 %v572, 4
      %v574 = vand.u32 %v572, 15
      %v575 = vsub.s32 0, %v574
      %v576 = vsel %vm570, %v575, %v574
      %vm577 = vcmp.lt.s32.totalorder %v449, 0
      %v578 = vsub.s32 0, %v449
      %v579 = vsel %vm577, %v578, %v449
      %v580 = vshrl.u32 %v579, 4
      %v581 = vand.u32 %v579, 15
      %v582 = vsub.s32 0, %v581
      %v583 = vsel %vm577, %v582, %v581
      %vm584 = vcmp.lt.s32.totalorder %v450, 0
      %v585 = vsub.s32 0, %v450
      %v586 = vsel %vm584, %v585, %v450
      %v587 = vshrl.u32 %v586, 4
      %v588 = vand.u32 %v586, 15
      %v589 = vsub.s32 0, %v588
      %v590 = vsel %vm584, %v589, %v588
      %vm591 = vcmp.lt.s32.totalorder %v451, 0
      %v592 = vsub.s32 0, %v451
      %v593 = vsel %vm591, %v592, %v451
      %v594 = vshrl.u32 %v593, 4
      %v595 = vand.u32 %v593, 15
      %v596 = vsub.s32 0, %v595
      %v597 = vsel %vm591, %v596, %v595
      %vm598 = vcmp.lt.s32.totalorder %v452, 0
      %v599 = vsub.s32 0, %v452
      %v600 = vsel %vm598, %v599, %v452
      %v601 = vshrl.u32 %v600, 4
      %v602 = vand.u32 %v600, 15
      %v603 = vsub.s32 0, %v602
      %v604 = vsel %vm598, %v603, %v602
      %vm605 = vcmp.lt.s32.totalorder %v453, 0
      %v606 = vsub.s32 0, %v453
      %v607 = vsel %vm605, %v606, %v453
      %v608 = vshrl.u32 %v607, 4
      %v609 = vand.u32 %v607, 15
      %v610 = vsub.s32 0, %v609
      %v611 = vsel %vm605, %v610, %v609
      %vm612 = vcmp.lt.s32.totalorder %v454, 0
      %v613 = vsub.s32 0, %v454
      %v614 = vsel %vm612, %v613, %v454
      %v615 = vshrl.u32 %v614, 4
      %v616 = vand.u32 %v614, 15
      %v617 = vsub.s32 0, %v616
      %v618 = vsel %vm612, %v617, %v616
      %vm619 = vcmp.lt.s32.totalorder %v455, 0
      %v620 = vsub.s32 0, %v455
      %v621 = vsel %vm619, %v620, %v455
      %v622 = vshrl.u32 %v621, 4
      %v623 = vand.u32 %v621, 15
      %v624 = vsub.s32 0, %v623
      %v625 = vsel %vm619, %v624, %v623
      %vm626 = vcmp.lt.s32.totalorder %v456, 0
      %v627 = vsub.s32 0, %v456
      %v628 = vsel %vm626, %v627, %v456
      %v629 = vshrl.u32 %v628, 4
      %v630 = vand.u32 %v628, 15
      %v631 = vsub.s32 0, %v630
      %v632 = vsel %vm626, %v631, %v630
      %vm633 = vcmp.lt.s32.totalorder %v457, 0
      %v634 = vsub.s32 0, %v457
      %v635 = vsel %vm633, %v634, %v457
      %v636 = vshrl.u32 %v635, 4
      %v637 = vand.u32 %v635, 15
      %v638 = vsub.s32 0, %v637
      %v639 = vsel %vm633, %v638, %v637
      %vm640 = vcmp.lt.s32.totalorder %v458, 0
      %v641 = vsub.s32 0, %v458
      %v642 = vsel %vm640, %v641, %v458
      %v643 = vshrl.u32 %v642, 4
      %v644 = vand.u32 %v642, 15
      %v645 = vsub.s32 0, %v644
      %v646 = vsel %vm640, %v645, %v644
      %vm647 = vcmp.lt.s32.totalorder %v459, 0
      %v648 = vsub.s32 0, %v459
      %v649 = vsel %vm647, %v648, %v459
      %v650 = vshrl.u32 %v649, 4
      %v651 = vand.u32 %v649, 15
      %v652 = vsub.s32 0, %v651
      %v653 = vsel %vm647, %v652, %v651
      %vm654 = vcmp.lt.s32.totalorder %v460, 0
      %v655 = vsub.s32 0, %v460
      %v656 = vsel %vm654, %v655, %v460
      %v657 = vshrl.u32 %v656, 4
      %v658 = vand.u32 %v656, 15
      %v659 = vsub.s32 0, %v658
      %v660 = vsel %vm654, %v659, %v658
      %vm661 = vcmp.lt.s32.totalorder %v461, 0
      %v662 = vsub.s32 0, %v461
      %v663 = vsel %vm661, %v662, %v461
      %v664 = vshrl.u32 %v663, 4
      %v665 = vand.u32 %v663, 15
      %v666 = vsub.s32 0, %v665
      %v667 = vsel %vm661, %v666, %v665
      %vm668 = vcmp.lt.s32.totalorder %v462, 0
      %v669 = vsub.s32 0, %v462
      %v670 = vsel %vm668, %v669, %v462
      %v671 = vshrl.u32 %v670, 4
      %v672 = vand.u32 %v670, 15
      %v673 = vsub.s32 0, %v672
      %v674 = vsel %vm668, %v673, %v672
      %vm675 = vcmp.lt.s32.totalorder %v463, 0
      %v676 = vsub.s32 0, %v463
      %v677 = vsel %vm675, %v676, %v463
      %v678 = vshrl.u32 %v677, 4
      %v679 = vand.u32 %v677, 15
      %v680 = vsub.s32 0, %v679
      %v681 = vsel %vm675, %v680, %v679
      %vm682 = vcmp.lt.s32.totalorder %v464, 0
      %v683 = vsub.s32 0, %v464
      %v684 = vsel %vm682, %v683, %v464
      %v685 = vshrl.u32 %v684, 4
      %v686 = vand.u32 %v684, 15
      %v687 = vsub.s32 0, %v686
      %v688 = vsel %vm682, %v687, %v686
      %vm689 = vcmp.ne.s32.totalorder %v471, 0
      %vm690 = vcmp.ne.s32.totalorder %v478, 0
      %vm691 = vcmp.ne.s32.totalorder %v485, 0
      %vm692 = vcmp.ne.s32.totalorder %v492, 0
      %vm693 = vcmp.ne.s32.totalorder %v499, 0
      %vm694 = vcmp.ne.s32.totalorder %v506, 0
      %vm695 = vcmp.ne.s32.totalorder %v513, 0
      %vm696 = vcmp.ne.s32.totalorder %v520, 0
      %vm697 = vcmp.ne.s32.totalorder %v527, 0
      %vm698 = vcmp.ne.s32.totalorder %v534, 0
      %vm699 = vcmp.ne.s32.totalorder %v541, 0
      %vm700 = vcmp.ne.s32.totalorder %v548, 0
      %vm701 = vcmp.ne.s32.totalorder %v555, 0
      %vm702 = vcmp.ne.s32.totalorder %v562, 0
      %vm703 = vcmp.ne.s32.totalorder %v569, 0
      %vm704 = vcmp.ne.s32.totalorder %v576, 0
      %vm705 = vcmp.ne.s32.totalorder %v583, 0
      %vm706 = vcmp.ne.s32.totalorder %v590, 0
      %vm707 = vcmp.ne.s32.totalorder %v597, 0
      %vm708 = vcmp.ne.s32.totalorder %v604, 0
      %vm709 = vcmp.ne.s32.totalorder %v611, 0
      %vm710 = vcmp.ne.s32.totalorder %v618, 0
      %vm711 = vcmp.ne.s32.totalorder %v625, 0
      %vm712 = vcmp.ne.s32.totalorder %v632, 0
      %vm713 = vcmp.ne.s32.totalorder %v639, 0
      %vm714 = vcmp.ne.s32.totalorder %v646, 0
      %vm715 = vcmp.ne.s32.totalorder %v653, 0
      %vm716 = vcmp.ne.s32.totalorder %v660, 0
      %vm717 = vcmp.ne.s32.totalorder %v667, 0
      %vm718 = vcmp.ne.s32.totalorder %v674, 0
      %vm719 = vcmp.ne.s32.totalorder %v681, 0
      %vm720 = vcmp.ne.s32.totalorder %v688, 0
      %vm721 = vcmp.lt.s32.totalorder %v471, 0
      %vm722 = vcmp.lt.s32.totalorder %v478, 0
      %vm723 = vcmp.lt.s32.totalorder %v485, 0
      %vm724 = vcmp.lt.s32.totalorder %v492, 0
      %vm725 = vcmp.lt.s32.totalorder %v499, 0
      %vm726 = vcmp.lt.s32.totalorder %v506, 0
      %vm727 = vcmp.lt.s32.totalorder %v513, 0
      %vm728 = vcmp.lt.s32.totalorder %v520, 0
      %vm729 = vcmp.lt.s32.totalorder %v527, 0
      %vm730 = vcmp.lt.s32.totalorder %v534, 0
      %vm731 = vcmp.lt.s32.totalorder %v541, 0
      %vm732 = vcmp.lt.s32.totalorder %v548, 0
      %vm733 = vcmp.lt.s32.totalorder %v555, 0
      %vm734 = vcmp.lt.s32.totalorder %v562, 0
      %vm735 = vcmp.lt.s32.totalorder %v569, 0
      %vm736 = vcmp.lt.s32.totalorder %v576, 0
      %vm737 = vcmp.lt.s32.totalorder %v583, 0
      %vm738 = vcmp.lt.s32.totalorder %v590, 0
      %vm739 = vcmp.lt.s32.totalorder %v597, 0
      %vm740 = vcmp.lt.s32.totalorder %v604, 0
      %vm741 = vcmp.lt.s32.totalorder %v611, 0
      %vm742 = vcmp.lt.s32.totalorder %v618, 0
      %vm743 = vcmp.lt.s32.totalorder %v625, 0
      %vm744 = vcmp.lt.s32.totalorder %v632, 0
      %vm745 = vcmp.lt.s32.totalorder %v639, 0
      %vm746 = vcmp.lt.s32.totalorder %v646, 0
      %vm747 = vcmp.lt.s32.totalorder %v653, 0
      %vm748 = vcmp.lt.s32.totalorder %v660, 0
      %vm749 = vcmp.lt.s32.totalorder %v667, 0
      %vm750 = vcmp.lt.s32.totalorder %v674, 0
      %vm751 = vcmp.lt.s32.totalorder %v681, 0
      %vm752 = vcmp.lt.s32.totalorder %v688, 0
      %vm753 = vmand %vm721, %vm689
      %vm754 = vmand %vm722, %vm690
      %vm755 = vmand %vm723, %vm691
      %vm756 = vmand %vm724, %vm692
      %vm757 = vmand %vm725, %vm693
      %vm758 = vmand %vm726, %vm694
      %vm759 = vmand %vm727, %vm695
      %vm760 = vmand %vm728, %vm696
      %vm761 = vmand %vm729, %vm697
      %vm762 = vmand %vm730, %vm698
      %vm763 = vmand %vm731, %vm699
      %vm764 = vmand %vm732, %vm700
      %vm765 = vmand %vm733, %vm701
      %vm766 = vmand %vm734, %vm702
      %vm767 = vmand %vm735, %vm703
      %vm768 = vmand %vm736, %vm704
      %vm769 = vmand %vm737, %vm705
      %vm770 = vmand %vm738, %vm706
      %vm771 = vmand %vm739, %vm707
      %vm772 = vmand %vm740, %vm708
      %vm773 = vmand %vm741, %vm709
      %vm774 = vmand %vm742, %vm710
      %vm775 = vmand %vm743, %vm711
      %vm776 = vmand %vm744, %vm712
      %vm777 = vmand %vm745, %vm713
      %vm778 = vmand %vm746, %vm714
      %vm779 = vmand %vm747, %vm715
      %vm780 = vmand %vm748, %vm716
      %vm781 = vmand %vm749, %vm717
      %vm782 = vmand %vm750, %vm718
      %vm783 = vmand %vm751, %vm719
      %vm784 = vmand %vm752, %vm720
      %v785 = vadd.s32 %v471, 16
      %v786 = vadd.s32 %v478, 16
      %v787 = vadd.s32 %v485, 16
      %v788 = vadd.s32 %v492, 16
      %v789 = vadd.s32 %v499, 16
      %v790 = vadd.s32 %v506, 16
      %v791 = vadd.s32 %v513, 16
      %v792 = vadd.s32 %v520, 16
      %v793 = vadd.s32 %v527, 16
      %v794 = vadd.s32 %v534, 16
      %v795 = vadd.s32 %v541, 16
      %v796 = vadd.s32 %v548, 16
      %v797 = vadd.s32 %v555, 16
      %v798 = vadd.s32 %v562, 16
      %v799 = vadd.s32 %v569, 16
      %v800 = vadd.s32 %v576, 16
      %v801 = vadd.s32 %v583, 16
      %v802 = vadd.s32 %v590, 16
      %v803 = vadd.s32 %v597, 16
      %v804 = vadd.s32 %v604, 16
      %v805 = vadd.s32 %v611, 16
      %v806 = vadd.s32 %v618, 16
      %v807 = vadd.s32 %v625, 16
      %v808 = vadd.s32 %v632, 16
      %v809 = vadd.s32 %v639, 16
      %v810 = vadd.s32 %v646, 16
      %v811 = vadd.s32 %v653, 16
      %v812 = vadd.s32 %v660, 16
      %v813 = vadd.s32 %v667, 16
      %v814 = vadd.s32 %v674, 16
      %v815 = vadd.s32 %v681, 16
      %v816 = vadd.s32 %v688, 16
      %v817 = vsel %vm753, %v785, %v471
      %v818 = vsel %vm754, %v786, %v478
      %v819 = vsel %vm755, %v787, %v485
      %v820 = vsel %vm756, %v788, %v492
      %v821 = vsel %vm757, %v789, %v499
      %v822 = vsel %vm758, %v790, %v506
      %v823 = vsel %vm759, %v791, %v513
      %v824 = vsel %vm760, %v792, %v520
      %v825 = vsel %vm761, %v793, %v527
      %v826 = vsel %vm762, %v794, %v534
      %v827 = vsel %vm763, %v795, %v541
      %v828 = vsel %vm764, %v796, %v548
      %v829 = vsel %vm765, %v797, %v555
      %v830 = vsel %vm766, %v798, %v562
      %v831 = vsel %vm767, %v799, %v569
      %v832 = vsel %vm768, %v800, %v576
      %v833 = vsel %vm769, %v801, %v583
      %v834 = vsel %vm770, %v802, %v590
      %v835 = vsel %vm771, %v803, %v597
      %v836 = vsel %vm772, %v804, %v604
      %v837 = vsel %vm773, %v805, %v611
      %v838 = vsel %vm774, %v806, %v618
      %v839 = vsel %vm775, %v807, %v625
      %v840 = vsel %vm776, %v808, %v632
      %v841 = vsel %vm777, %v809, %v639
      %v842 = vsel %vm778, %v810, %v646
      %v843 = vsel %vm779, %v811, %v653
      %v844 = vsel %vm780, %v812, %v660
      %v845 = vsel %vm781, %v813, %v667
      %v846 = vsel %vm782, %v814, %v674
      %v847 = vsel %vm783, %v815, %v681
      %v848 = vsel %vm784, %v816, %v688
      %vm849 = vcmp.ne.s32.totalorder %v817, 0
      %vm850 = vcmp.ne.s32.totalorder %v818, 0
      %vm851 = vcmp.ne.s32.totalorder %v819, 0
      %vm852 = vcmp.ne.s32.totalorder %v820, 0
      %vm853 = vcmp.ne.s32.totalorder %v821, 0
      %vm854 = vcmp.ne.s32.totalorder %v822, 0
      %vm855 = vcmp.ne.s32.totalorder %v823, 0
      %vm856 = vcmp.ne.s32.totalorder %v824, 0
      %vm857 = vcmp.ne.s32.totalorder %v825, 0
      %vm858 = vcmp.ne.s32.totalorder %v826, 0
      %vm859 = vcmp.ne.s32.totalorder %v827, 0
      %vm860 = vcmp.ne.s32.totalorder %v828, 0
      %vm861 = vcmp.ne.s32.totalorder %v829, 0
      %vm862 = vcmp.ne.s32.totalorder %v830, 0
      %vm863 = vcmp.ne.s32.totalorder %v831, 0
      %vm864 = vcmp.ne.s32.totalorder %v832, 0
      %vm865 = vcmp.ne.s32.totalorder %v833, 0
      %vm866 = vcmp.ne.s32.totalorder %v834, 0
      %vm867 = vcmp.ne.s32.totalorder %v835, 0
      %vm868 = vcmp.ne.s32.totalorder %v836, 0
      %vm869 = vcmp.ne.s32.totalorder %v837, 0
      %vm870 = vcmp.ne.s32.totalorder %v838, 0
      %vm871 = vcmp.ne.s32.totalorder %v839, 0
      %vm872 = vcmp.ne.s32.totalorder %v840, 0
      %vm873 = vcmp.ne.s32.totalorder %v841, 0
      %vm874 = vcmp.ne.s32.totalorder %v842, 0
      %vm875 = vcmp.ne.s32.totalorder %v843, 0
      %vm876 = vcmp.ne.s32.totalorder %v844, 0
      %vm877 = vcmp.ne.s32.totalorder %v845, 0
      %vm878 = vcmp.ne.s32.totalorder %v846, 0
      %vm879 = vcmp.ne.s32.totalorder %v847, 0
      %vm880 = vcmp.ne.s32.totalorder %v848, 0
      %v881 = vrot.slane %v400, 7
      %v882 = vrot.slane %v401, 7
      %v883 = vrot.slane %v402, 7
      %v884 = vrot.slane %v403, 7
      %v885 = vrot.slane %v404, 7
      %v886 = vrot.slane %v405, 7
      %v887 = vrot.slane %v406, 7
      %v888 = vrot.slane %v407, 7
      %v889 = vrot.slane %v408, 7
      %v890 = vrot.slane %v409, 7
      %v891 = vrot.slane %v410, 7
      %v892 = vrot.slane %v411, 7
      %v893 = vrot.slane %v412, 7
      %v894 = vrot.slane %v413, 7
      %v895 = vrot.slane %v414, 7
      %v896 = vrot.slane %v415, 7
      %v897 = vrot.slane %v416, 7
      %v898 = vrot.slane %v417, 7
      %v899 = vrot.slane %v418, 7
      %v900 = vrot.slane %v419, 7
      %v901 = vrot.slane %v420, 7
      %v902 = vrot.slane %v421, 7
      %v903 = vrot.slane %v422, 7
      %v904 = vrot.slane %v423, 7
      %v905 = vrot.slane %v424, 7
      %v906 = vrot.slane %v425, 7
      %v907 = vrot.slane %v426, 7
      %v908 = vrot.slane %v427, 7
      %v909 = vrot.slane %v428, 7
      %v910 = vrot.slane %v429, 7
      %v911 = vrot.slane %v430, 7
      %v912 = vrot.slane %v431, 7
      %vm913 = vcmp.lt.s32.totalorder %v433, 1
      %v914 = vsel %vm913, %v911, %v912
      %v915 = vsel %vm913, %v910, %v911
      %v916 = vsel %vm913, %v909, %v910
      %v917 = vsel %vm913, %v908, %v909
      %v918 = vsel %vm913, %v907, %v908
      %v919 = vsel %vm913, %v906, %v907
      %v920 = vsel %vm913, %v905, %v906
      %v921 = vsel %vm913, %v904, %v905
      %v922 = vsel %vm913, %v903, %v904
      %v923 = vsel %vm913, %v902, %v903
      %v924 = vsel %vm913, %v901, %v902
      %v925 = vsel %vm913, %v900, %v901
      %v926 = vsel %vm913, %v899, %v900
      %v927 = vsel %vm913, %v898, %v899
      %v928 = vsel %vm913, %v897, %v898
      %v929 = vsel %vm913, %v896, %v897
      %v930 = vsel %vm913, %v895, %v896
      %v931 = vsel %vm913, %v894, %v895
      %v932 = vsel %vm913, %v893, %v894
      %v933 = vsel %vm913, %v892, %v893
      %v934 = vsel %vm913, %v891, %v892
      %v935 = vsel %vm913, %v890, %v891
      %v936 = vsel %vm913, %v889, %v890
      %v937 = vsel %vm913, %v888, %v889
      %v938 = vsel %vm913, %v887, %v888
      %v939 = vsel %vm913, %v886, %v887
      %v940 = vsel %vm913, %v885, %v886
      %v941 = vsel %vm913, %v884, %v885
      %v942 = vsel %vm913, %v883, %v884
      %v943 = vsel %vm913, %v882, %v883
      %v944 = vsel %vm913, %v881, %v882
      %v945 = vsel %vm913, %v912, %v881
      %v946 = vsel %vm849, 1, 0
      %v947 = vsel %vm850, 1, 0
      %v948 = vsel %vm851, 1, 0
      %v949 = vsel %vm852, 1, 0
      %v950 = vsel %vm853, 1, 0
      %v951 = vsel %vm854, 1, 0
      %v952 = vsel %vm855, 1, 0
      %v953 = vsel %vm856, 1, 0
      %v954 = vsel %vm857, 1, 0
      %v955 = vsel %vm858, 1, 0
      %v956 = vsel %vm859, 1, 0
      %v957 = vsel %vm860, 1, 0
      %v958 = vsel %vm861, 1, 0
      %v959 = vsel %vm862, 1, 0
      %v960 = vsel %vm863, 1, 0
      %v961 = vsel %vm864, 1, 0
      %v962 = vsel %vm865, 1, 0
      %v963 = vsel %vm866, 1, 0
      %v964 = vsel %vm867, 1, 0
      %v965 = vsel %vm868, 1, 0
      %v966 = vsel %vm869, 1, 0
      %v967 = vsel %vm870, 1, 0
      %v968 = vsel %vm871, 1, 0
      %v969 = vsel %vm872, 1, 0
      %v970 = vsel %vm873, 1, 0
      %v971 = vsel %vm874, 1, 0
      %v972 = vsel %vm875, 1, 0
      %v973 = vsel %vm876, 1, 0
      %v974 = vsel %vm877, 1, 0
      %v975 = vsel %vm878, 1, 0
      %v976 = vsel %vm879, 1, 0
      %v977 = vsel %vm880, 1, 0
      %vm978 = vcmp.eq.s32.totalorder %v946, 1
      %vm979 = vcmp.eq.s32.totalorder %v947, 1
      %vm980 = vcmp.eq.s32.totalorder %v948, 1
      %vm981 = vcmp.eq.s32.totalorder %v949, 1
      %vm982 = vcmp.eq.s32.totalorder %v950, 1
      %vm983 = vcmp.eq.s32.totalorder %v951, 1
      %vm984 = vcmp.eq.s32.totalorder %v952, 1
      %vm985 = vcmp.eq.s32.totalorder %v953, 1
      %vm986 = vcmp.eq.s32.totalorder %v954, 1
      %vm987 = vcmp.eq.s32.totalorder %v955, 1
      %vm988 = vcmp.eq.s32.totalorder %v956, 1
      %vm989 = vcmp.eq.s32.totalorder %v957, 1
      %vm990 = vcmp.eq.s32.totalorder %v958, 1
      %vm991 = vcmp.eq.s32.totalorder %v959, 1
      %vm992 = vcmp.eq.s32.totalorder %v960, 1
      %vm993 = vcmp.eq.s32.totalorder %v961, 1
      %vm994 = vcmp.eq.s32.totalorder %v962, 1
      %vm995 = vcmp.eq.s32.totalorder %v963, 1
      %vm996 = vcmp.eq.s32.totalorder %v964, 1
      %vm997 = vcmp.eq.s32.totalorder %v965, 1
      %vm998 = vcmp.eq.s32.totalorder %v966, 1
      %vm999 = vcmp.eq.s32.totalorder %v967, 1
      %vm1000 = vcmp.eq.s32.totalorder %v968, 1
      %vm1001 = vcmp.eq.s32.totalorder %v969, 1
      %vm1002 = vcmp.eq.s32.totalorder %v970, 1
      %vm1003 = vcmp.eq.s32.totalorder %v971, 1
      %vm1004 = vcmp.eq.s32.totalorder %v972, 1
      %vm1005 = vcmp.eq.s32.totalorder %v973, 1
      %vm1006 = vcmp.eq.s32.totalorder %v974, 1
      %vm1007 = vcmp.eq.s32.totalorder %v975, 1
      %vm1008 = vcmp.eq.s32.totalorder %v976, 1
      %vm1009 = vcmp.eq.s32.totalorder %v977, 1
      %v1010 = vsel %vm978, %v945, 0.0
      %v1011 = vsel %vm979, %v944, 0.0
      %v1012 = vsel %vm980, %v943, 0.0
      %v1013 = vsel %vm981, %v942, 0.0
      %v1014 = vsel %vm982, %v941, 0.0
      %v1015 = vsel %vm983, %v940, 0.0
      %v1016 = vsel %vm984, %v939, 0.0
      %v1017 = vsel %vm985, %v938, 0.0
      %v1018 = vsel %vm986, %v937, 0.0
      %v1019 = vsel %vm987, %v936, 0.0
      %v1020 = vsel %vm988, %v935, 0.0
      %v1021 = vsel %vm989, %v934, 0.0
      %v1022 = vsel %vm990, %v933, 0.0
      %v1023 = vsel %vm991, %v932, 0.0
      %v1024 = vsel %vm992, %v931, 0.0
      %v1025 = vsel %vm993, %v930, 0.0
      %v1026 = vsel %vm994, %v929, 0.0
      %v1027 = vsel %vm995, %v928, 0.0
      %v1028 = vsel %vm996, %v927, 0.0
      %v1029 = vsel %vm997, %v926, 0.0
      %v1030 = vsel %vm998, %v925, 0.0
      %v1031 = vsel %vm999, %v924, 0.0
      %v1032 = vsel %vm1000, %v923, 0.0
      %v1033 = vsel %vm1001, %v922, 0.0
      %v1034 = vsel %vm1002, %v921, 0.0
      %v1035 = vsel %vm1003, %v920, 0.0
      %v1036 = vsel %vm1004, %v919, 0.0
      %v1037 = vsel %vm1005, %v918, 0.0
      %v1038 = vsel %vm1006, %v917, 0.0
      %v1039 = vsel %vm1007, %v916, 0.0
      %v1040 = vsel %vm1008, %v915, 0.0
      %v1041 = vsel %vm1009, %v914, 0.0
      %v1042 = vpack.c.bf16 %v1010, %v1010
      %v1043 = vpack.c.bf16 %v1011, %v1011
      %v1044 = vpack.c.bf16 %v1012, %v1012
      %v1045 = vpack.c.bf16 %v1013, %v1013
      %v1046 = vpack.c.bf16 %v1014, %v1014
      %v1047 = vpack.c.bf16 %v1015, %v1015
      %v1048 = vpack.c.bf16 %v1016, %v1016
      %v1049 = vpack.c.bf16 %v1017, %v1017
      %v1050 = vpack.c.bf16 %v1018, %v1018
      %v1051 = vpack.c.bf16 %v1019, %v1019
      %v1052 = vpack.c.bf16 %v1020, %v1020
      %v1053 = vpack.c.bf16 %v1021, %v1021
      %v1054 = vpack.c.bf16 %v1022, %v1022
      %v1055 = vpack.c.bf16 %v1023, %v1023
      %v1056 = vpack.c.bf16 %v1024, %v1024
      %v1057 = vpack.c.bf16 %v1025, %v1025
      %v1058 = vpack.c.bf16 %v1026, %v1026
      %v1059 = vpack.c.bf16 %v1027, %v1027
      %v1060 = vpack.c.bf16 %v1028, %v1028
      %v1061 = vpack.c.bf16 %v1029, %v1029
      %v1062 = vpack.c.bf16 %v1030, %v1030
      %v1063 = vpack.c.bf16 %v1031, %v1031
      %v1064 = vpack.c.bf16 %v1032, %v1032
      %v1065 = vpack.c.bf16 %v1033, %v1033
      %v1066 = vpack.c.bf16 %v1034, %v1034
      %v1067 = vpack.c.bf16 %v1035, %v1035
      %v1068 = vpack.c.bf16 %v1036, %v1036
      %v1069 = vpack.c.bf16 %v1037, %v1037
      %v1070 = vpack.c.bf16 %v1038, %v1038
      %v1071 = vpack.c.bf16 %v1039, %v1039
      %v1072 = vpack.c.bf16 %v1040, %v1040
      %v1073 = vpack.c.bf16 %v1041, %v1041
      %vm1074 = vcmp.ne.s32.totalorder %v817, 15
      %vm1075 = vcmp.ne.s32.totalorder %v818, 15
      %vm1076 = vcmp.ne.s32.totalorder %v819, 15
      %vm1077 = vcmp.ne.s32.totalorder %v820, 15
      %vm1078 = vcmp.ne.s32.totalorder %v821, 15
      %vm1079 = vcmp.ne.s32.totalorder %v822, 15
      %vm1080 = vcmp.ne.s32.totalorder %v823, 15
      %vm1081 = vcmp.ne.s32.totalorder %v824, 15
      %vm1082 = vcmp.ne.s32.totalorder %v825, 15
      %vm1083 = vcmp.ne.s32.totalorder %v826, 15
      %vm1084 = vcmp.ne.s32.totalorder %v827, 15
      %vm1085 = vcmp.ne.s32.totalorder %v828, 15
      %vm1086 = vcmp.ne.s32.totalorder %v829, 15
      %vm1087 = vcmp.ne.s32.totalorder %v830, 15
      %vm1088 = vcmp.ne.s32.totalorder %v831, 15
      %vm1089 = vcmp.ne.s32.totalorder %v832, 15
      %vm1090 = vcmp.ne.s32.totalorder %v833, 15
      %vm1091 = vcmp.ne.s32.totalorder %v834, 15
      %vm1092 = vcmp.ne.s32.totalorder %v835, 15
      %vm1093 = vcmp.ne.s32.totalorder %v836, 15
      %vm1094 = vcmp.ne.s32.totalorder %v837, 15
      %vm1095 = vcmp.ne.s32.totalorder %v838, 15
      %vm1096 = vcmp.ne.s32.totalorder %v839, 15
      %vm1097 = vcmp.ne.s32.totalorder %v840, 15
      %vm1098 = vcmp.ne.s32.totalorder %v841, 15
      %vm1099 = vcmp.ne.s32.totalorder %v842, 15
      %vm1100 = vcmp.ne.s32.totalorder %v843, 15
      %vm1101 = vcmp.ne.s32.totalorder %v844, 15
      %vm1102 = vcmp.ne.s32.totalorder %v845, 15
      %vm1103 = vcmp.ne.s32.totalorder %v846, 15
      %vm1104 = vcmp.ne.s32.totalorder %v847, 15
      %vm1105 = vcmp.ne.s32.totalorder %v848, 15
      %v1106 = vrot.slane %v400, 1
      %v1107 = vrot.slane %v401, 1
      %v1108 = vrot.slane %v402, 1
      %v1109 = vrot.slane %v403, 1
      %v1110 = vrot.slane %v404, 1
      %v1111 = vrot.slane %v405, 1
      %v1112 = vrot.slane %v406, 1
      %v1113 = vrot.slane %v407, 1
      %v1114 = vrot.slane %v408, 1
      %v1115 = vrot.slane %v409, 1
      %v1116 = vrot.slane %v410, 1
      %v1117 = vrot.slane %v411, 1
      %v1118 = vrot.slane %v412, 1
      %v1119 = vrot.slane %v413, 1
      %v1120 = vrot.slane %v414, 1
      %v1121 = vrot.slane %v415, 1
      %v1122 = vrot.slane %v416, 1
      %v1123 = vrot.slane %v417, 1
      %v1124 = vrot.slane %v418, 1
      %v1125 = vrot.slane %v419, 1
      %v1126 = vrot.slane %v420, 1
      %v1127 = vrot.slane %v421, 1
      %v1128 = vrot.slane %v422, 1
      %v1129 = vrot.slane %v423, 1
      %v1130 = vrot.slane %v424, 1
      %v1131 = vrot.slane %v425, 1
      %v1132 = vrot.slane %v426, 1
      %v1133 = vrot.slane %v427, 1
      %v1134 = vrot.slane %v428, 1
      %v1135 = vrot.slane %v429, 1
      %v1136 = vrot.slane %v430, 1
      %v1137 = vrot.slane %v431, 1
      %vm1138 = vcmp.lt.s32.totalorder %v433, 7
      %v1139 = vsel %vm1138, %v1136, %v1137
      %v1140 = vsel %vm1138, %v1135, %v1136
      %v1141 = vsel %vm1138, %v1134, %v1135
      %v1142 = vsel %vm1138, %v1133, %v1134
      %v1143 = vsel %vm1138, %v1132, %v1133
      %v1144 = vsel %vm1138, %v1131, %v1132
      %v1145 = vsel %vm1138, %v1130, %v1131
      %v1146 = vsel %vm1138, %v1129, %v1130
      %v1147 = vsel %vm1138, %v1128, %v1129
      %v1148 = vsel %vm1138, %v1127, %v1128
      %v1149 = vsel %vm1138, %v1126, %v1127
      %v1150 = vsel %vm1138, %v1125, %v1126
      %v1151 = vsel %vm1138, %v1124, %v1125
      %v1152 = vsel %vm1138, %v1123, %v1124
      %v1153 = vsel %vm1138, %v1122, %v1123
      %v1154 = vsel %vm1138, %v1121, %v1122
      %v1155 = vsel %vm1138, %v1120, %v1121
      %v1156 = vsel %vm1138, %v1119, %v1120
      %v1157 = vsel %vm1138, %v1118, %v1119
      %v1158 = vsel %vm1138, %v1117, %v1118
      %v1159 = vsel %vm1138, %v1116, %v1117
      %v1160 = vsel %vm1138, %v1115, %v1116
      %v1161 = vsel %vm1138, %v1114, %v1115
      %v1162 = vsel %vm1138, %v1113, %v1114
      %v1163 = vsel %vm1138, %v1112, %v1113
      %v1164 = vsel %vm1138, %v1111, %v1112
      %v1165 = vsel %vm1138, %v1110, %v1111
      %v1166 = vsel %vm1138, %v1109, %v1110
      %v1167 = vsel %vm1138, %v1108, %v1109
      %v1168 = vsel %vm1138, %v1107, %v1108
      %v1169 = vsel %vm1138, %v1106, %v1107
      %v1170 = vsel %vm1138, %v1137, %v1106
      %v1171 = vsel %vm1074, 1, 0
      %v1172 = vsel %vm1075, 1, 0
      %v1173 = vsel %vm1076, 1, 0
      %v1174 = vsel %vm1077, 1, 0
      %v1175 = vsel %vm1078, 1, 0
      %v1176 = vsel %vm1079, 1, 0
      %v1177 = vsel %vm1080, 1, 0
      %v1178 = vsel %vm1081, 1, 0
      %v1179 = vsel %vm1082, 1, 0
      %v1180 = vsel %vm1083, 1, 0
      %v1181 = vsel %vm1084, 1, 0
      %v1182 = vsel %vm1085, 1, 0
      %v1183 = vsel %vm1086, 1, 0
      %v1184 = vsel %vm1087, 1, 0
      %v1185 = vsel %vm1088, 1, 0
      %v1186 = vsel %vm1089, 1, 0
      %v1187 = vsel %vm1090, 1, 0
      %v1188 = vsel %vm1091, 1, 0
      %v1189 = vsel %vm1092, 1, 0
      %v1190 = vsel %vm1093, 1, 0
      %v1191 = vsel %vm1094, 1, 0
      %v1192 = vsel %vm1095, 1, 0
      %v1193 = vsel %vm1096, 1, 0
      %v1194 = vsel %vm1097, 1, 0
      %v1195 = vsel %vm1098, 1, 0
      %v1196 = vsel %vm1099, 1, 0
      %v1197 = vsel %vm1100, 1, 0
      %v1198 = vsel %vm1101, 1, 0
      %v1199 = vsel %vm1102, 1, 0
      %v1200 = vsel %vm1103, 1, 0
      %v1201 = vsel %vm1104, 1, 0
      %v1202 = vsel %vm1105, 1, 0
      %vm1203 = vcmp.eq.s32.totalorder %v1171, 1
      %vm1204 = vcmp.eq.s32.totalorder %v1172, 1
      %vm1205 = vcmp.eq.s32.totalorder %v1173, 1
      %vm1206 = vcmp.eq.s32.totalorder %v1174, 1
      %vm1207 = vcmp.eq.s32.totalorder %v1175, 1
      %vm1208 = vcmp.eq.s32.totalorder %v1176, 1
      %vm1209 = vcmp.eq.s32.totalorder %v1177, 1
      %vm1210 = vcmp.eq.s32.totalorder %v1178, 1
      %vm1211 = vcmp.eq.s32.totalorder %v1179, 1
      %vm1212 = vcmp.eq.s32.totalorder %v1180, 1
      %vm1213 = vcmp.eq.s32.totalorder %v1181, 1
      %vm1214 = vcmp.eq.s32.totalorder %v1182, 1
      %vm1215 = vcmp.eq.s32.totalorder %v1183, 1
      %vm1216 = vcmp.eq.s32.totalorder %v1184, 1
      %vm1217 = vcmp.eq.s32.totalorder %v1185, 1
      %vm1218 = vcmp.eq.s32.totalorder %v1186, 1
      %vm1219 = vcmp.eq.s32.totalorder %v1187, 1
      %vm1220 = vcmp.eq.s32.totalorder %v1188, 1
      %vm1221 = vcmp.eq.s32.totalorder %v1189, 1
      %vm1222 = vcmp.eq.s32.totalorder %v1190, 1
      %vm1223 = vcmp.eq.s32.totalorder %v1191, 1
      %vm1224 = vcmp.eq.s32.totalorder %v1192, 1
      %vm1225 = vcmp.eq.s32.totalorder %v1193, 1
      %vm1226 = vcmp.eq.s32.totalorder %v1194, 1
      %vm1227 = vcmp.eq.s32.totalorder %v1195, 1
      %vm1228 = vcmp.eq.s32.totalorder %v1196, 1
      %vm1229 = vcmp.eq.s32.totalorder %v1197, 1
      %vm1230 = vcmp.eq.s32.totalorder %v1198, 1
      %vm1231 = vcmp.eq.s32.totalorder %v1199, 1
      %vm1232 = vcmp.eq.s32.totalorder %v1200, 1
      %vm1233 = vcmp.eq.s32.totalorder %v1201, 1
      %vm1234 = vcmp.eq.s32.totalorder %v1202, 1
      %v1235 = vsel %vm1203, %v1169, 0.0
      %v1236 = vsel %vm1204, %v1168, 0.0
      %v1237 = vsel %vm1205, %v1167, 0.0
      %v1238 = vsel %vm1206, %v1166, 0.0
      %v1239 = vsel %vm1207, %v1165, 0.0
      %v1240 = vsel %vm1208, %v1164, 0.0
      %v1241 = vsel %vm1209, %v1163, 0.0
      %v1242 = vsel %vm1210, %v1162, 0.0
      %v1243 = vsel %vm1211, %v1161, 0.0
      %v1244 = vsel %vm1212, %v1160, 0.0
      %v1245 = vsel %vm1213, %v1159, 0.0
      %v1246 = vsel %vm1214, %v1158, 0.0
      %v1247 = vsel %vm1215, %v1157, 0.0
      %v1248 = vsel %vm1216, %v1156, 0.0
      %v1249 = vsel %vm1217, %v1155, 0.0
      %v1250 = vsel %vm1218, %v1154, 0.0
      %v1251 = vsel %vm1219, %v1153, 0.0
      %v1252 = vsel %vm1220, %v1152, 0.0
      %v1253 = vsel %vm1221, %v1151, 0.0
      %v1254 = vsel %vm1222, %v1150, 0.0
      %v1255 = vsel %vm1223, %v1149, 0.0
      %v1256 = vsel %vm1224, %v1148, 0.0
      %v1257 = vsel %vm1225, %v1147, 0.0
      %v1258 = vsel %vm1226, %v1146, 0.0
      %v1259 = vsel %vm1227, %v1145, 0.0
      %v1260 = vsel %vm1228, %v1144, 0.0
      %v1261 = vsel %vm1229, %v1143, 0.0
      %v1262 = vsel %vm1230, %v1142, 0.0
      %v1263 = vsel %vm1231, %v1141, 0.0
      %v1264 = vsel %vm1232, %v1140, 0.0
      %v1265 = vsel %vm1233, %v1139, 0.0
      %v1266 = vsel %vm1234, %v1170, 0.0
      %v1267 = vpack.c.bf16 %v1235, %v1235
      %v1268 = vpack.c.bf16 %v1236, %v1236
      %v1269 = vpack.c.bf16 %v1237, %v1237
      %v1270 = vpack.c.bf16 %v1238, %v1238
      %v1271 = vpack.c.bf16 %v1239, %v1239
      %v1272 = vpack.c.bf16 %v1240, %v1240
      %v1273 = vpack.c.bf16 %v1241, %v1241
      %v1274 = vpack.c.bf16 %v1242, %v1242
      %v1275 = vpack.c.bf16 %v1243, %v1243
      %v1276 = vpack.c.bf16 %v1244, %v1244
      %v1277 = vpack.c.bf16 %v1245, %v1245
      %v1278 = vpack.c.bf16 %v1246, %v1246
      %v1279 = vpack.c.bf16 %v1247, %v1247
      %v1280 = vpack.c.bf16 %v1248, %v1248
      %v1281 = vpack.c.bf16 %v1249, %v1249
      %v1282 = vpack.c.bf16 %v1250, %v1250
      %v1283 = vpack.c.bf16 %v1251, %v1251
      %v1284 = vpack.c.bf16 %v1252, %v1252
      %v1285 = vpack.c.bf16 %v1253, %v1253
      %v1286 = vpack.c.bf16 %v1254, %v1254
      %v1287 = vpack.c.bf16 %v1255, %v1255
      %v1288 = vpack.c.bf16 %v1256, %v1256
      %v1289 = vpack.c.bf16 %v1257, %v1257
      %v1290 = vpack.c.bf16 %v1258, %v1258
      %v1291 = vpack.c.bf16 %v1259, %v1259
      %v1292 = vpack.c.bf16 %v1260, %v1260
      %v1293 = vpack.c.bf16 %v1261, %v1261
      %v1294 = vpack.c.bf16 %v1262, %v1262
      %v1295 = vpack.c.bf16 %v1263, %v1263
      %v1296 = vpack.c.bf16 %v1264, %v1264
      %v1297 = vpack.c.bf16 %v1265, %v1265
      %v1298 = vpack.c.bf16 %v1266, %v1266
      %v1299 = vpack.c.bf16 %v400, %v400
      %v1300 = vpack.c.bf16 %v401, %v401
      %v1301 = vpack.c.bf16 %v402, %v402
      %v1302 = vpack.c.bf16 %v403, %v403
      %v1303 = vpack.c.bf16 %v404, %v404
      %v1304 = vpack.c.bf16 %v405, %v405
      %v1305 = vpack.c.bf16 %v406, %v406
      %v1306 = vpack.c.bf16 %v407, %v407
      %v1307 = vpack.c.bf16 %v408, %v408
      %v1308 = vpack.c.bf16 %v409, %v409
      %v1309 = vpack.c.bf16 %v410, %v410
      %v1310 = vpack.c.bf16 %v411, %v411
      %v1311 = vpack.c.bf16 %v412, %v412
      %v1312 = vpack.c.bf16 %v413, %v413
      %v1313 = vpack.c.bf16 %v414, %v414
      %v1314 = vpack.c.bf16 %v415, %v415
      %v1315 = vpack.c.bf16 %v416, %v416
      %v1316 = vpack.c.bf16 %v417, %v417
      %v1317 = vpack.c.bf16 %v418, %v418
      %v1318 = vpack.c.bf16 %v419, %v419
      %v1319 = vpack.c.bf16 %v420, %v420
      %v1320 = vpack.c.bf16 %v421, %v421
      %v1321 = vpack.c.bf16 %v422, %v422
      %v1322 = vpack.c.bf16 %v423, %v423
      %v1323 = vpack.c.bf16 %v424, %v424
      %v1324 = vpack.c.bf16 %v425, %v425
      %v1325 = vpack.c.bf16 %v426, %v426
      %v1326 = vpack.c.bf16 %v427, %v427
      %v1327 = vpack.c.bf16 %v428, %v428
      %v1328 = vpack.c.bf16 %v429, %v429
      %v1329 = vpack.c.bf16 %v430, %v430
      %v1330 = vpack.c.bf16 %v431, %v431
      %v1363 = vunpack.c.l.b16 %v1042
      %v1364 = vunpack.c.l.b16 %v1043
      %v1365 = vunpack.c.l.b16 %v1044
      %v1366 = vunpack.c.l.b16 %v1045
      %v1367 = vunpack.c.l.b16 %v1046
      %v1368 = vunpack.c.l.b16 %v1047
      %v1369 = vunpack.c.l.b16 %v1048
      %v1370 = vunpack.c.l.b16 %v1049
      %v1371 = vunpack.c.l.b16 %v1050
      %v1372 = vunpack.c.l.b16 %v1051
      %v1373 = vunpack.c.l.b16 %v1052
      %v1374 = vunpack.c.l.b16 %v1053
      %v1375 = vunpack.c.l.b16 %v1054
      %v1376 = vunpack.c.l.b16 %v1055
      %v1377 = vunpack.c.l.b16 %v1056
      %v1378 = vunpack.c.l.b16 %v1057
      %v1379 = vunpack.c.l.b16 %v1058
      %v1380 = vunpack.c.l.b16 %v1059
      %v1381 = vunpack.c.l.b16 %v1060
      %v1382 = vunpack.c.l.b16 %v1061
      %v1383 = vunpack.c.l.b16 %v1062
      %v1384 = vunpack.c.l.b16 %v1063
      %v1385 = vunpack.c.l.b16 %v1064
      %v1386 = vunpack.c.l.b16 %v1065
      %v1387 = vunpack.c.l.b16 %v1066
      %v1388 = vunpack.c.l.b16 %v1067
      %v1389 = vunpack.c.l.b16 %v1068
      %v1390 = vunpack.c.l.b16 %v1069
      %v1391 = vunpack.c.l.b16 %v1070
      %v1392 = vunpack.c.l.b16 %v1071
      %v1393 = vunpack.c.l.b16 %v1072
      %v1394 = vunpack.c.l.b16 %v1073
      %v1395 = vpack.c.b16 %v1364, %v1363
      %v1396 = vpack.c.b16 %v1366, %v1365
      %v1397 = vpack.c.b16 %v1368, %v1367
      %v1398 = vpack.c.b16 %v1370, %v1369
      %v1399 = vpack.c.b16 %v1372, %v1371
      %v1400 = vpack.c.b16 %v1374, %v1373
      %v1401 = vpack.c.b16 %v1376, %v1375
      %v1402 = vpack.c.b16 %v1378, %v1377
      %v1403 = vpack.c.b16 %v1380, %v1379
      %v1404 = vpack.c.b16 %v1382, %v1381
      %v1405 = vpack.c.b16 %v1384, %v1383
      %v1406 = vpack.c.b16 %v1386, %v1385
      %v1407 = vpack.c.b16 %v1388, %v1387
      %v1408 = vpack.c.b16 %v1390, %v1389
      %v1409 = vpack.c.b16 %v1392, %v1391
      %v1410 = vpack.c.b16 %v1394, %v1393
      %v1443 = vunpack.c.l.b16 %v1299
      %v1444 = vunpack.c.l.b16 %v1300
      %v1445 = vunpack.c.l.b16 %v1301
      %v1446 = vunpack.c.l.b16 %v1302
      %v1447 = vunpack.c.l.b16 %v1303
      %v1448 = vunpack.c.l.b16 %v1304
      %v1449 = vunpack.c.l.b16 %v1305
      %v1450 = vunpack.c.l.b16 %v1306
      %v1451 = vunpack.c.l.b16 %v1307
      %v1452 = vunpack.c.l.b16 %v1308
      %v1453 = vunpack.c.l.b16 %v1309
      %v1454 = vunpack.c.l.b16 %v1310
      %v1455 = vunpack.c.l.b16 %v1311
      %v1456 = vunpack.c.l.b16 %v1312
      %v1457 = vunpack.c.l.b16 %v1313
      %v1458 = vunpack.c.l.b16 %v1314
      %v1459 = vunpack.c.l.b16 %v1315
      %v1460 = vunpack.c.l.b16 %v1316
      %v1461 = vunpack.c.l.b16 %v1317
      %v1462 = vunpack.c.l.b16 %v1318
      %v1463 = vunpack.c.l.b16 %v1319
      %v1464 = vunpack.c.l.b16 %v1320
      %v1465 = vunpack.c.l.b16 %v1321
      %v1466 = vunpack.c.l.b16 %v1322
      %v1467 = vunpack.c.l.b16 %v1323
      %v1468 = vunpack.c.l.b16 %v1324
      %v1469 = vunpack.c.l.b16 %v1325
      %v1470 = vunpack.c.l.b16 %v1326
      %v1471 = vunpack.c.l.b16 %v1327
      %v1472 = vunpack.c.l.b16 %v1328
      %v1473 = vunpack.c.l.b16 %v1329
      %v1474 = vunpack.c.l.b16 %v1330
      %v1475 = vpack.c.b16 %v1444, %v1443
      %v1476 = vpack.c.b16 %v1446, %v1445
      %v1477 = vpack.c.b16 %v1448, %v1447
      %v1478 = vpack.c.b16 %v1450, %v1449
      %v1479 = vpack.c.b16 %v1452, %v1451
      %v1480 = vpack.c.b16 %v1454, %v1453
      %v1481 = vpack.c.b16 %v1456, %v1455
      %v1482 = vpack.c.b16 %v1458, %v1457
      %v1483 = vpack.c.b16 %v1460, %v1459
      %v1484 = vpack.c.b16 %v1462, %v1461
      %v1485 = vpack.c.b16 %v1464, %v1463
      %v1486 = vpack.c.b16 %v1466, %v1465
      %v1487 = vpack.c.b16 %v1468, %v1467
      %v1488 = vpack.c.b16 %v1470, %v1469
      %v1489 = vpack.c.b16 %v1472, %v1471
      %v1490 = vpack.c.b16 %v1474, %v1473
      %1491 = vrot.lane.b32.xlu0 %v1475, 4
      %v1492 = vpop.permute.xlu0 %1491
      %1493 = vrot.lane.b32.xlu0 %v1476, 4
      %v1494 = vpop.permute.xlu0 %1493
      %1495 = vrot.lane.b32.xlu0 %v1477, 4
      %v1496 = vpop.permute.xlu0 %1495
      %1497 = vrot.lane.b32.xlu0 %v1478, 4
      %v1498 = vpop.permute.xlu0 %1497
      %1499 = vrot.lane.b32.xlu0 %v1479, 4
      %v1500 = vpop.permute.xlu0 %1499
      %1501 = vrot.lane.b32.xlu0 %v1480, 4
      %v1502 = vpop.permute.xlu0 %1501
      %1503 = vrot.lane.b32.xlu0 %v1481, 4
      %v1504 = vpop.permute.xlu0 %1503
      %1505 = vrot.lane.b32.xlu0 %v1482, 4
      %v1506 = vpop.permute.xlu0 %1505
      %1507 = vrot.lane.b32.xlu0 %v1483, 4
      %v1508 = vpop.permute.xlu0 %1507
      %1509 = vrot.lane.b32.xlu0 %v1484, 4
      %v1510 = vpop.permute.xlu0 %1509
      %1511 = vrot.lane.b32.xlu0 %v1485, 4
      %v1512 = vpop.permute.xlu0 %1511
      %1513 = vrot.lane.b32.xlu0 %v1486, 4
      %v1514 = vpop.permute.xlu0 %1513
      %1515 = vrot.lane.b32.xlu0 %v1487, 4
      %v1516 = vpop.permute.xlu0 %1515
      %1517 = vrot.lane.b32.xlu0 %v1488, 4
      %v1518 = vpop.permute.xlu0 %1517
      %1519 = vrot.lane.b32.xlu0 %v1489, 4
      %v1520 = vpop.permute.xlu0 %1519
      %1521 = vrot.lane.b32.xlu0 %v1490, 4
      %v1522 = vpop.permute.xlu0 %1521
      %v1555 = vunpack.c.l.b16 %v1267
      %v1556 = vunpack.c.l.b16 %v1268
      %v1557 = vunpack.c.l.b16 %v1269
      %v1558 = vunpack.c.l.b16 %v1270
      %v1559 = vunpack.c.l.b16 %v1271
      %v1560 = vunpack.c.l.b16 %v1272
      %v1561 = vunpack.c.l.b16 %v1273
      %v1562 = vunpack.c.l.b16 %v1274
      %v1563 = vunpack.c.l.b16 %v1275
      %v1564 = vunpack.c.l.b16 %v1276
      %v1565 = vunpack.c.l.b16 %v1277
      %v1566 = vunpack.c.l.b16 %v1278
      %v1567 = vunpack.c.l.b16 %v1279
      %v1568 = vunpack.c.l.b16 %v1280
      %v1569 = vunpack.c.l.b16 %v1281
      %v1570 = vunpack.c.l.b16 %v1282
      %v1571 = vunpack.c.l.b16 %v1283
      %v1572 = vunpack.c.l.b16 %v1284
      %v1573 = vunpack.c.l.b16 %v1285
      %v1574 = vunpack.c.l.b16 %v1286
      %v1575 = vunpack.c.l.b16 %v1287
      %v1576 = vunpack.c.l.b16 %v1288
      %v1577 = vunpack.c.l.b16 %v1289
      %v1578 = vunpack.c.l.b16 %v1290
      %v1579 = vunpack.c.l.b16 %v1291
      %v1580 = vunpack.c.l.b16 %v1292
      %v1581 = vunpack.c.l.b16 %v1293
      %v1582 = vunpack.c.l.b16 %v1294
      %v1583 = vunpack.c.l.b16 %v1295
      %v1584 = vunpack.c.l.b16 %v1296
      %v1585 = vunpack.c.l.b16 %v1297
      %v1586 = vunpack.c.l.b16 %v1298
      %v1587 = vpack.c.b16 %v1556, %v1555
      %v1588 = vpack.c.b16 %v1558, %v1557
      %v1589 = vpack.c.b16 %v1560, %v1559
      %v1590 = vpack.c.b16 %v1562, %v1561
      %v1591 = vpack.c.b16 %v1564, %v1563
      %v1592 = vpack.c.b16 %v1566, %v1565
      %v1593 = vpack.c.b16 %v1568, %v1567
      %v1594 = vpack.c.b16 %v1570, %v1569
      %v1595 = vpack.c.b16 %v1572, %v1571
      %v1596 = vpack.c.b16 %v1574, %v1573
      %v1597 = vpack.c.b16 %v1576, %v1575
      %v1598 = vpack.c.b16 %v1578, %v1577
      %v1599 = vpack.c.b16 %v1580, %v1579
      %v1600 = vpack.c.b16 %v1582, %v1581
      %v1601 = vpack.c.b16 %v1584, %v1583
      %v1602 = vpack.c.b16 %v1586, %v1585
      %1603 = vrot.lane.b32.xlu0 %v1587, 8
      %v1604 = vpop.permute.xlu0 %1603
      %1605 = vrot.lane.b32.xlu0 %v1588, 8
      %v1606 = vpop.permute.xlu0 %1605
      %1607 = vrot.lane.b32.xlu0 %v1589, 8
      %v1608 = vpop.permute.xlu0 %1607
      %1609 = vrot.lane.b32.xlu0 %v1590, 8
      %v1610 = vpop.permute.xlu0 %1609
      %1611 = vrot.lane.b32.xlu0 %v1591, 8
      %v1612 = vpop.permute.xlu0 %1611
      %1613 = vrot.lane.b32.xlu0 %v1592, 8
      %v1614 = vpop.permute.xlu0 %1613
      %1615 = vrot.lane.b32.xlu0 %v1593, 8
      %v1616 = vpop.permute.xlu0 %1615
      %1617 = vrot.lane.b32.xlu0 %v1594, 8
      %v1618 = vpop.permute.xlu0 %1617
      %1619 = vrot.lane.b32.xlu0 %v1595, 8
      %v1620 = vpop.permute.xlu0 %1619
      %1621 = vrot.lane.b32.xlu0 %v1596, 8
      %v1622 = vpop.permute.xlu0 %1621
      %1623 = vrot.lane.b32.xlu0 %v1597, 8
      %v1624 = vpop.permute.xlu0 %1623
      %1625 = vrot.lane.b32.xlu0 %v1598, 8
      %v1626 = vpop.permute.xlu0 %1625
      %1627 = vrot.lane.b32.xlu0 %v1599, 8
      %v1628 = vpop.permute.xlu0 %1627
      %1629 = vrot.lane.b32.xlu0 %v1600, 8
      %v1630 = vpop.permute.xlu0 %1629
      %1631 = vrot.lane.b32.xlu0 %v1601, 8
      %v1632 = vpop.permute.xlu0 %1631
      %1633 = vrot.lane.b32.xlu0 %v1602, 8
      %v1634 = vpop.permute.xlu0 %1633
      %vm1635 = vcmask 31744
      %v1638 = vsel %vm1635, %v1395, %v1492
      %v1641 = vsel %vm1635, %v1396, %v1494
      %v1644 = vsel %vm1635, %v1397, %v1496
      %v1647 = vsel %vm1635, %v1398, %v1498
      %v1650 = vsel %vm1635, %v1399, %v1500
      %v1653 = vsel %vm1635, %v1400, %v1502
      %v1656 = vsel %vm1635, %v1401, %v1504
      %v1659 = vsel %vm1635, %v1402, %v1506
      %v1662 = vsel %vm1635, %v1403, %v1508
      %v1665 = vsel %vm1635, %v1404, %v1510
      %v1668 = vsel %vm1635, %v1405, %v1512
      %v1671 = vsel %vm1635, %v1406, %v1514
      %v1674 = vsel %vm1635, %v1407, %v1516
      %v1677 = vsel %vm1635, %v1408, %v1518
      %v1680 = vsel %vm1635, %v1409, %v1520
      %v1683 = vsel %vm1635, %v1410, %v1522
      %vm1684 = vcmask 64512
      %v1686 = vsel %vm1684, %v1638, %v1604
      %v1688 = vsel %vm1684, %v1641, %v1606
      %v1690 = vsel %vm1684, %v1644, %v1608
      %v1692 = vsel %vm1684, %v1647, %v1610
      %v1694 = vsel %vm1684, %v1650, %v1612
      %v1696 = vsel %vm1684, %v1653, %v1614
      %v1698 = vsel %vm1684, %v1656, %v1616
      %v1700 = vsel %vm1684, %v1659, %v1618
      %v1702 = vsel %vm1684, %v1662, %v1620
      %v1704 = vsel %vm1684, %v1665, %v1622
      %v1706 = vsel %vm1684, %v1668, %v1624
      %v1708 = vsel %vm1684, %v1671, %v1626
      %v1710 = vsel %vm1684, %v1674, %v1628
      %v1712 = vsel %vm1684, %v1677, %v1630
      %v1714 = vsel %vm1684, %v1680, %v1632
      %v1716 = vsel %vm1684, %v1683, %v1634
      %v1717 = vld [vmem:[%s3] sm:$0xf]
      %v1718 = vld [vmem:[%s3 + $0x4] sm:$0xf]
      %v1719 = vld [vmem:[%s3 + $0x8] sm:$0xf]
      %v1720 = vld [vmem:[%s3 + $0xc] sm:$0xf]
      %v1721 = vld [vmem:[%s3 + $0x10] sm:$0x3]
      %v1724 = vunpack.c.l.b16 %v1718
      %v1725 = vunpack.c.l.b16 %v1719
      %v1726 = vpack.c.b16 %v1725, %v1724
      %v1727 = vrot.slane %v1726, 2
      %vm1728 = vcmask 97280
      %v1729 = vsel %vm1728, %v1686, 0
      %v1731 = vsel %vm1728, %v1688, 0
      %v1733 = vsel %vm1728, %v1690, 0
      %v1735 = vsel %vm1728, %v1692, 0
      %v1737 = vsel %vm1728, %v1694, 0
      %v1739 = vsel %vm1728, %v1696, 0
      %v1741 = vsel %vm1728, %v1698, 0
      %v1743 = vsel %vm1728, %v1700, 0
      %v1745 = vsel %vm1728, %v1702, 0
      %v1747 = vsel %vm1728, %v1704, 0
      %v1749 = vsel %vm1728, %v1706, 0
      %v1751 = vsel %vm1728, %v1708, 0
      %v1753 = vsel %vm1728, %v1710, 0
      %v1755 = vsel %vm1728, %v1712, 0
      %v1757 = vsel %vm1728, %v1714, 0
      %v1759 = vsel %vm1728, %v1716, 0
      %vm1761 = vcmask 1045504
      %v1763 = vsel %vm1761, %v1727, 0
      %1765 = vmatpush.bf16.msra.mxu0 0
      %1766 = vmatpush.bf16.msra.mxu0 0
      %1767 = vmatpush.bf16.msra.mxu0 0
      %1768 = vmatpush.bf16.msra.mxu0 0
      %1769 = vmatpush.bf16.msra.mxu0 0
      %1770 = vmatpush.bf16.msra.mxu0 0
      %1771 = vmatpush.bf16.msra.mxu0 0
      %1772 = vmatpush.bf16.msra.mxu0 %v1763
      %1773 = vmatmul.bf16.gmra.mxu0 %v1729
      %v1774 = vpop.f32.mrf.mxu0
      %v1775 = vadd.f32 0.0, %v1774
      %v1776 = vpop.f32.mrf.mxu0
      %v1777 = vadd.f32 0.0, %v1776
      %1778 = vmatmul.bf16.gmra.mxu0 %v1731
      %v1779 = vpop.f32.mrf.mxu0
      %v1780 = vadd.f32 0.0, %v1779
      %v1781 = vpop.f32.mrf.mxu0
      %v1782 = vadd.f32 0.0, %v1781
      %1783 = vmatmul.bf16.gmra.mxu0 %v1733
      %v1784 = vpop.f32.mrf.mxu0
      %v1785 = vadd.f32 0.0, %v1784
      %v1786 = vpop.f32.mrf.mxu0
      %v1787 = vadd.f32 0.0, %v1786
      %1788 = vmatmul.bf16.gmra.mxu0 %v1735
      %v1789 = vpop.f32.mrf.mxu0
      %v1790 = vadd.f32 0.0, %v1789
      %v1791 = vpop.f32.mrf.mxu0
      %v1792 = vadd.f32 0.0, %v1791
      %1793 = vmatmul.bf16.gmra.mxu0 %v1737
      %v1794 = vpop.f32.mrf.mxu0
      %v1795 = vadd.f32 0.0, %v1794
      %v1796 = vpop.f32.mrf.mxu0
      %v1797 = vadd.f32 0.0, %v1796
      %1798 = vmatmul.bf16.gmra.mxu0 %v1739
      %v1799 = vpop.f32.mrf.mxu0
      %v1800 = vadd.f32 0.0, %v1799
      %v1801 = vpop.f32.mrf.mxu0
      %v1802 = vadd.f32 0.0, %v1801
      %1803 = vmatmul.bf16.gmra.mxu0 %v1741
      %v1804 = vpop.f32.mrf.mxu0
      %v1805 = vadd.f32 0.0, %v1804
      %v1806 = vpop.f32.mrf.mxu0
      %v1807 = vadd.f32 0.0, %v1806
      %1808 = vmatmul.bf16.gmra.mxu0 %v1743
      %v1809 = vpop.f32.mrf.mxu0
      %v1810 = vadd.f32 0.0, %v1809
      %v1811 = vpop.f32.mrf.mxu0
      %v1812 = vadd.f32 0.0, %v1811
      %1813 = vmatmul.bf16.gmra.mxu0 %v1745
      %v1814 = vpop.f32.mrf.mxu0
      %v1815 = vadd.f32 0.0, %v1814
      %v1816 = vpop.f32.mrf.mxu0
      %v1817 = vadd.f32 0.0, %v1816
      %1818 = vmatmul.bf16.gmra.mxu0 %v1747
      %v1819 = vpop.f32.mrf.mxu0
      %v1820 = vadd.f32 0.0, %v1819
      %v1821 = vpop.f32.mrf.mxu0
      %v1822 = vadd.f32 0.0, %v1821
      %1823 = vmatmul.bf16.gmra.mxu0 %v1749
      %v1824 = vpop.f32.mrf.mxu0
      %v1825 = vadd.f32 0.0, %v1824
      %v1826 = vpop.f32.mrf.mxu0
      %v1827 = vadd.f32 0.0, %v1826
      %1828 = vmatmul.bf16.gmra.mxu0 %v1751
      %v1829 = vpop.f32.mrf.mxu0
      %v1830 = vadd.f32 0.0, %v1829
      %v1831 = vpop.f32.mrf.mxu0
      %v1832 = vadd.f32 0.0, %v1831
      %1833 = vmatmul.bf16.gmra.mxu0 %v1753
      %v1834 = vpop.f32.mrf.mxu0
      %v1835 = vadd.f32 0.0, %v1834
      %v1836 = vpop.f32.mrf.mxu0
      %v1837 = vadd.f32 0.0, %v1836
      %1838 = vmatmul.bf16.gmra.mxu0 %v1755
      %v1839 = vpop.f32.mrf.mxu0
      %v1840 = vadd.f32 0.0, %v1839
      %v1841 = vpop.f32.mrf.mxu0
      %v1842 = vadd.f32 0.0, %v1841
      %1843 = vmatmul.bf16.gmra.mxu0 %v1757
      %v1844 = vpop.f32.mrf.mxu0
      %v1845 = vadd.f32 0.0, %v1844
      %v1846 = vpop.f32.mrf.mxu0
      %v1847 = vadd.f32 0.0, %v1846
      %1848 = vmatmul.bf16.gmra.mxu0 %v1759
      %v1849 = vpop.f32.mrf.mxu0
      %v1850 = vadd.f32 0.0, %v1849
      %v1851 = vpop.f32.mrf.mxu0
      %v1852 = vadd.f32 0.0, %v1851
      %1853 = vdwg.mxu0
      %v1855 = vunpack.c.l.b16 %v1717
      %v1856 = vpack.c.b16 %v1724, %v1855
      %v1858 = vsel %vm1728, 0, 0
      %v1861 = vsel %vm1761, %v1856, 0
      %1863 = vmatpush.bf16.msra.mxu0 0
      %1864 = vmatpush.bf16.msra.mxu0 0
      %1865 = vmatpush.bf16.msra.mxu0 0
      %1866 = vmatpush.bf16.msra.mxu0 0
      %1867 = vmatpush.bf16.msra.mxu0 0
      %1868 = vmatpush.bf16.msra.mxu0 0
      %1869 = vmatpush.bf16.msra.mxu0 0
      %1870 = vmatpush.bf16.msra.mxu0 %v1861
      %1871 = vmatmul.bf16.gmra.mxu0 %v1858
      %v1872 = vpop.f32.mrf.mxu0
      %v1873 = vadd.f32 %v1775, %v1872
      %v1874 = vpop.f32.mrf.mxu0
      %v1875 = vadd.f32 %v1777, %v1874
      %1876 = vmatmul.bf16.gmra.mxu0 %v1729
      %v1877 = vpop.f32.mrf.mxu0
      %v1878 = vadd.f32 %v1780, %v1877
      %v1879 = vpop.f32.mrf.mxu0
      %v1880 = vadd.f32 %v1782, %v1879
      %1881 = vmatmul.bf16.gmra.mxu0 %v1731
      %v1882 = vpop.f32.mrf.mxu0
      %v1883 = vadd.f32 %v1785, %v1882
      %v1884 = vpop.f32.mrf.mxu0
      %v1885 = vadd.f32 %v1787, %v1884
      %1886 = vmatmul.bf16.gmra.mxu0 %v1733
      %v1887 = vpop.f32.mrf.mxu0
      %v1888 = vadd.f32 %v1790, %v1887
      %v1889 = vpop.f32.mrf.mxu0
      %v1890 = vadd.f32 %v1792, %v1889
      %1891 = vmatmul.bf16.gmra.mxu0 %v1735
      %v1892 = vpop.f32.mrf.mxu0
      %v1893 = vadd.f32 %v1795, %v1892
      %v1894 = vpop.f32.mrf.mxu0
      %v1895 = vadd.f32 %v1797, %v1894
      %1896 = vmatmul.bf16.gmra.mxu0 %v1737
      %v1897 = vpop.f32.mrf.mxu0
      %v1898 = vadd.f32 %v1800, %v1897
      %v1899 = vpop.f32.mrf.mxu0
      %v1900 = vadd.f32 %v1802, %v1899
      %1901 = vmatmul.bf16.gmra.mxu0 %v1739
      %v1902 = vpop.f32.mrf.mxu0
      %v1903 = vadd.f32 %v1805, %v1902
      %v1904 = vpop.f32.mrf.mxu0
      %v1905 = vadd.f32 %v1807, %v1904
      %1906 = vmatmul.bf16.gmra.mxu0 %v1741
      %v1907 = vpop.f32.mrf.mxu0
      %v1908 = vadd.f32 %v1810, %v1907
      %v1909 = vpop.f32.mrf.mxu0
      %v1910 = vadd.f32 %v1812, %v1909
      %1911 = vmatmul.bf16.gmra.mxu0 %v1743
      %v1912 = vpop.f32.mrf.mxu0
      %v1913 = vadd.f32 %v1815, %v1912
      %v1914 = vpop.f32.mrf.mxu0
      %v1915 = vadd.f32 %v1817, %v1914
      %1916 = vmatmul.bf16.gmra.mxu0 %v1745
      %v1917 = vpop.f32.mrf.mxu0
      %v1918 = vadd.f32 %v1820, %v1917
      %v1919 = vpop.f32.mrf.mxu0
      %v1920 = vadd.f32 %v1822, %v1919
      %1921 = vmatmul.bf16.gmra.mxu0 %v1747
      %v1922 = vpop.f32.mrf.mxu0
      %v1923 = vadd.f32 %v1825, %v1922
      %v1924 = vpop.f32.mrf.mxu0
      %v1925 = vadd.f32 %v1827, %v1924
      %1926 = vmatmul.bf16.gmra.mxu0 %v1749
      %v1927 = vpop.f32.mrf.mxu0
      %v1928 = vadd.f32 %v1830, %v1927
      %v1929 = vpop.f32.mrf.mxu0
      %v1930 = vadd.f32 %v1832, %v1929
      %1931 = vmatmul.bf16.gmra.mxu0 %v1751
      %v1932 = vpop.f32.mrf.mxu0
      %v1933 = vadd.f32 %v1835, %v1932
      %v1934 = vpop.f32.mrf.mxu0
      %v1935 = vadd.f32 %v1837, %v1934
      %1936 = vmatmul.bf16.gmra.mxu0 %v1753
      %v1937 = vpop.f32.mrf.mxu0
      %v1938 = vadd.f32 %v1840, %v1937
      %v1939 = vpop.f32.mrf.mxu0
      %v1940 = vadd.f32 %v1842, %v1939
      %1941 = vmatmul.bf16.gmra.mxu0 %v1755
      %v1942 = vpop.f32.mrf.mxu0
      %v1943 = vadd.f32 %v1845, %v1942
      %v1944 = vpop.f32.mrf.mxu0
      %v1945 = vadd.f32 %v1847, %v1944
      %1946 = vmatmul.bf16.gmra.mxu0 %v1757
      %v1947 = vpop.f32.mrf.mxu0
      %v1948 = vadd.f32 %v1850, %v1947
      %v1949 = vpop.f32.mrf.mxu0
      %v1950 = vadd.f32 %v1852, %v1949
      %1951 = vdwg.mxu0
      %v1954 = vunpack.c.l.b16 %v1720
      %v1955 = vunpack.c.l.b16 %v1721
      %v1956 = vpack.c.b16 %v1955, %v1954
      %v1958 = vsel %vm1761, %v1956, 0
      %1960 = vmatpush.bf16.msra.mxu0 0
      %1961 = vmatpush.bf16.msra.mxu0 0
      %1962 = vmatpush.bf16.msra.mxu0 0
      %1963 = vmatpush.bf16.msra.mxu0 0
      %1964 = vmatpush.bf16.msra.mxu0 0
      %1965 = vmatpush.bf16.msra.mxu0 0
      %1966 = vmatpush.bf16.msra.mxu0 0
      %1967 = vmatpush.bf16.msra.mxu0 %v1958
      %1968 = vmatmul.bf16.gmra.mxu0 %v1731
      %v1969 = vpop.f32.mrf.mxu0
      %v1970 = vadd.f32 0.0, %v1969
      %v1971 = vpop.f32.mrf.mxu0
      %v1972 = vadd.f32 0.0, %v1971
      %1973 = vmatmul.bf16.gmra.mxu0 %v1733
      %v1974 = vpop.f32.mrf.mxu0
      %v1975 = vadd.f32 0.0, %v1974
      %v1976 = vpop.f32.mrf.mxu0
      %v1977 = vadd.f32 0.0, %v1976
      %1978 = vmatmul.bf16.gmra.mxu0 %v1735
      %v1979 = vpop.f32.mrf.mxu0
      %v1980 = vadd.f32 0.0, %v1979
      %v1981 = vpop.f32.mrf.mxu0
      %v1982 = vadd.f32 0.0, %v1981
      %1983 = vmatmul.bf16.gmra.mxu0 %v1737
      %v1984 = vpop.f32.mrf.mxu0
      %v1985 = vadd.f32 0.0, %v1984
      %v1986 = vpop.f32.mrf.mxu0
      %v1987 = vadd.f32 0.0, %v1986
      %1988 = vmatmul.bf16.gmra.mxu0 %v1739
      %v1989 = vpop.f32.mrf.mxu0
      %v1990 = vadd.f32 0.0, %v1989
      %v1991 = vpop.f32.mrf.mxu0
      %v1992 = vadd.f32 0.0, %v1991
      %1993 = vmatmul.bf16.gmra.mxu0 %v1741
      %v1994 = vpop.f32.mrf.mxu0
      %v1995 = vadd.f32 0.0, %v1994
      %v1996 = vpop.f32.mrf.mxu0
      %v1997 = vadd.f32 0.0, %v1996
      %1998 = vmatmul.bf16.gmra.mxu0 %v1743
      %v1999 = vpop.f32.mrf.mxu0
      %v2000 = vadd.f32 0.0, %v1999
      %v2001 = vpop.f32.mrf.mxu0
      %v2002 = vadd.f32 0.0, %v2001
      %2003 = vmatmul.bf16.gmra.mxu0 %v1745
      %v2004 = vpop.f32.mrf.mxu0
      %v2005 = vadd.f32 0.0, %v2004
      %v2006 = vpop.f32.mrf.mxu0
      %v2007 = vadd.f32 0.0, %v2006
      %2008 = vmatmul.bf16.gmra.mxu0 %v1747
      %v2009 = vpop.f32.mrf.mxu0
      %v2010 = vadd.f32 0.0, %v2009
      %v2011 = vpop.f32.mrf.mxu0
      %v2012 = vadd.f32 0.0, %v2011
      %2013 = vmatmul.bf16.gmra.mxu0 %v1749
      %v2014 = vpop.f32.mrf.mxu0
      %v2015 = vadd.f32 0.0, %v2014
      %v2016 = vpop.f32.mrf.mxu0
      %v2017 = vadd.f32 0.0, %v2016
      %2018 = vmatmul.bf16.gmra.mxu0 %v1751
      %v2019 = vpop.f32.mrf.mxu0
      %v2020 = vadd.f32 0.0, %v2019
      %v2021 = vpop.f32.mrf.mxu0
      %v2022 = vadd.f32 0.0, %v2021
      %2023 = vmatmul.bf16.gmra.mxu0 %v1753
      %v2024 = vpop.f32.mrf.mxu0
      %v2025 = vadd.f32 0.0, %v2024
      %v2026 = vpop.f32.mrf.mxu0
      %v2027 = vadd.f32 0.0, %v2026
      %2028 = vmatmul.bf16.gmra.mxu0 %v1755
      %v2029 = vpop.f32.mrf.mxu0
      %v2030 = vadd.f32 0.0, %v2029
      %v2031 = vpop.f32.mrf.mxu0
      %v2032 = vadd.f32 0.0, %v2031
      %2033 = vmatmul.bf16.gmra.mxu0 %v1757
      %v2034 = vpop.f32.mrf.mxu0
      %v2035 = vadd.f32 0.0, %v2034
      %v2036 = vpop.f32.mrf.mxu0
      %v2037 = vadd.f32 0.0, %v2036
      %2038 = vmatmul.bf16.gmra.mxu0 %v1759
      %v2039 = vpop.f32.mrf.mxu0
      %v2040 = vadd.f32 0.0, %v2039
      %v2041 = vpop.f32.mrf.mxu0
      %v2042 = vadd.f32 0.0, %v2041
      %2043 = vmatmul.bf16.gmra.mxu0 %v1858
      %v2044 = vpop.f32.mrf.mxu0
      %v2045 = vadd.f32 0.0, %v2044
      %v2046 = vpop.f32.mrf.mxu0
      %v2047 = vadd.f32 0.0, %v2046
      %2048 = vdwg.mxu0
      %v2049 = vadd.f32 %v1873, %v1970
      %v2050 = vadd.f32 %v1875, %v1972
      %v2051 = vadd.f32 %v1878, %v1975
      %v2052 = vadd.f32 %v1880, %v1977
      %v2053 = vadd.f32 %v1883, %v1980
      %v2054 = vadd.f32 %v1885, %v1982
      %v2055 = vadd.f32 %v1888, %v1985
      %v2056 = vadd.f32 %v1890, %v1987
      %v2057 = vadd.f32 %v1893, %v1990
      %v2058 = vadd.f32 %v1895, %v1992
      %v2059 = vadd.f32 %v1898, %v1995
      %v2060 = vadd.f32 %v1900, %v1997
      %v2061 = vadd.f32 %v1903, %v2000
      %v2062 = vadd.f32 %v1905, %v2002
      %v2063 = vadd.f32 %v1908, %v2005
      %v2064 = vadd.f32 %v1910, %v2007
      %v2065 = vadd.f32 %v1913, %v2010
      %v2066 = vadd.f32 %v1915, %v2012
      %v2067 = vadd.f32 %v1918, %v2015
      %v2068 = vadd.f32 %v1920, %v2017
      %v2069 = vadd.f32 %v1923, %v2020
      %v2070 = vadd.f32 %v1925, %v2022
      %v2071 = vadd.f32 %v1928, %v2025
      %v2072 = vadd.f32 %v1930, %v2027
      %v2073 = vadd.f32 %v1933, %v2030
      %v2074 = vadd.f32 %v1935, %v2032
      %v2075 = vadd.f32 %v1938, %v2035
      %v2076 = vadd.f32 %v1940, %v2037
      %v2077 = vadd.f32 %v1943, %v2040
      %v2078 = vadd.f32 %v1945, %v2042
      %v2079 = vadd.f32 %v1948, %v2045
      %v2080 = vadd.f32 %v1950, %v2047
      %v2081 = vld [vmem:[%s4] sm:$0x1]
      %v2083 = vperm.slane %v2081, 0
      %v2085 = vadd.f32 %v2049, %v2083
      %v2086 = vadd.f32 %v2050, %v2083
      %v2087 = vadd.f32 %v2051, %v2083
      %v2088 = vadd.f32 %v2052, %v2083
      %v2089 = vadd.f32 %v2053, %v2083
      %v2090 = vadd.f32 %v2054, %v2083
      %v2091 = vadd.f32 %v2055, %v2083
      %v2092 = vadd.f32 %v2056, %v2083
      %v2093 = vadd.f32 %v2057, %v2083
      %v2094 = vadd.f32 %v2058, %v2083
      %v2095 = vadd.f32 %v2059, %v2083
      %v2096 = vadd.f32 %v2060, %v2083
      %v2097 = vadd.f32 %v2061, %v2083
      %v2098 = vadd.f32 %v2062, %v2083
      %v2099 = vadd.f32 %v2063, %v2083
      %v2100 = vadd.f32 %v2064, %v2083
      %v2101 = vadd.f32 %v2065, %v2083
      %v2102 = vadd.f32 %v2066, %v2083
      %v2103 = vadd.f32 %v2067, %v2083
      %v2104 = vadd.f32 %v2068, %v2083
      %v2105 = vadd.f32 %v2069, %v2083
      %v2106 = vadd.f32 %v2070, %v2083
      %v2107 = vadd.f32 %v2071, %v2083
      %v2108 = vadd.f32 %v2072, %v2083
      %v2109 = vadd.f32 %v2073, %v2083
      %v2110 = vadd.f32 %v2074, %v2083
      %v2111 = vadd.f32 %v2075, %v2083
      %v2112 = vadd.f32 %v2076, %v2083
      %v2113 = vadd.f32 %v2077, %v2083
      %v2114 = vadd.f32 %v2078, %v2083
      %v2115 = vadd.f32 %v2079, %v2083
      %v2116 = vadd.f32 %v2080, %v2083
      %v2117 = vpack.c.bf16 %v2085, %v2085
      %v2118 = vpack.c.bf16 %v2086, %v2086
      %v2119 = vpack.c.bf16 %v2087, %v2087
      %v2120 = vpack.c.bf16 %v2088, %v2088
      %v2121 = vpack.c.bf16 %v2089, %v2089
      %v2122 = vpack.c.bf16 %v2090, %v2090
      %v2123 = vpack.c.bf16 %v2091, %v2091
      %v2124 = vpack.c.bf16 %v2092, %v2092
      %v2125 = vpack.c.bf16 %v2093, %v2093
      %v2126 = vpack.c.bf16 %v2094, %v2094
      %v2127 = vpack.c.bf16 %v2095, %v2095
      %v2128 = vpack.c.bf16 %v2096, %v2096
      %v2129 = vpack.c.bf16 %v2097, %v2097
      %v2130 = vpack.c.bf16 %v2098, %v2098
      %v2131 = vpack.c.bf16 %v2099, %v2099
      %v2132 = vpack.c.bf16 %v2100, %v2100
      %v2133 = vpack.c.bf16 %v2101, %v2101
      %v2134 = vpack.c.bf16 %v2102, %v2102
      %v2135 = vpack.c.bf16 %v2103, %v2103
      %v2136 = vpack.c.bf16 %v2104, %v2104
      %v2137 = vpack.c.bf16 %v2105, %v2105
      %v2138 = vpack.c.bf16 %v2106, %v2106
      %v2139 = vpack.c.bf16 %v2107, %v2107
      %v2140 = vpack.c.bf16 %v2108, %v2108
      %v2141 = vpack.c.bf16 %v2109, %v2109
      %v2142 = vpack.c.bf16 %v2110, %v2110
      %v2143 = vpack.c.bf16 %v2111, %v2111
      %v2144 = vpack.c.bf16 %v2112, %v2112
      %v2145 = vpack.c.bf16 %v2113, %v2113
      %v2146 = vpack.c.bf16 %v2114, %v2114
      %v2147 = vpack.c.bf16 %v2115, %v2115
      %v2148 = vpack.c.bf16 %v2116, %v2116
      %vm2149 = vcmask 27648
      %2150 = vst.msk [vmem:[%s258] sm:$0xf] %vm2149, %v2117
      %2151 = vst.msk [vmem:[%s258 + $0x4] sm:$0xf] %vm2149, %v2118
      %2152 = vst.msk [vmem:[%s258 + $0x8] sm:$0xf] %vm2149, %v2119
      %2153 = vst.msk [vmem:[%s258 + $0xc] sm:$0xf] %vm2149, %v2120
      %2154 = vst.msk [vmem:[%s258 + $0x10] sm:$0xf] %vm2149, %v2121
      %2155 = vst.msk [vmem:[%s258 + $0x14] sm:$0xf] %vm2149, %v2122
      %2156 = vst.msk [vmem:[%s258 + $0x18] sm:$0xf] %vm2149, %v2123
      %2157 = vst.msk [vmem:[%s258 + $0x1c] sm:$0xf] %vm2149, %v2124
      %2158 = vst.msk [vmem:[%s258 + $0x20] sm:$0xf] %vm2149, %v2125
      %2159 = vst.msk [vmem:[%s258 + $0x24] sm:$0xf] %vm2149, %v2126
      %2160 = vst.msk [vmem:[%s258 + $0x28] sm:$0xf] %vm2149, %v2127
      %2161 = vst.msk [vmem:[%s258 + $0x2c] sm:$0xf] %vm2149, %v2128
      %2162 = vst.msk [vmem:[%s258 + $0x30] sm:$0xf] %vm2149, %v2129
      %2163 = vst.msk [vmem:[%s258 + $0x34] sm:$0xf] %vm2149, %v2130
      %2164 = vst.msk [vmem:[%s258 + $0x38] sm:$0xf] %vm2149, %v2131
      %2165 = vst.msk [vmem:[%s258 + $0x3c] sm:$0xf] %vm2149, %v2132
      %2166 = vst.msk [vmem:[%s258 + $0x40] sm:$0xf] %vm2149, %v2133
      %2167 = vst.msk [vmem:[%s258 + $0x44] sm:$0xf] %vm2149, %v2134
      %2168 = vst.msk [vmem:[%s258 + $0x48] sm:$0xf] %vm2149, %v2135
      %2169 = vst.msk [vmem:[%s258 + $0x4c] sm:$0xf] %vm2149, %v2136
      %2170 = vst.msk [vmem:[%s258 + $0x50] sm:$0xf] %vm2149, %v2137
      %2171 = vst.msk [vmem:[%s258 + $0x54] sm:$0xf] %vm2149, %v2138
      %2172 = vst.msk [vmem:[%s258 + $0x58] sm:$0xf] %vm2149, %v2139
      %2173 = vst.msk [vmem:[%s258 + $0x5c] sm:$0xf] %vm2149, %v2140
      %2174 = vst.msk [vmem:[%s258 + $0x60] sm:$0xf] %vm2149, %v2141
      %2175 = vst.msk [vmem:[%s258 + $0x64] sm:$0xf] %vm2149, %v2142
      %2176 = vst.msk [vmem:[%s258 + $0x68] sm:$0xf] %vm2149, %v2143
      %2177 = vst.msk [vmem:[%s258 + $0x6c] sm:$0xf] %vm2149, %v2144
      %2178 = vst.msk [vmem:[%s258 + $0x70] sm:$0xf] %vm2149, %v2145
      %2179 = vst.msk [vmem:[%s258 + $0x74] sm:$0xf] %vm2149, %v2146
      %2180 = vst.msk [vmem:[%s258 + $0x78] sm:$0xf] %vm2149, %v2147
      %2181 = vst.msk [vmem:[%s258 + $0x7c] sm:$0xf] %vm2149, %v2148
      %v2182 = vsel %vm1635, %v2085, 0.0
      %v2183 = vsel %vm1635, %v2086, 0.0
      %v2184 = vadd.f32 %v2182, %v2183
      %v2185 = vsel %vm1635, %v2087, 0.0
      %v2186 = vadd.f32 %v2184, %v2185
      %v2187 = vsel %vm1635, %v2088, 0.0
      %v2188 = vadd.f32 %v2186, %v2187
      %v2189 = vsel %vm1635, %v2089, 0.0
      %v2190 = vadd.f32 %v2188, %v2189
      %v2191 = vsel %vm1635, %v2090, 0.0
      %v2192 = vadd.f32 %v2190, %v2191
      %v2193 = vsel %vm1635, %v2091, 0.0
      %v2194 = vadd.f32 %v2192, %v2193
      %v2195 = vsel %vm1635, %v2092, 0.0
      %v2196 = vadd.f32 %v2194, %v2195
      %v2197 = vsel %vm1635, %v2093, 0.0
      %v2198 = vadd.f32 %v2196, %v2197
      %v2199 = vsel %vm1635, %v2094, 0.0
      %v2200 = vadd.f32 %v2198, %v2199
      %v2201 = vsel %vm1635, %v2095, 0.0
      %v2202 = vadd.f32 %v2200, %v2201
      %v2203 = vsel %vm1635, %v2096, 0.0
      %v2204 = vadd.f32 %v2202, %v2203
      %v2205 = vsel %vm1635, %v2097, 0.0
      %v2206 = vadd.f32 %v2204, %v2205
      %v2207 = vsel %vm1635, %v2098, 0.0
      %v2208 = vadd.f32 %v2206, %v2207
      %v2209 = vsel %vm1635, %v2099, 0.0
      %v2210 = vadd.f32 %v2208, %v2209
      %v2211 = vsel %vm1635, %v2100, 0.0
      %v2212 = vadd.f32 %v2210, %v2211
      %v2213 = vsel %vm1635, %v2101, 0.0
      %v2214 = vadd.f32 %v2212, %v2213
      %v2215 = vsel %vm1635, %v2102, 0.0
      %v2216 = vadd.f32 %v2214, %v2215
      %v2217 = vsel %vm1635, %v2103, 0.0
      %v2218 = vadd.f32 %v2216, %v2217
      %v2219 = vsel %vm1635, %v2104, 0.0
      %v2220 = vadd.f32 %v2218, %v2219
      %v2221 = vsel %vm1635, %v2105, 0.0
      %v2222 = vadd.f32 %v2220, %v2221
      %v2223 = vsel %vm1635, %v2106, 0.0
      %v2224 = vadd.f32 %v2222, %v2223
      %v2225 = vsel %vm1635, %v2107, 0.0
      %v2226 = vadd.f32 %v2224, %v2225
      %v2227 = vsel %vm1635, %v2108, 0.0
      %v2228 = vadd.f32 %v2226, %v2227
      %v2229 = vsel %vm1635, %v2109, 0.0
      %v2230 = vadd.f32 %v2228, %v2229
      %v2231 = vsel %vm1635, %v2110, 0.0
      %v2232 = vadd.f32 %v2230, %v2231
      %v2233 = vsel %vm1635, %v2111, 0.0
      %v2234 = vadd.f32 %v2232, %v2233
      %v2235 = vsel %vm1635, %v2112, 0.0
      %v2236 = vadd.f32 %v2234, %v2235
      %v2237 = vsel %vm1635, %v2113, 0.0
      %v2238 = vadd.f32 %v2236, %v2237
      %v2239 = vsel %vm1635, %v2114, 0.0
      %v2240 = vadd.f32 %v2238, %v2239
      %v2241 = vsel %vm1635, %v2115, 0.0
      %v2242 = vadd.f32 %v2240, %v2241
      %v2243 = vsel %vm1635, %v2116, 0.0
      %v2244 = vadd.f32 %v2242, %v2243
      %v2245 = vrot.slane %v2244, 4
      %v2246 = vadd.f32 %v2244, %v2245
      %v2247 = vrot.slane %v2246, 2
      %v2248 = vadd.f32 %v2246, %v2247
      %v2249 = vrot.slane %v2248, 1
      %v2250 = vadd.f32 %v2248, %v2249
      %vm2251 = vcmask 24576
      %2252 = vst.msk [vmem:[%s262] sm:$0x1] %vm2251, %v2250
      %v2253 = vmul.f32 %v2085, %v2085
      %v2254 = vmul.f32 %v2086, %v2086
      %v2255 = vmul.f32 %v2087, %v2087
      %v2256 = vmul.f32 %v2088, %v2088
      %v2257 = vmul.f32 %v2089, %v2089
      %v2258 = vmul.f32 %v2090, %v2090
      %v2259 = vmul.f32 %v2091, %v2091
      %v2260 = vmul.f32 %v2092, %v2092
      %v2261 = vmul.f32 %v2093, %v2093
      %v2262 = vmul.f32 %v2094, %v2094
      %v2263 = vmul.f32 %v2095, %v2095
      %v2264 = vmul.f32 %v2096, %v2096
      %v2265 = vmul.f32 %v2097, %v2097
      %v2266 = vmul.f32 %v2098, %v2098
      %v2267 = vmul.f32 %v2099, %v2099
      %v2268 = vmul.f32 %v2100, %v2100
      %v2269 = vmul.f32 %v2101, %v2101
      %v2270 = vmul.f32 %v2102, %v2102
      %v2271 = vmul.f32 %v2103, %v2103
      %v2272 = vmul.f32 %v2104, %v2104
      %v2273 = vmul.f32 %v2105, %v2105
      %v2274 = vmul.f32 %v2106, %v2106
      %v2275 = vmul.f32 %v2107, %v2107
      %v2276 = vmul.f32 %v2108, %v2108
      %v2277 = vmul.f32 %v2109, %v2109
      %v2278 = vmul.f32 %v2110, %v2110
      %v2279 = vmul.f32 %v2111, %v2111
      %v2280 = vmul.f32 %v2112, %v2112
      %v2281 = vmul.f32 %v2113, %v2113
      %v2282 = vmul.f32 %v2114, %v2114
      %v2283 = vmul.f32 %v2115, %v2115
      %v2284 = vmul.f32 %v2116, %v2116
      %v2285 = vsel %vm1635, %v2253, 0.0
      %v2286 = vsel %vm1635, %v2254, 0.0
      %v2287 = vadd.f32 %v2285, %v2286
      %v2288 = vsel %vm1635, %v2255, 0.0
      %v2289 = vadd.f32 %v2287, %v2288
      %v2290 = vsel %vm1635, %v2256, 0.0
      %v2291 = vadd.f32 %v2289, %v2290
      %v2292 = vsel %vm1635, %v2257, 0.0
      %v2293 = vadd.f32 %v2291, %v2292
      %v2294 = vsel %vm1635, %v2258, 0.0
      %v2295 = vadd.f32 %v2293, %v2294
      %v2296 = vsel %vm1635, %v2259, 0.0
      %v2297 = vadd.f32 %v2295, %v2296
      %v2298 = vsel %vm1635, %v2260, 0.0
      %v2299 = vadd.f32 %v2297, %v2298
      %v2300 = vsel %vm1635, %v2261, 0.0
      %v2301 = vadd.f32 %v2299, %v2300
      %v2302 = vsel %vm1635, %v2262, 0.0
      %v2303 = vadd.f32 %v2301, %v2302
      %v2304 = vsel %vm1635, %v2263, 0.0
      %v2305 = vadd.f32 %v2303, %v2304
      %v2306 = vsel %vm1635, %v2264, 0.0
      %v2307 = vadd.f32 %v2305, %v2306
      %v2308 = vsel %vm1635, %v2265, 0.0
      %v2309 = vadd.f32 %v2307, %v2308
      %v2310 = vsel %vm1635, %v2266, 0.0
      %v2311 = vadd.f32 %v2309, %v2310
      %v2312 = vsel %vm1635, %v2267, 0.0
      %v2313 = vadd.f32 %v2311, %v2312
      %v2314 = vsel %vm1635, %v2268, 0.0
      %v2315 = vadd.f32 %v2313, %v2314
      %v2316 = vsel %vm1635, %v2269, 0.0
      %v2317 = vadd.f32 %v2315, %v2316
      %v2318 = vsel %vm1635, %v2270, 0.0
      %v2319 = vadd.f32 %v2317, %v2318
      %v2320 = vsel %vm1635, %v2271, 0.0
      %v2321 = vadd.f32 %v2319, %v2320
      %v2322 = vsel %vm1635, %v2272, 0.0
      %v2323 = vadd.f32 %v2321, %v2322
      %v2324 = vsel %vm1635, %v2273, 0.0
      %v2325 = vadd.f32 %v2323, %v2324
      %v2326 = vsel %vm1635, %v2274, 0.0
      %v2327 = vadd.f32 %v2325, %v2326
      %v2328 = vsel %vm1635, %v2275, 0.0
      %v2329 = vadd.f32 %v2327, %v2328
      %v2330 = vsel %vm1635, %v2276, 0.0
      %v2331 = vadd.f32 %v2329, %v2330
      %v2332 = vsel %vm1635, %v2277, 0.0
      %v2333 = vadd.f32 %v2331, %v2332
      %v2334 = vsel %vm1635, %v2278, 0.0
      %v2335 = vadd.f32 %v2333, %v2334
      %v2336 = vsel %vm1635, %v2279, 0.0
      %v2337 = vadd.f32 %v2335, %v2336
      %v2338 = vsel %vm1635, %v2280, 0.0
      %v2339 = vadd.f32 %v2337, %v2338
      %v2340 = vsel %vm1635, %v2281, 0.0
      %v2341 = vadd.f32 %v2339, %v2340
      %v2342 = vsel %vm1635, %v2282, 0.0
      %v2343 = vadd.f32 %v2341, %v2342
      %v2344 = vsel %vm1635, %v2283, 0.0
      %v2345 = vadd.f32 %v2343, %v2344
      %v2346 = vsel %vm1635, %v2284, 0.0
      %v2347 = vadd.f32 %v2345, %v2346
      %v2348 = vrot.slane %v2347, 4
      %v2349 = vadd.f32 %v2347, %v2348
      %v2350 = vrot.slane %v2349, 2
      %v2351 = vadd.f32 %v2349, %v2350
      %v2352 = vrot.slane %v2351, 1
      %v2353 = vadd.f32 %v2351, %v2352
      %2354 = vst.msk [vmem:[%s262 + $0x1] sm:$0x1] %vm2251, %v2353
      %p2355 = scmp.lt.s32.totalorder %s18, 1
      %s2356 = scalar_select %p2355, %s18, 1
      %s2357 = smul.addr %s2356, 32
      %s2358 = smul.addr %s2357, 4
      %s2359 = scalar_lea.vmem %s5, %s2358
      %p2360 = scmp.lt.s32.totalorder %s18, 1
      %s2361 = scalar_select %p2360, %s18, 1
      %s2362 = smul.addr %s2361, 2
      %s2363 = scalar_lea.vmem %s6, %s2362
      // Predicated region
      $region41: #{resnet_bottleneck_forward.6} parent=39 // pred_check
        %p2364 = pneg %p146
      $region42: #{resnet_bottleneck_forward.6} parent=39 // pred_check_branch
        %2366 = sbr.rel (%p2364) target = $region44
      $region43: #{resnet_bottleneck_forward.6} parent=39 // pred_region
        _
      $region44: #{resnet_bottleneck_forward.6} parent=39 // pred_fallthru
        _
      // Predicated region
      $region45: #{resnet_bottleneck_forward.6} parent=39 // pred_check
        %p2367 = pneg %p172
      $region46: #{resnet_bottleneck_forward.6} parent=39 // pred_check_branch
        %2369 = sbr.rel (%p2367) target = $region48
      $region47: #{resnet_bottleneck_forward.6} parent=39 // pred_region
        _
      $region48: #{resnet_bottleneck_forward.6} parent=39 // pred_fallthru
        _
    $region40: #{resnet_bottleneck_forward.6} parent=5 // pred_fallthru
      _
    %p2370 = scmp.le.s32.totalorder 2, %s13
    // Predicated region
    $region49: #{resnet_bottleneck_forward.6} parent=5 // pred_check
      %p2371 = pneg %p2370
    $region50: #{resnet_bottleneck_forward.6} parent=5 // pred_check_branch
      %2373 = sbr.rel (%p2371) target = $region52
    $region51: #{resnet_bottleneck_forward.6} parent=5 // pred_region
      %s2374 = ssub.s32 %s13, 2
      // Predicated region
      $region53: #{resnet_bottleneck_forward.6} parent=51 // pred_check
        %p2375 = pneg %p152
      $region54: #{resnet_bottleneck_forward.6} parent=51 // pred_check_branch
        %2377 = sbr.rel (%p2375) target = $region56
      $region55: #{resnet_bottleneck_forward.6} parent=51 // pred_region
        %p2378 = scmp.lt.s32.totalorder %s19, 1
        %s2379 = scalar_select %p2378, %s19, 1
        %s2380 = smul.addr %s2379, 32
        %s2381 = smul.addr %s2380, 4
        %s2382 = scalar_lea.vmem %s5, %s2381
      $region56: #{resnet_bottleneck_forward.6} parent=51 // pred_fallthru
        _
      // Predicated region
      $region57: #{resnet_bottleneck_forward.6} parent=51 // pred_check
        %p2383 = pneg %p178
      $region58: #{resnet_bottleneck_forward.6} parent=51 // pred_check_branch
        %2385 = sbr.rel (%p2383) target = $region60
      $region59: #{resnet_bottleneck_forward.6} parent=51 // pred_region
        %p2386 = scmp.lt.s32.totalorder %s19, 1
        %s2387 = scalar_select %p2386, %s19, 1
        %s2388 = smul.addr %s2387, 2
        %s2389 = scalar_lea.vmem %s6, %s2388
      $region60: #{resnet_bottleneck_forward.6} parent=51 // pred_fallthru
        _
    $region52: #{resnet_bottleneck_forward.6} parent=5 // pred_fallthru
      _
  $region6: #{resnet_bottleneck_forward.6} parent=0 // loop_footer
    %s17 = sadd.s32 1, %s13
  $region7: #{resnet_bottleneck_forward.6} parent=0 // loop_footer_branch
    %12 = sbr.rel target = $region3
  $region8: #{resnet_bottleneck_forward.6} parent=0 // loop_exit
    _

</llo_original>
